<compile_context>
chip_gen: v6e
topology: v6e:2x2x1
jax: 0.10.0
libtpu: 0.0.40
codegen_flags: <defaults>
</compile_context>

<pallas_src>
import functools

import jax
import jax.numpy as jnp
from jax import lax
from jax.experimental import pallas as pl
from jax.experimental.pallas import tpu as pltpu

_QUINTIC_ITERS = 12   # bf16-input / f32-accumulate 5th-order Newton-Schulz steps
_CLEANUP_ITERS = 2    # f32 (HIGHEST precision) cubic polish steps
_EPS = 1e-12          # same eps as F.normalize


def _round_up(v, mult):
    return (v + mult - 1) // mult * mult


def _svd_whitening_kernel(x_hbm, y_hbm, buf, sem, *, small_gram):
    # One-shot kernel: single DMA in, compute resident in VMEM, single DMA out.
    cp_in = pltpu.make_async_copy(x_hbm, buf, sem)
    cp_in.start()
    cp_in.wait()

    x = buf[...]                      # (m, n) f32, padded / lane-aligned
    m, n = x.shape
    k = m if small_gram else n        # static (trace-time) Gram size

    # --- F.normalize(x, dim=1): x / max(||row||, eps) -----------------------
    sumsq = jnp.sum(x * x, axis=1, keepdims=True)
    xn = x * lax.rsqrt(jnp.maximum(sumsq, _EPS * _EPS))

    # --- scale so sigma_max <= 1: sigma_max(A) <= sqrt(||A||_1 * ||A||_inf) --
    ax = jnp.abs(xn)
    inf_norm = jnp.max(jnp.sum(ax, axis=1, keepdims=True))   # max row abs sum
    one_norm = jnp.max(jnp.sum(ax, axis=0, keepdims=True))   # max col abs sum
    y0 = xn * lax.rsqrt(jnp.maximum(inf_norm * one_norm, _EPS))

    # Identity (k, k), hoisted out of the loops.
    rows = lax.broadcasted_iota(jnp.int32, (k, k), 0)
    cols = lax.broadcasted_iota(jnp.int32, (k, k), 1)
    eye = (rows == cols).astype(jnp.float32)

    dn_rhs_t = (((1,), (1,)), ((), ()))   # contract last dims  ->  A @ A.T
    dn_lhs_t = (((0,), (0,)), ((), ()))   # contract first dims ->  A.T @ A
    dn = dn_rhs_t if small_gram else dn_lhs_t

    def quintic_step(_, y):
        # Y <- B @ Y (or Y @ B),  B = (15 I - 10 G + 3 G^2) / 8,
        # G = Y Y^T (m<=n) or Y^T Y (m>n).  bf16 MXU inputs, f32 accumulation;
        # carry stays f32 for accuracy (cleanup iterations assume it).
        a = y.astype(jnp.bfloat16)
        g = lax.dot_general(a, a, dn, preferred_element_type=jnp.float32)
        gb = g.astype(jnp.bfloat16)
        g2 = jnp.dot(gb, gb, preferred_element_type=jnp.float32)
        b = (1.875 * eye - 1.25 * g + 0.375 * g2).astype(jnp.bfloat16)
        if small_gram:
            return jnp.dot(b, a, preferred_element_type=jnp.float32)
        return jnp.dot(a, b, preferred_element_type=jnp.float32)

    def cubic_cleanup(_, y):
        # Full-f32 polish: Y <- (1.5 I - 0.5 G) @ Y  (resp. Y @ B).
        g = lax.dot_general(y, y, dn, preferred_element_type=jnp.float32,
                            precision=lax.Precision.HIGHEST)
        b = 1.5 * eye - 0.5 * g
        if small_gram:
            return jnp.dot(b, y, preferred_element_type=jnp.float32,
                           precision=lax.Precision.HIGHEST)
        return jnp.dot(y, b, preferred_element_type=jnp.float32,
                       precision=lax.Precision.HIGHEST)

    y = lax.fori_loop(0, _QUINTIC_ITERS, quintic_step, y0, unroll=True)
    y = lax.fori_loop(0, _CLEANUP_ITERS, cubic_cleanup, y, unroll=True)

    # Reuse the staging buffer for the result, then DMA it out.
    buf[...] = y
    cp_out = pltpu.make_async_copy(buf, y_hbm, sem)
    cp_out.start()
    cp_out.wait()


def svd_whitening(x):
    """Pallas implementation of SVDWhitening.forward for a 2-D matrix."""
    m, n = x.shape
    mp = _round_up(m, 16)      # sublane alignment incl. bf16 (16,128) packing
    npd = _round_up(n, 128)    # lane alignment (lane-dense MXU / store path)

    # Zero rows/cols are exactly preserved by the iteration, so the original
    # block is untouched by the padding.
    xp = jnp.pad(x.astype(jnp.float32), ((0, mp - m), (0, npd - n)))

    small_gram = mp <= npd
    k = mp if small_gram else npd

    # VMEM budget: staging buffer + a handful of (m, n) f32/bf16 live copies
    # (carry, bf16 cast, normalization temps) + the (k, k) B/G matrices.
    est = 32 * mp * npd + 16 * k * k + (4 << 20)
    try:
        cap = int(pltpu.get_tpu_info().vmem_capacity_bytes)
    except Exception:
        cap = 64 << 20
    vmem_limit = int(min(max(est, 16 << 20), (cap * 3) // 4))

    kernel = functools.partial(_svd_whitening_kernel, small_gram=small_gram)

    yp = pl.pallas_call(
        kernel,
        out_shape=jax.ShapeDtypeStruct((mp, npd), jnp.float32),
        in_specs=[pl.BlockSpec(memory_space=pl.ANY)],
        out_specs=pl.BlockSpec(memory_space=pl.ANY),
        scratch_shapes=[pltpu.VMEM((mp, npd), jnp.float32),
                        pltpu.SemaphoreType.DMA(())],
        compiler_params=pltpu.CompilerParams(vmem_limit_bytes=vmem_limit),
    )(xp)

    return yp[:m, :n]


def _reference(x):
    """Pure-JAX reference mirroring the PyTorch module exactly."""
    xn = x / jnp.maximum(jnp.linalg.norm(x, axis=1, keepdims=True), _EPS)
    u, _, vt = jnp.linalg.svd(xn, full_matrices=False)
    return u @ vt


if __name__ == "__main__":
    key = jax.random.PRNGKey(0)
    # small shape consistent with a 2-D whitening input: 16 samples x 32 feats
    x = jax.random.normal(key, (16, 32), dtype=jnp.float32)

    y = jax.block_until_ready(svd_whitening(x))

    y_ref = _reference(x)
    err = float(jnp.max(jnp.abs(y - y_ref)))
    assert err < 5e-3, f"max abs error vs SVD reference too large: {err}"

    print("KERNEL_OK")
</pallas_src>

<mosaic_0001>
module attributes {stable_mosaic.version = 11 : i64} {
  func.func @_svd_whitening_kernel(%arg0: memref<16x128xf32, #tpu.memory_space<any>>, %arg1: memref<16x128xf32, #tpu.memory_space<any>>, %arg2: memref<16x128xf32, #tpu.memory_space<vmem>>, %arg3: memref<!tpu.dma_semaphore, #tpu.memory_space<semaphore_mem>>) attributes {dimension_semantics = [], scalar_prefetch = 0 : i64, scratch_operands = 2 : i64, tpu.core_type = #tpu.core_type<tc>} {
    tpu.enqueue_dma source(%arg0 : memref<16x128xf32, #tpu.memory_space<any>>) target(%arg2 : memref<16x128xf32, #tpu.memory_space<vmem>>) target_semaphore(%arg3 : memref<!tpu.dma_semaphore, #tpu.memory_space<semaphore_mem>>)
    tpu.wait_dma2 semaphore(%arg3 : memref<!tpu.dma_semaphore, #tpu.memory_space<semaphore_mem>>) src(%arg0 : memref<16x128xf32, #tpu.memory_space<any>>) dst(%arg2 : memref<16x128xf32, #tpu.memory_space<vmem>>)
    %c0 = arith.constant 0 : index
    %c0_0 = arith.constant 0 : index
    %0 = vector.load %arg2[%c0, %c0_0] : memref<16x128xf32, #tpu.memory_space<vmem>>, vector<16x128xf32>
    %1 = arith.mulf %0, %0 : vector<16x128xf32>
    %cst = arith.constant dense<0.000000e+00> : vector<16xf32>
    %2 = vector.multi_reduction <add>, %1, %cst [1] : vector<16x128xf32> to vector<16xf32>
    %3 = vector.shape_cast %2 : vector<16xf32> to vector<16x1xf32>
    %cst_1 = arith.constant 1.000000e-24 : f32
    %4 = vector.broadcast %cst_1 : f32 to vector<16x1xf32>
    %5 = arith.maximumf %3, %4 : vector<16x1xf32>
    %6 = math.rsqrt %5 : vector<16x1xf32>
    %7 = vector.broadcast %6 : vector<16x1xf32> to vector<16x128xf32>
    %8 = arith.mulf %0, %7 : vector<16x128xf32>
    %9 = math.absf %8 : vector<16x128xf32>
    %cst_2 = arith.constant dense<0.000000e+00> : vector<16xf32>
    %10 = vector.multi_reduction <add>, %9, %cst_2 [1] : vector<16x128xf32> to vector<16xf32>
    %11 = vector.shape_cast %10 : vector<16xf32> to vector<16x1xf32>
    %12 = vector.shape_cast %11 : vector<16x1xf32> to vector<1x16x1xf32>
    %cst_3 = arith.constant dense<0xFF800000> : vector<1xf32>
    %13 = vector.multi_reduction <maximumf>, %12, %cst_3 [1, 2] : vector<1x16x1xf32> to vector<1xf32>
    %14 = vector.shape_cast %13 : vector<1xf32> to vector<1x1x1xf32>
    %15 = vector.extract %14[0, 0, 0] : f32 from vector<1x1x1xf32>
    %cst_4 = arith.constant dense<0.000000e+00> : vector<128xf32>
    %16 = vector.multi_reduction <add>, %9, %cst_4 [0] : vector<16x128xf32> to vector<128xf32>
    %17 = vector.shape_cast %16 : vector<128xf32> to vector<1x128xf32>
    %18 = vector.shape_cast %17 : vector<1x128xf32> to vector<1x1x128xf32>
    %cst_5 = arith.constant dense<0xFF800000> : vector<1xf32>
    %19 = vector.multi_reduction <maximumf>, %18, %cst_5 [1, 2] : vector<1x1x128xf32> to vector<1xf32>
    %20 = vector.shape_cast %19 : vector<1xf32> to vector<1x1x1xf32>
    %21 = vector.extract %20[0, 0, 0] : f32 from vector<1x1x1xf32>
    %22 = arith.mulf %15, %21 : f32
    %cst_6 = arith.constant 9.99999996E-13 : f32
    %23 = arith.maximumf %22, %cst_6 : f32
    %24 = math.rsqrt %23 : f32
    %25 = vector.broadcast %24 : f32 to vector<16x128xf32>
    %26 = arith.mulf %8, %25 : vector<16x128xf32>
    %27 = tpu.iota {dimensions = array<i32: 0>} : vector<16x16xi32>
    %28 = tpu.iota {dimensions = array<i32: 1>} : vector<16x16xi32>
    %29 = arith.cmpi eq, %27, %28 : vector<16x16xi32>
    %30 = arith.extui %29 : vector<16x16xi1> to vector<16x16xi32>
    %31 = arith.sitofp %30 : vector<16x16xi32> to vector<16x16xf32>
    %c0_i32 = arith.constant 0 : i32
    %32 = arith.truncf %26 : vector<16x128xf32> to vector<16x128xbf16>
    %cst_7 = arith.constant dense<0.000000e+00> : vector<16x16xf32>
    %33 = tpu.matmul %32, %32, %cst_7 {dimension_numbers = #tpu.dot_dimension_numbers<[1], [1], [0], [0], [0, 0, 1, 0], [], []>} : vector<16x128xbf16>, vector<16x128xbf16>, vector<16x16xf32> -> vector<16x16xf32>
    %34 = arith.truncf %33 : vector<16x16xf32> to vector<16x16xbf16>
    %cst_8 = arith.constant dense<0.000000e+00> : vector<16x16xf32>
    %35 = tpu.matmul %34, %34, %cst_8 {dimension_numbers = #tpu.dot_dimension_numbers<[1], [0], [0], [1], [0, 0, 1, 1], [], []>} : vector<16x16xbf16>, vector<16x16xbf16>, vector<16x16xf32> -> vector<16x16xf32>
    %cst_9 = arith.constant 1.875000e+00 : f32
    %36 = vector.broadcast %cst_9 : f32 to vector<16x16xf32>
    %37 = arith.mulf %36, %31 : vector<16x16xf32>
    %cst_10 = arith.constant 1.250000e+00 : f32
    %38 = vector.broadcast %cst_10 : f32 to vector<16x16xf32>
    %39 = arith.mulf %38, %33 : vector<16x16xf32>
    %40 = arith.subf %37, %39 : vector<16x16xf32>
    %cst_11 = arith.constant 3.750000e-01 : f32
    %41 = vector.broadcast %cst_11 : f32 to vector<16x16xf32>
    %42 = arith.mulf %41, %35 : vector<16x16xf32>
    %43 = arith.addf %40, %42 : vector<16x16xf32>
    %44 = arith.truncf %43 : vector<16x16xf32> to vector<16x16xbf16>
    %cst_12 = arith.constant dense<0.000000e+00> : vector<16x128xf32>
    %45 = tpu.matmul %44, %32, %cst_12 {dimension_numbers = #tpu.dot_dimension_numbers<[1], [0], [0], [1], [0, 0, 1, 1], [], []>} : vector<16x16xbf16>, vector<16x128xbf16>, vector<16x128xf32> -> vector<16x128xf32>
    %c1_i32 = arith.constant 1 : i32
    %46 = arith.truncf %45 : vector<16x128xf32> to vector<16x128xbf16>
    %cst_13 = arith.constant dense<0.000000e+00> : vector<16x16xf32>
    %47 = tpu.matmul %46, %46, %cst_13 {dimension_numbers = #tpu.dot_dimension_numbers<[1], [1], [0], [0], [0, 0, 1, 0], [], []>} : vector<16x128xbf16>, vector<16x128xbf16>, vector<16x16xf32> -> vector<16x16xf32>
    %48 = arith.truncf %47 : vector<16x16xf32> to vector<16x16xbf16>
    %cst_14 = arith.constant dense<0.000000e+00> : vector<16x16xf32>
    %49 = tpu.matmul %48, %48, %cst_14 {dimension_numbers = #tpu.dot_dimension_numbers<[1], [0], [0], [1], [0, 0, 1, 1], [], []>} : vector<16x16xbf16>, vector<16x16xbf16>, vector<16x16xf32> -> vector<16x16xf32>
    %cst_15 = arith.constant 1.875000e+00 : f32
    %50 = vector.broadcast %cst_15 : f32 to vector<16x16xf32>
    %51 = arith.mulf %50, %31 : vector<16x16xf32>
    %cst_16 = arith.constant 1.250000e+00 : f32
    %52 = vector.broadcast %cst_16 : f32 to vector<16x16xf32>
    %53 = arith.mulf %52, %47 : vector<16x16xf32>
    %54 = arith.subf %51, %53 : vector<16x16xf32>
    %cst_17 = arith.constant 3.750000e-01 : f32
    %55 = vector.broadcast %cst_17 : f32 to vector<16x16xf32>
    %56 = arith.mulf %55, %49 : vector<16x16xf32>
    %57 = arith.addf %54, %56 : vector<16x16xf32>
    %58 = arith.truncf %57 : vector<16x16xf32> to vector<16x16xbf16>
    %cst_18 = arith.constant dense<0.000000e+00> : vector<16x128xf32>
    %59 = tpu.matmul %58, %46, %cst_18 {dimension_numbers = #tpu.dot_dimension_numbers<[1], [0], [0], [1], [0, 0, 1, 1], [], []>} : vector<16x16xbf16>, vector<16x128xbf16>, vector<16x128xf32> -> vector<16x128xf32>
    %c2_i32 = arith.constant 2 : i32
    %60 = arith.truncf %59 : vector<16x128xf32> to vector<16x128xbf16>
    %cst_19 = arith.constant dense<0.000000e+00> : vector<16x16xf32>
    %61 = tpu.matmul %60, %60, %cst_19 {dimension_numbers = #tpu.dot_dimension_numbers<[1], [1], [0], [0], [0, 0, 1, 0], [], []>} : vector<16x128xbf16>, vector<16x128xbf16>, vector<16x16xf32> -> vector<16x16xf32>
    %62 = arith.truncf %61 : vector<16x16xf32> to vector<16x16xbf16>
    %cst_20 = arith.constant dense<0.000000e+00> : vector<16x16xf32>
    %63 = tpu.matmul %62, %62, %cst_20 {dimension_numbers = #tpu.dot_dimension_numbers<[1], [0], [0], [1], [0, 0, 1, 1], [], []>} : vector<16x16xbf16>, vector<16x16xbf16>, vector<16x16xf32> -> vector<16x16xf32>
    %cst_21 = arith.constant 1.875000e+00 : f32
    %64 = vector.broadcast %cst_21 : f32 to vector<16x16xf32>
    %65 = arith.mulf %64, %31 : vector<16x16xf32>
    %cst_22 = arith.constant 1.250000e+00 : f32
    %66 = vector.broadcast %cst_22 : f32 to vector<16x16xf32>
    %67 = arith.mulf %66, %61 : vector<16x16xf32>
    %68 = arith.subf %65, %67 : vector<16x16xf32>
    %cst_23 = arith.constant 3.750000e-01 : f32
    %69 = vector.broadcast %cst_23 : f32 to vector<16x16xf32>
    %70 = arith.mulf %69, %63 : vector<16x16xf32>
    %71 = arith.addf %68, %70 : vector<16x16xf32>
    %72 = arith.truncf %71 : vector<16x16xf32> to vector<16x16xbf16>
    %cst_24 = arith.constant dense<0.000000e+00> : vector<16x128xf32>
    %73 = tpu.matmul %72, %60, %cst_24 {dimension_numbers = #tpu.dot_dimension_numbers<[1], [0], [0], [1], [0, 0, 1, 1], [], []>} : vector<16x16xbf16>, vector<16x128xbf16>, vector<16x128xf32> -> vector<16x128xf32>
    %c3_i32 = arith.constant 3 : i32
    %74 = arith.truncf %73 : vector<16x128xf32> to vector<16x128xbf16>
    %cst_25 = arith.constant dense<0.000000e+00> : vector<16x16xf32>
    %75 = tpu.matmul %74, %74, %cst_25 {dimension_numbers = #tpu.dot_dimension_numbers<[1], [1], [0], [0], [0, 0, 1, 0], [], []>} : vector<16x128xbf16>, vector<16x128xbf16>, vector<16x16xf32> -> vector<16x16xf32>
    %76 = arith.truncf %75 : vector<16x16xf32> to vector<16x16xbf16>
    %cst_26 = arith.constant dense<0.000000e+00> : vector<16x16xf32>
    %77 = tpu.matmul %76, %76, %cst_26 {dimension_numbers = #tpu.dot_dimension_numbers<[1], [0], [0], [1], [0, 0, 1, 1], [], []>} : vector<16x16xbf16>, vector<16x16xbf16>, vector<16x16xf32> -> vector<16x16xf32>
    %cst_27 = arith.constant 1.875000e+00 : f32
    %78 = vector.broadcast %cst_27 : f32 to vector<16x16xf32>
    %79 = arith.mulf %78, %31 : vector<16x16xf32>
    %cst_28 = arith.constant 1.250000e+00 : f32
    %80 = vector.broadcast %cst_28 : f32 to vector<16x16xf32>
    %81 = arith.mulf %80, %75 : vector<16x16xf32>
    %82 = arith.subf %79, %81 : vector<16x16xf32>
    %cst_29 = arith.constant 3.750000e-01 : f32
    %83 = vector.broadcast %cst_29 : f32 to vector<16x16xf32>
    %84 = arith.mulf %83, %77 : vector<16x16xf32>
    %85 = arith.addf %82, %84 : vector<16x16xf32>
    %86 = arith.truncf %85 : vector<16x16xf32> to vector<16x16xbf16>
    %cst_30 = arith.constant dense<0.000000e+00> : vector<16x128xf32>
    %87 = tpu.matmul %86, %74, %cst_30 {dimension_numbers = #tpu.dot_dimension_numbers<[1], [0], [0], [1], [0, 0, 1, 1], [], []>} : vector<16x16xbf16>, vector<16x128xbf16>, vector<16x128xf32> -> vector<16x128xf32>
    %c4_i32 = arith.constant 4 : i32
    %88 = arith.truncf %87 : vector<16x128xf32> to vector<16x128xbf16>
    %cst_31 = arith.constant dense<0.000000e+00> : vector<16x16xf32>
    %89 = tpu.matmul %88, %88, %cst_31 {dimension_numbers = #tpu.dot_dimension_numbers<[1], [1], [0], [0], [0, 0, 1, 0], [], []>} : vector<16x128xbf16>, vector<16x128xbf16>, vector<16x16xf32> -> vector<16x16xf32>
    %90 = arith.truncf %89 : vector<16x16xf32> to vector<16x16xbf16>
    %cst_32 = arith.constant dense<0.000000e+00> : vector<16x16xf32>
    %91 = tpu.matmul %90, %90, %cst_32 {dimension_numbers = #tpu.dot_dimension_numbers<[1], [0], [0], [1], [0, 0, 1, 1], [], []>} : vector<16x16xbf16>, vector<16x16xbf16>, vector<16x16xf32> -> vector<16x16xf32>
    %cst_33 = arith.constant 1.875000e+00 : f32
    %92 = vector.broadcast %cst_33 : f32 to vector<16x16xf32>
    %93 = arith.mulf %92, %31 : vector<16x16xf32>
    %cst_34 = arith.constant 1.250000e+00 : f32
    %94 = vector.broadcast %cst_34 : f32 to vector<16x16xf32>
    %95 = arith.mulf %94, %89 : vector<16x16xf32>
    %96 = arith.subf %93, %95 : vector<16x16xf32>
    %cst_35 = arith.constant 3.750000e-01 : f32
    %97 = vector.broadcast %cst_35 : f32 to vector<16x16xf32>
    %98 = arith.mulf %97, %91 : vector<16x16xf32>
    %99 = arith.addf %96, %98 : vector<16x16xf32>
    %100 = arith.truncf %99 : vector<16x16xf32> to vector<16x16xbf16>
    %cst_36 = arith.constant dense<0.000000e+00> : vector<16x128xf32>
    %101 = tpu.matmul %100, %88, %cst_36 {dimension_numbers = #tpu.dot_dimension_numbers<[1], [0], [0], [1], [0, 0, 1, 1], [], []>} : vector<16x16xbf16>, vector<16x128xbf16>, vector<16x128xf32> -> vector<16x128xf32>
    %c5_i32 = arith.constant 5 : i32
    %102 = arith.truncf %101 : vector<16x128xf32> to vector<16x128xbf16>
    %cst_37 = arith.constant dense<0.000000e+00> : vector<16x16xf32>
    %103 = tpu.matmul %102, %102, %cst_37 {dimension_numbers = #tpu.dot_dimension_numbers<[1], [1], [0], [0], [0, 0, 1, 0], [], []>} : vector<16x128xbf16>, vector<16x128xbf16>, vector<16x16xf32> -> vector<16x16xf32>
    %104 = arith.truncf %103 : vector<16x16xf32> to vector<16x16xbf16>
    %cst_38 = arith.constant dense<0.000000e+00> : vector<16x16xf32>
    %105 = tpu.matmul %104, %104, %cst_38 {dimension_numbers = #tpu.dot_dimension_numbers<[1], [0], [0], [1], [0, 0, 1, 1], [], []>} : vector<16x16xbf16>, vector<16x16xbf16>, vector<16x16xf32> -> vector<16x16xf32>
    %cst_39 = arith.constant 1.875000e+00 : f32
    %106 = vector.broadcast %cst_39 : f32 to vector<16x16xf32>
    %107 = arith.mulf %106, %31 : vector<16x16xf32>
    %cst_40 = arith.constant 1.250000e+00 : f32
    %108 = vector.broadcast %cst_40 : f32 to vector<16x16xf32>
    %109 = arith.mulf %108, %103 : vector<16x16xf32>
    %110 = arith.subf %107, %109 : vector<16x16xf32>
    %cst_41 = arith.constant 3.750000e-01 : f32
    %111 = vector.broadcast %cst_41 : f32 to vector<16x16xf32>
    %112 = arith.mulf %111, %105 : vector<16x16xf32>
    %113 = arith.addf %110, %112 : vector<16x16xf32>
    %114 = arith.truncf %113 : vector<16x16xf32> to vector<16x16xbf16>
    %cst_42 = arith.constant dense<0.000000e+00> : vector<16x128xf32>
    %115 = tpu.matmul %114, %102, %cst_42 {dimension_numbers = #tpu.dot_dimension_numbers<[1], [0], [0], [1], [0, 0, 1, 1], [], []>} : vector<16x16xbf16>, vector<16x128xbf16>, vector<16x128xf32> -> vector<16x128xf32>
    %c6_i32 = arith.constant 6 : i32
    %116 = arith.truncf %115 : vector<16x128xf32> to vector<16x128xbf16>
    %cst_43 = arith.constant dense<0.000000e+00> : vector<16x16xf32>
    %117 = tpu.matmul %116, %116, %cst_43 {dimension_numbers = #tpu.dot_dimension_numbers<[1], [1], [0], [0], [0, 0, 1, 0], [], []>} : vector<16x128xbf16>, vector<16x128xbf16>, vector<16x16xf32> -> vector<16x16xf32>
    %118 = arith.truncf %117 : vector<16x16xf32> to vector<16x16xbf16>
    %cst_44 = arith.constant dense<0.000000e+00> : vector<16x16xf32>
    %119 = tpu.matmul %118, %118, %cst_44 {dimension_numbers = #tpu.dot_dimension_numbers<[1], [0], [0], [1], [0, 0, 1, 1], [], []>} : vector<16x16xbf16>, vector<16x16xbf16>, vector<16x16xf32> -> vector<16x16xf32>
    %cst_45 = arith.constant 1.875000e+00 : f32
    %120 = vector.broadcast %cst_45 : f32 to vector<16x16xf32>
    %121 = arith.mulf %120, %31 : vector<16x16xf32>
    %cst_46 = arith.constant 1.250000e+00 : f32
    %122 = vector.broadcast %cst_46 : f32 to vector<16x16xf32>
    %123 = arith.mulf %122, %117 : vector<16x16xf32>
    %124 = arith.subf %121, %123 : vector<16x16xf32>
    %cst_47 = arith.constant 3.750000e-01 : f32
    %125 = vector.broadcast %cst_47 : f32 to vector<16x16xf32>
    %126 = arith.mulf %125, %119 : vector<16x16xf32>
    %127 = arith.addf %124, %126 : vector<16x16xf32>
    %128 = arith.truncf %127 : vector<16x16xf32> to vector<16x16xbf16>
    %cst_48 = arith.constant dense<0.000000e+00> : vector<16x128xf32>
    %129 = tpu.matmul %128, %116, %cst_48 {dimension_numbers = #tpu.dot_dimension_numbers<[1], [0], [0], [1], [0, 0, 1, 1], [], []>} : vector<16x16xbf16>, vector<16x128xbf16>, vector<16x128xf32> -> vector<16x128xf32>
    %c7_i32 = arith.constant 7 : i32
    %130 = arith.truncf %129 : vector<16x128xf32> to vector<16x128xbf16>
    %cst_49 = arith.constant dense<0.000000e+00> : vector<16x16xf32>
    %131 = tpu.matmul %130, %130, %cst_49 {dimension_numbers = #tpu.dot_dimension_numbers<[1], [1], [0], [0], [0, 0, 1, 0], [], []>} : vector<16x128xbf16>, vector<16x128xbf16>, vector<16x16xf32> -> vector<16x16xf32>
    %132 = arith.truncf %131 : vector<16x16xf32> to vector<16x16xbf16>
    %cst_50 = arith.constant dense<0.000000e+00> : vector<16x16xf32>
    %133 = tpu.matmul %132, %132, %cst_50 {dimension_numbers = #tpu.dot_dimension_numbers<[1], [0], [0], [1], [0, 0, 1, 1], [], []>} : vector<16x16xbf16>, vector<16x16xbf16>, vector<16x16xf32> -> vector<16x16xf32>
    %cst_51 = arith.constant 1.875000e+00 : f32
    %134 = vector.broadcast %cst_51 : f32 to vector<16x16xf32>
    %135 = arith.mulf %134, %31 : vector<16x16xf32>
    %cst_52 = arith.constant 1.250000e+00 : f32
    %136 = vector.broadcast %cst_52 : f32 to vector<16x16xf32>
    %137 = arith.mulf %136, %131 : vector<16x16xf32>
    %138 = arith.subf %135, %137 : vector<16x16xf32>
    %cst_53 = arith.constant 3.750000e-01 : f32
    %139 = vector.broadcast %cst_53 : f32 to vector<16x16xf32>
    %140 = arith.mulf %139, %133 : vector<16x16xf32>
    %141 = arith.addf %138, %140 : vector<16x16xf32>
    %142 = arith.truncf %141 : vector<16x16xf32> to vector<16x16xbf16>
    %cst_54 = arith.constant dense<0.000000e+00> : vector<16x128xf32>
    %143 = tpu.matmul %142, %130, %cst_54 {dimension_numbers = #tpu.dot_dimension_numbers<[1], [0], [0], [1], [0, 0, 1, 1], [], []>} : vector<16x16xbf16>, vector<16x128xbf16>, vector<16x128xf32> -> vector<16x128xf32>
    %c8_i32 = arith.constant 8 : i32
    %144 = arith.truncf %143 : vector<16x128xf32> to vector<16x128xbf16>
    %cst_55 = arith.constant dense<0.000000e+00> : vector<16x16xf32>
    %145 = tpu.matmul %144, %144, %cst_55 {dimension_numbers = #tpu.dot_dimension_numbers<[1], [1], [0], [0], [0, 0, 1, 0], [], []>} : vector<16x128xbf16>, vector<16x128xbf16>, vector<16x16xf32> -> vector<16x16xf32>
    %146 = arith.truncf %145 : vector<16x16xf32> to vector<16x16xbf16>
    %cst_56 = arith.constant dense<0.000000e+00> : vector<16x16xf32>
    %147 = tpu.matmul %146, %146, %cst_56 {dimension_numbers = #tpu.dot_dimension_numbers<[1], [0], [0], [1], [0, 0, 1, 1], [], []>} : vector<16x16xbf16>, vector<16x16xbf16>, vector<16x16xf32> -> vector<16x16xf32>
    %cst_57 = arith.constant 1.875000e+00 : f32
    %148 = vector.broadcast %cst_57 : f32 to vector<16x16xf32>
    %149 = arith.mulf %148, %31 : vector<16x16xf32>
    %cst_58 = arith.constant 1.250000e+00 : f32
    %150 = vector.broadcast %cst_58 : f32 to vector<16x16xf32>
    %151 = arith.mulf %150, %145 : vector<16x16xf32>
    %152 = arith.subf %149, %151 : vector<16x16xf32>
    %cst_59 = arith.constant 3.750000e-01 : f32
    %153 = vector.broadcast %cst_59 : f32 to vector<16x16xf32>
    %154 = arith.mulf %153, %147 : vector<16x16xf32>
    %155 = arith.addf %152, %154 : vector<16x16xf32>
    %156 = arith.truncf %155 : vector<16x16xf32> to vector<16x16xbf16>
    %cst_60 = arith.constant dense<0.000000e+00> : vector<16x128xf32>
    %157 = tpu.matmul %156, %144, %cst_60 {dimension_numbers = #tpu.dot_dimension_numbers<[1], [0], [0], [1], [0, 0, 1, 1], [], []>} : vector<16x16xbf16>, vector<16x128xbf16>, vector<16x128xf32> -> vector<16x128xf32>
    %c9_i32 = arith.constant 9 : i32
    %158 = arith.truncf %157 : vector<16x128xf32> to vector<16x128xbf16>
    %cst_61 = arith.constant dense<0.000000e+00> : vector<16x16xf32>
    %159 = tpu.matmul %158, %158, %cst_61 {dimension_numbers = #tpu.dot_dimension_numbers<[1], [1], [0], [0], [0, 0, 1, 0], [], []>} : vector<16x128xbf16>, vector<16x128xbf16>, vector<16x16xf32> -> vector<16x16xf32>
    %160 = arith.truncf %159 : vector<16x16xf32> to vector<16x16xbf16>
    %cst_62 = arith.constant dense<0.000000e+00> : vector<16x16xf32>
    %161 = tpu.matmul %160, %160, %cst_62 {dimension_numbers = #tpu.dot_dimension_numbers<[1], [0], [0], [1], [0, 0, 1, 1], [], []>} : vector<16x16xbf16>, vector<16x16xbf16>, vector<16x16xf32> -> vector<16x16xf32>
    %cst_63 = arith.constant 1.875000e+00 : f32
    %162 = vector.broadcast %cst_63 : f32 to vector<16x16xf32>
    %163 = arith.mulf %162, %31 : vector<16x16xf32>
    %cst_64 = arith.constant 1.250000e+00 : f32
    %164 = vector.broadcast %cst_64 : f32 to vector<16x16xf32>
    %165 = arith.mulf %164, %159 : vector<16x16xf32>
    %166 = arith.subf %163, %165 : vector<16x16xf32>
    %cst_65 = arith.constant 3.750000e-01 : f32
    %167 = vector.broadcast %cst_65 : f32 to vector<16x16xf32>
    %168 = arith.mulf %167, %161 : vector<16x16xf32>
    %169 = arith.addf %166, %168 : vector<16x16xf32>
    %170 = arith.truncf %169 : vector<16x16xf32> to vector<16x16xbf16>
    %cst_66 = arith.constant dense<0.000000e+00> : vector<16x128xf32>
    %171 = tpu.matmul %170, %158, %cst_66 {dimension_numbers = #tpu.dot_dimension_numbers<[1], [0], [0], [1], [0, 0, 1, 1], [], []>} : vector<16x16xbf16>, vector<16x128xbf16>, vector<16x128xf32> -> vector<16x128xf32>
    %c10_i32 = arith.constant 10 : i32
    %172 = arith.truncf %171 : vector<16x128xf32> to vector<16x128xbf16>
    %cst_67 = arith.constant dense<0.000000e+00> : vector<16x16xf32>
    %173 = tpu.matmul %172, %172, %cst_67 {dimension_numbers = #tpu.dot_dimension_numbers<[1], [1], [0], [0], [0, 0, 1, 0], [], []>} : vector<16x128xbf16>, vector<16x128xbf16>, vector<16x16xf32> -> vector<16x16xf32>
    %174 = arith.truncf %173 : vector<16x16xf32> to vector<16x16xbf16>
    %cst_68 = arith.constant dense<0.000000e+00> : vector<16x16xf32>
    %175 = tpu.matmul %174, %174, %cst_68 {dimension_numbers = #tpu.dot_dimension_numbers<[1], [0], [0], [1], [0, 0, 1, 1], [], []>} : vector<16x16xbf16>, vector<16x16xbf16>, vector<16x16xf32> -> vector<16x16xf32>
    %cst_69 = arith.constant 1.875000e+00 : f32
    %176 = vector.broadcast %cst_69 : f32 to vector<16x16xf32>
    %177 = arith.mulf %176, %31 : vector<16x16xf32>
    %cst_70 = arith.constant 1.250000e+00 : f32
    %178 = vector.broadcast %cst_70 : f32 to vector<16x16xf32>
    %179 = arith.mulf %178, %173 : vector<16x16xf32>
    %180 = arith.subf %177, %179 : vector<16x16xf32>
    %cst_71 = arith.constant 3.750000e-01 : f32
    %181 = vector.broadcast %cst_71 : f32 to vector<16x16xf32>
    %182 = arith.mulf %181, %175 : vector<16x16xf32>
    %183 = arith.addf %180, %182 : vector<16x16xf32>
    %184 = arith.truncf %183 : vector<16x16xf32> to vector<16x16xbf16>
    %cst_72 = arith.constant dense<0.000000e+00> : vector<16x128xf32>
    %185 = tpu.matmul %184, %172, %cst_72 {dimension_numbers = #tpu.dot_dimension_numbers<[1], [0], [0], [1], [0, 0, 1, 1], [], []>} : vector<16x16xbf16>, vector<16x128xbf16>, vector<16x128xf32> -> vector<16x128xf32>
    %c11_i32 = arith.constant 11 : i32
    %186 = arith.truncf %185 : vector<16x128xf32> to vector<16x128xbf16>
    %cst_73 = arith.constant dense<0.000000e+00> : vector<16x16xf32>
    %187 = tpu.matmul %186, %186, %cst_73 {dimension_numbers = #tpu.dot_dimension_numbers<[1], [1], [0], [0], [0, 0, 1, 0], [], []>} : vector<16x128xbf16>, vector<16x128xbf16>, vector<16x16xf32> -> vector<16x16xf32>
    %188 = arith.truncf %187 : vector<16x16xf32> to vector<16x16xbf16>
    %cst_74 = arith.constant dense<0.000000e+00> : vector<16x16xf32>
    %189 = tpu.matmul %188, %188, %cst_74 {dimension_numbers = #tpu.dot_dimension_numbers<[1], [0], [0], [1], [0, 0, 1, 1], [], []>} : vector<16x16xbf16>, vector<16x16xbf16>, vector<16x16xf32> -> vector<16x16xf32>
    %cst_75 = arith.constant 1.875000e+00 : f32
    %190 = vector.broadcast %cst_75 : f32 to vector<16x16xf32>
    %191 = arith.mulf %190, %31 : vector<16x16xf32>
    %cst_76 = arith.constant 1.250000e+00 : f32
    %192 = vector.broadcast %cst_76 : f32 to vector<16x16xf32>
    %193 = arith.mulf %192, %187 : vector<16x16xf32>
    %194 = arith.subf %191, %193 : vector<16x16xf32>
    %cst_77 = arith.constant 3.750000e-01 : f32
    %195 = vector.broadcast %cst_77 : f32 to vector<16x16xf32>
    %196 = arith.mulf %195, %189 : vector<16x16xf32>
    %197 = arith.addf %194, %196 : vector<16x16xf32>
    %198 = arith.truncf %197 : vector<16x16xf32> to vector<16x16xbf16>
    %cst_78 = arith.constant dense<0.000000e+00> : vector<16x128xf32>
    %199 = tpu.matmul %198, %186, %cst_78 {dimension_numbers = #tpu.dot_dimension_numbers<[1], [0], [0], [1], [0, 0, 1, 1], [], []>} : vector<16x16xbf16>, vector<16x128xbf16>, vector<16x128xf32> -> vector<16x128xf32>
    %c0_i32_79 = arith.constant 0 : i32
    %cst_80 = arith.constant dense<0.000000e+00> : vector<16x16xf32>
    %200 = tpu.matmul %199, %199, %cst_80 {dimension_numbers = #tpu.dot_dimension_numbers<[1], [1], [0], [0], [0, 0, 1, 0], [], []>, precision = #tpu.contract_precision<fp32>} : vector<16x128xf32>, vector<16x128xf32>, vector<16x16xf32> -> vector<16x16xf32>
    %cst_81 = arith.constant 1.500000e+00 : f32
    %201 = vector.broadcast %cst_81 : f32 to vector<16x16xf32>
    %202 = arith.mulf %201, %31 : vector<16x16xf32>
    %cst_82 = arith.constant 5.000000e-01 : f32
    %203 = vector.broadcast %cst_82 : f32 to vector<16x16xf32>
    %204 = arith.mulf %203, %200 : vector<16x16xf32>
    %205 = arith.subf %202, %204 : vector<16x16xf32>
    %cst_83 = arith.constant dense<0.000000e+00> : vector<16x128xf32>
    %206 = tpu.matmul %205, %199, %cst_83 {dimension_numbers = #tpu.dot_dimension_numbers<[1], [0], [0], [1], [0, 0, 1, 1], [], []>, precision = #tpu.contract_precision<fp32>} : vector<16x16xf32>, vector<16x128xf32>, vector<16x128xf32> -> vector<16x128xf32>
    %c1_i32_84 = arith.constant 1 : i32
    %cst_85 = arith.constant dense<0.000000e+00> : vector<16x16xf32>
    %207 = tpu.matmul %206, %206, %cst_85 {dimension_numbers = #tpu.dot_dimension_numbers<[1], [1], [0], [0], [0, 0, 1, 0], [], []>, precision = #tpu.contract_precision<fp32>} : vector<16x128xf32>, vector<16x128xf32>, vector<16x16xf32> -> vector<16x16xf32>
    %cst_86 = arith.constant 1.500000e+00 : f32
    %208 = vector.broadcast %cst_86 : f32 to vector<16x16xf32>
    %209 = arith.mulf %208, %31 : vector<16x16xf32>
    %cst_87 = arith.constant 5.000000e-01 : f32
    %210 = vector.broadcast %cst_87 : f32 to vector<16x16xf32>
    %211 = arith.mulf %210, %207 : vector<16x16xf32>
    %212 = arith.subf %209, %211 : vector<16x16xf32>
    %cst_88 = arith.constant dense<0.000000e+00> : vector<16x128xf32>
    %213 = tpu.matmul %212, %206, %cst_88 {dimension_numbers = #tpu.dot_dimension_numbers<[1], [0], [0], [1], [0, 0, 1, 1], [], []>, precision = #tpu.contract_precision<fp32>} : vector<16x16xf32>, vector<16x128xf32>, vector<16x128xf32> -> vector<16x128xf32>
    %c0_89 = arith.constant 0 : index
    %c0_90 = arith.constant 0 : index
    %214 = vector.load %arg2[%c0_89, %c0_90] : memref<16x128xf32, #tpu.memory_space<vmem>>, vector<16x128xf32>
    tpu.vector_store %arg2[%c0_89, %c0_90], %213 {strides = array<i32>} : memref<16x128xf32, #tpu.memory_space<vmem>>, vector<16x128xf32>,
    tpu.enqueue_dma source(%arg2 : memref<16x128xf32, #tpu.memory_space<vmem>>) target(%arg1 : memref<16x128xf32, #tpu.memory_space<any>>) target_semaphore(%arg3 : memref<!tpu.dma_semaphore, #tpu.memory_space<semaphore_mem>>)
    tpu.wait_dma2 semaphore(%arg3 : memref<!tpu.dma_semaphore, #tpu.memory_space<semaphore_mem>>) src(%arg2 : memref<16x128xf32, #tpu.memory_space<vmem>>) dst(%arg1 : memref<16x128xf32, #tpu.memory_space<any>>)
    return
  }
}

</mosaic_0001>

<llo_original>
// kernel: tpu_custom_call.1
$region0: #{tpu_custom_call.1}
  #allocation0 [shape = 'u32[]', space=smem, size = 0x4, offset = 0x4, fixed_abs, tag = 'smem constant byte address 0x4 - core index']
  #allocation1 [shape = 'u32[144,128]{1,0:T(1,128)}', space=vmem, size = 0x12000, scoped, tag = 'internal scratch']
  #allocation2 [shape = 'f32[16,128]{1,0:T(8,128)}', space=vmem, size = 0x2000, scoped, tag = 'scratch operand']
  #allocation3 [shape = 's32[1]{0}', space=sflag, size = 0x4, scoped, tag = 'scratch operand']
  #allocation4 [shape = 's32[]', space=sflag, size = 0x4, offset = 0, fixed_abs, tag = 'sflag constant byte address 0x0 - dummy sync flag']
  #allocation5 [shape = 's32[]', space=sflag, size = 0x4, offset = 0, fixed_abs, tag = 'sflag constant byte address 0x0 - dummy sync flag']
  #allocation6 [shape = 'u32[]', space=smem, size = 0x4, offset = 0x44, fixed_abs, tag = 'smem constant byte address 0x44 - assertion arg 0']
  #allocation7 [shape = 'u32[]', space=smem, size = 0x4, offset = 0x48, fixed_abs, tag = 'smem constant byte address 0x48 - assertion arg 1']
  #allocation8 [shape = 's32[]', space=sflag, size = 0x4, offset = 0, fixed_abs, tag = 'sflag constant byte address 0x0 - dummy sync flag']
  #allocation9 [shape = 's32[]', space=sflag, size = 0x4, offset = 0, fixed_abs, tag = 'sflag constant byte address 0x0 - dummy sync flag']
  %s0 = inlined_call_operand.hbm [shape: f32[16,128], index: 0, kind: input, shape index: {}]
  %s1 = inlined_call_operand.hbm [shape: f32[16,128], index: 1, kind: output, shape index: {}]
  %s2 = sld [smem:[#allocation0]]
  $region10: #{tpu_custom_call.1} parent=0
    _
  %s4 = ssub.s32 1, %s2
  %s5 = scalar_select 0, %s4, %s2
  // Predicated region
  $region2: #{tpu_custom_call.1} parent=0 // pred_check
    _
  $region3: #{tpu_custom_call.1} parent=0 // pred_check_branch
    %8 = sbr.rel target = $region5
  $region4: #{tpu_custom_call.1} parent=0 // pred_region
    %9 = sst [smem:[#allocation6]] [#allocation5]
    %10 = sst [smem:[#allocation7]] [#allocation4]
  $region5: #{tpu_custom_call.1} parent=0 // pred_fallthru
    _
  %12 = shalt.err (0)
  %s14 = sshll.u32 [#allocation2], 4
  %s15 = int_to_ptr.vmem [resolvable:$true] %s14
  %17 = dma.hbm_to_vmem [thread:$0]  %s0, 256, %s15, [#allocation3]
  %s18 = smul.u32 16, 1
  %s19 = sshll.u32 %s18, 4
  %20 = dma.done [#allocation3], %s19
  %v21 = vld [vmem:[#allocation2] sm:$0xff]
  %v22 = vld [vmem:[#allocation2 + $0x8] sm:$0xff]
  %v23 = vmul.f32 %v21, %v21
  %v24 = vmul.f32 %v22, %v22
  %25 = vadd.xlane.f32.xlu0 %v23
  %v26 = vpop.xlane.xlu0 %25
  %27 = vadd.xlane.f32.xlu0 %v24
  %v28 = vpop.xlane.xlu0 %27
  %v29 = vmax.f32 %v26, 1e-24
  %v30 = vmax.f32 %v28, 1e-24
  %v31 = vrsqrt.pop %v29
  %v32 = vrsqrt.pop %v30
  %v33 = vmul.f32 %v21, %v31
  %v34 = vmul.f32 %v22, %v32
  %v35 = vand.u32 2147483647, %v33
  %v36 = vand.u32 2147483647, %v34
  %37 = vadd.xlane.f32.xlu0 %v35
  %v38 = vpop.xlane.xlu0 %37
  %39 = vadd.xlane.f32.xlu0 %v36
  %v40 = vpop.xlane.xlu0 %39
  %v41 = vmax.f32 %v38, %v40
  %v42 = vrot.slane %v41, 4
  %v43 = vmax.f32 %v41, %v42
  %v44 = vrot.slane %v43, 2
  %v45 = vmax.f32 %v43, %v44
  %v46 = vrot.slane %v45, 1
  %v47 = vmax.f32 %v45, %v46
  %s48 = vtos %v47
  %v49 = vadd.f32 %v35, %v36
  %v50 = vrot.slane %v49, 4
  %v51 = vadd.f32 %v49, %v50
  %v52 = vrot.slane %v51, 2
  %v53 = vadd.f32 %v51, %v52
  %v54 = vrot.slane %v53, 1
  %v55 = vadd.f32 %v53, %v54
  %56 = vmax.xlane.f32.xlu0 %v55
  %v57 = vpop.xlane.xlu0 %56
  %s58 = vtos %v57
  %s59 = smul.f32 %s48, %s58
  %s60 = smax.f32 %s59, 1e-12
  %v61 = vstv %s60
  %v62 = vrsqrt.pop %v61
  %s63 = vtos %v62
  %v64 = vstv %s63
  %v65 = vmul.f32 %v33, %v64
  %v66 = vmul.f32 %v34, %v64
  %v67 = vlaneseq
  %v68 = vshrl.u32 %v67, 7
  %v69 = vadd.s32 %v68, 8
  %v70 = vlaneseq
  %v71 = vand.u32 %v70, 127
  %vm72 = vcmp.eq.s32.totalorder %v68, %v71
  %vm73 = vcmp.eq.s32.totalorder %v69, %v71
  %v74 = vsel %vm72, 1, 0
  %v75 = vsel %vm73, 1, 0
  %v76 = vcvt.s32.f32 %v74
  %v77 = vcvt.s32.f32 %v75
  %v78 = vpack.c.bf16 %v66, %v65
  %79 = vmatprep.subr.bf16.mxu0 0
  %80 = vmatpush1.bf16.xpose.msra.mxu0 0
  %81 = vmatprep.subr.bf16.mxu0 0
  %82 = vmatpush1.bf16.xpose.msra.mxu0 0
  %83 = vmatprep.subr.bf16.mxu0 0
  %84 = vmatpush1.bf16.xpose.msra.mxu0 0
  %85 = vmatprep.subr.bf16.mxu0 0
  %86 = vmatpush1.bf16.xpose.msra.mxu0 0
  %87 = vmatprep.subr.bf16.mxu0 0
  %88 = vmatpush1.bf16.xpose.msra.mxu0 0
  %89 = vmatprep.subr.bf16.mxu0 0
  %90 = vmatpush1.bf16.xpose.msra.mxu0 0
  %91 = vmatprep.subr.bf16.mxu0 0
  %92 = vmatpush1.bf16.xpose.msra.mxu0 0
  %93 = vmatprep.subr.bf16.mxu0 0
  %94 = vmatpush1.bf16.xpose.msra.mxu0 %v78
  %95 = vmatprep.subr.bf16.mxu0 0
  %96 = vmatpush2.bf16.xpose.msra.mxu0 0
  %97 = vmatprep.subr.bf16.mxu0 0
  %98 = vmatpush2.bf16.xpose.msra.mxu0 0
  %99 = vmatprep.subr.bf16.mxu0 0
  %100 = vmatpush2.bf16.xpose.msra.mxu0 0
  %101 = vmatprep.subr.bf16.mxu0 0
  %102 = vmatpush2.bf16.xpose.msra.mxu0 0
  %103 = vmatprep.subr.bf16.mxu0 0
  %104 = vmatpush2.bf16.xpose.msra.mxu0 0
  %105 = vmatprep.subr.bf16.mxu0 0
  %106 = vmatpush2.bf16.xpose.msra.mxu0 0
  %107 = vmatprep.subr.bf16.mxu0 0
  %108 = vmatpush2.bf16.xpose.msra.mxu0 0
  %109 = vmatprep.subr.bf16.mxu0 0
  %110 = vmatpush2.bf16.xpose.msra.mxu0 0
  %111 = vmatprep.mubr.bf16.mxu0 0
  %112 = vmatmul.mubr.bf16.gmra.mxu0 %v78
  %v113 = vpop.f32.mrf.mxu0
  %v114 = vadd.f32 0.0, %v113
  %v115 = vpop.f32.mrf.mxu0
  %v116 = vpop.f32.mrf.mxu0
  %v117 = vadd.f32 0.0, %v116
  %v118 = vpop.f32.mrf.mxu0
  %119 = vdwg.mxu0
  %v120 = vpack.c.bf16 %v117, %v114
  %vm121 = vcmask 130048
  %v123 = vsel %vm121, %v120, 0
  %125 = vmatprep.subr.bf16.mxu0 0
  %126 = vmatpush1.bf16.msra.mxu0 0
  %127 = vmatprep.subr.bf16.mxu0 0
  %128 = vmatpush1.bf16.msra.mxu0 0
  %129 = vmatprep.subr.bf16.mxu0 0
  %130 = vmatpush1.bf16.msra.mxu0 0
  %131 = vmatprep.subr.bf16.mxu0 0
  %132 = vmatpush1.bf16.msra.mxu0 0
  %133 = vmatprep.subr.bf16.mxu0 0
  %134 = vmatpush1.bf16.msra.mxu0 0
  %135 = vmatprep.subr.bf16.mxu0 0
  %136 = vmatpush1.bf16.msra.mxu0 0
  %137 = vmatprep.subr.bf16.mxu0 0
  %138 = vmatpush1.bf16.msra.mxu0 0
  %139 = vmatprep.subr.bf16.mxu0 0
  %140 = vmatpush1.bf16.msra.mxu0 %v120
  %141 = vmatprep.subr.bf16.mxu0 0
  %142 = vmatpush2.bf16.msra.mxu0 0
  %143 = vmatprep.subr.bf16.mxu0 0
  %144 = vmatpush2.bf16.msra.mxu0 0
  %145 = vmatprep.subr.bf16.mxu0 0
  %146 = vmatpush2.bf16.msra.mxu0 0
  %147 = vmatprep.subr.bf16.mxu0 0
  %148 = vmatpush2.bf16.msra.mxu0 0
  %149 = vmatprep.subr.bf16.mxu0 0
  %150 = vmatpush2.bf16.msra.mxu0 0
  %151 = vmatprep.subr.bf16.mxu0 0
  %152 = vmatpush2.bf16.msra.mxu0 0
  %153 = vmatprep.subr.bf16.mxu0 0
  %154 = vmatpush2.bf16.msra.mxu0 0
  %155 = vmatprep.subr.bf16.mxu0 0
  %156 = vmatpush2.bf16.msra.mxu0 0
  %157 = vmatprep.mubr.bf16.mxu0 0
  %158 = vmatmul.mubr.bf16.gmra.mxu0 %v123
  %v159 = vpop.f32.mrf.mxu0
  %v160 = vadd.f32 0.0, %v159
  %v161 = vpop.f32.mrf.mxu0
  %v162 = vpop.f32.mrf.mxu0
  %v163 = vadd.f32 0.0, %v162
  %v164 = vpop.f32.mrf.mxu0
  %165 = vdwg.mxu0
  %v166 = vmul.f32 %v76, 1.875
  %v167 = vmul.f32 %v77, 1.875
  %v168 = vmul.f32 %v114, 1.25
  %v169 = vmul.f32 %v117, 1.25
  %v170 = vsub.f32 %v166, %v168
  %v171 = vsub.f32 %v167, %v169
  %v172 = vmul.f32 %v160, 0.375
  %v173 = vmul.f32 %v163, 0.375
  %v174 = vadd.f32 %v170, %v172
  %v175 = vadd.f32 %v171, %v173
  %v176 = vpack.c.bf16 %v175, %v174
  %v178 = vsel %vm121, %v176, 0
  %180 = vmatprep.subr.bf16.mxu0 0
  %181 = vmatpush1.bf16.msra.mxu0 0
  %182 = vmatprep.subr.bf16.mxu0 0
  %183 = vmatpush1.bf16.msra.mxu0 0
  %184 = vmatprep.subr.bf16.mxu0 0
  %185 = vmatpush1.bf16.msra.mxu0 0
  %186 = vmatprep.subr.bf16.mxu0 0
  %187 = vmatpush1.bf16.msra.mxu0 0
  %188 = vmatprep.subr.bf16.mxu0 0
  %189 = vmatpush1.bf16.msra.mxu0 0
  %190 = vmatprep.subr.bf16.mxu0 0
  %191 = vmatpush1.bf16.msra.mxu0 0
  %192 = vmatprep.subr.bf16.mxu0 0
  %193 = vmatpush1.bf16.msra.mxu0 0
  %194 = vmatprep.subr.bf16.mxu0 0
  %195 = vmatpush1.bf16.msra.mxu0 %v78
  %196 = vmatprep.subr.bf16.mxu0 0
  %197 = vmatpush2.bf16.msra.mxu0 0
  %198 = vmatprep.subr.bf16.mxu0 0
  %199 = vmatpush2.bf16.msra.mxu0 0
  %200 = vmatprep.subr.bf16.mxu0 0
  %201 = vmatpush2.bf16.msra.mxu0 0
  %202 = vmatprep.subr.bf16.mxu0 0
  %203 = vmatpush2.bf16.msra.mxu0 0
  %204 = vmatprep.subr.bf16.mxu0 0
  %205 = vmatpush2.bf16.msra.mxu0 0
  %206 = vmatprep.subr.bf16.mxu0 0
  %207 = vmatpush2.bf16.msra.mxu0 0
  %208 = vmatprep.subr.bf16.mxu0 0
  %209 = vmatpush2.bf16.msra.mxu0 0
  %210 = vmatprep.subr.bf16.mxu0 0
  %211 = vmatpush2.bf16.msra.mxu0 0
  %212 = vmatprep.mubr.bf16.mxu0 0
  %213 = vmatmul.mubr.bf16.gmra.mxu0 %v178
  %v214 = vpop.f32.mrf.mxu0
  %v215 = vadd.f32 0.0, %v214
  %v216 = vpop.f32.mrf.mxu0
  %v217 = vpop.f32.mrf.mxu0
  %v218 = vadd.f32 0.0, %v217
  %v219 = vpop.f32.mrf.mxu0
  %220 = vdwg.mxu0
  %v221 = vpack.c.bf16 %v218, %v215
  %222 = vmatprep.subr.bf16.mxu0 0
  %223 = vmatpush1.bf16.xpose.msra.mxu0 0
  %224 = vmatprep.subr.bf16.mxu0 0
  %225 = vmatpush1.bf16.xpose.msra.mxu0 0
  %226 = vmatprep.subr.bf16.mxu0 0
  %227 = vmatpush1.bf16.xpose.msra.mxu0 0
  %228 = vmatprep.subr.bf16.mxu0 0
  %229 = vmatpush1.bf16.xpose.msra.mxu0 0
  %230 = vmatprep.subr.bf16.mxu0 0
  %231 = vmatpush1.bf16.xpose.msra.mxu0 0
  %232 = vmatprep.subr.bf16.mxu0 0
  %233 = vmatpush1.bf16.xpose.msra.mxu0 0
  %234 = vmatprep.subr.bf16.mxu0 0
  %235 = vmatpush1.bf16.xpose.msra.mxu0 0
  %236 = vmatprep.subr.bf16.mxu0 0
  %237 = vmatpush1.bf16.xpose.msra.mxu0 %v221
  %238 = vmatprep.subr.bf16.mxu0 0
  %239 = vmatpush2.bf16.xpose.msra.mxu0 0
  %240 = vmatprep.subr.bf16.mxu0 0
  %241 = vmatpush2.bf16.xpose.msra.mxu0 0
  %242 = vmatprep.subr.bf16.mxu0 0
  %243 = vmatpush2.bf16.xpose.msra.mxu0 0
  %244 = vmatprep.subr.bf16.mxu0 0
  %245 = vmatpush2.bf16.xpose.msra.mxu0 0
  %246 = vmatprep.subr.bf16.mxu0 0
  %247 = vmatpush2.bf16.xpose.msra.mxu0 0
  %248 = vmatprep.subr.bf16.mxu0 0
  %249 = vmatpush2.bf16.xpose.msra.mxu0 0
  %250 = vmatprep.subr.bf16.mxu0 0
  %251 = vmatpush2.bf16.xpose.msra.mxu0 0
  %252 = vmatprep.subr.bf16.mxu0 0
  %253 = vmatpush2.bf16.xpose.msra.mxu0 0
  %254 = vmatprep.mubr.bf16.mxu0 0
  %255 = vmatmul.mubr.bf16.gmra.mxu0 %v221
  %v256 = vpop.f32.mrf.mxu0
  %v257 = vadd.f32 0.0, %v256
  %v258 = vpop.f32.mrf.mxu0
  %v259 = vpop.f32.mrf.mxu0
  %v260 = vadd.f32 0.0, %v259
  %v261 = vpop.f32.mrf.mxu0
  %262 = vdwg.mxu0
  %v263 = vpack.c.bf16 %v260, %v257
  %v265 = vsel %vm121, %v263, 0
  %267 = vmatprep.subr.bf16.mxu0 0
  %268 = vmatpush1.bf16.msra.mxu0 0
  %269 = vmatprep.subr.bf16.mxu0 0
  %270 = vmatpush1.bf16.msra.mxu0 0
  %271 = vmatprep.subr.bf16.mxu0 0
  %272 = vmatpush1.bf16.msra.mxu0 0
  %273 = vmatprep.subr.bf16.mxu0 0
  %274 = vmatpush1.bf16.msra.mxu0 0
  %275 = vmatprep.subr.bf16.mxu0 0
  %276 = vmatpush1.bf16.msra.mxu0 0
  %277 = vmatprep.subr.bf16.mxu0 0
  %278 = vmatpush1.bf16.msra.mxu0 0
  %279 = vmatprep.subr.bf16.mxu0 0
  %280 = vmatpush1.bf16.msra.mxu0 0
  %281 = vmatprep.subr.bf16.mxu0 0
  %282 = vmatpush1.bf16.msra.mxu0 %v263
  %283 = vmatprep.subr.bf16.mxu0 0
  %284 = vmatpush2.bf16.msra.mxu0 0
  %285 = vmatprep.subr.bf16.mxu0 0
  %286 = vmatpush2.bf16.msra.mxu0 0
  %287 = vmatprep.subr.bf16.mxu0 0
  %288 = vmatpush2.bf16.msra.mxu0 0
  %289 = vmatprep.subr.bf16.mxu0 0
  %290 = vmatpush2.bf16.msra.mxu0 0
  %291 = vmatprep.subr.bf16.mxu0 0
  %292 = vmatpush2.bf16.msra.mxu0 0
  %293 = vmatprep.subr.bf16.mxu0 0
  %294 = vmatpush2.bf16.msra.mxu0 0
  %295 = vmatprep.subr.bf16.mxu0 0
  %296 = vmatpush2.bf16.msra.mxu0 0
  %297 = vmatprep.subr.bf16.mxu0 0
  %298 = vmatpush2.bf16.msra.mxu0 0
  %299 = vmatprep.mubr.bf16.mxu0 0
  %300 = vmatmul.mubr.bf16.gmra.mxu0 %v265
  %v301 = vpop.f32.mrf.mxu0
  %v302 = vadd.f32 0.0, %v301
  %v303 = vpop.f32.mrf.mxu0
  %v304 = vpop.f32.mrf.mxu0
  %v305 = vadd.f32 0.0, %v304
  %v306 = vpop.f32.mrf.mxu0
  %307 = vdwg.mxu0
  %v308 = vmul.f32 %v257, 1.25
  %v309 = vmul.f32 %v260, 1.25
  %v310 = vsub.f32 %v166, %v308
  %v311 = vsub.f32 %v167, %v309
  %v312 = vmul.f32 %v302, 0.375
  %v313 = vmul.f32 %v305, 0.375
  %v314 = vadd.f32 %v310, %v312
  %v315 = vadd.f32 %v311, %v313
  %v316 = vpack.c.bf16 %v315, %v314
  %v318 = vsel %vm121, %v316, 0
  %320 = vmatprep.subr.bf16.mxu0 0
  %321 = vmatpush1.bf16.msra.mxu0 0
  %322 = vmatprep.subr.bf16.mxu0 0
  %323 = vmatpush1.bf16.msra.mxu0 0
  %324 = vmatprep.subr.bf16.mxu0 0
  %325 = vmatpush1.bf16.msra.mxu0 0
  %326 = vmatprep.subr.bf16.mxu0 0
  %327 = vmatpush1.bf16.msra.mxu0 0
  %328 = vmatprep.subr.bf16.mxu0 0
  %329 = vmatpush1.bf16.msra.mxu0 0
  %330 = vmatprep.subr.bf16.mxu0 0
  %331 = vmatpush1.bf16.msra.mxu0 0
  %332 = vmatprep.subr.bf16.mxu0 0
  %333 = vmatpush1.bf16.msra.mxu0 0
  %334 = vmatprep.subr.bf16.mxu0 0
  %335 = vmatpush1.bf16.msra.mxu0 %v221
  %336 = vmatprep.subr.bf16.mxu0 0
  %337 = vmatpush2.bf16.msra.mxu0 0
  %338 = vmatprep.subr.bf16.mxu0 0
  %339 = vmatpush2.bf16.msra.mxu0 0
  %340 = vmatprep.subr.bf16.mxu0 0
  %341 = vmatpush2.bf16.msra.mxu0 0
  %342 = vmatprep.subr.bf16.mxu0 0
  %343 = vmatpush2.bf16.msra.mxu0 0
  %344 = vmatprep.subr.bf16.mxu0 0
  %345 = vmatpush2.bf16.msra.mxu0 0
  %346 = vmatprep.subr.bf16.mxu0 0
  %347 = vmatpush2.bf16.msra.mxu0 0
  %348 = vmatprep.subr.bf16.mxu0 0
  %349 = vmatpush2.bf16.msra.mxu0 0
  %350 = vmatprep.subr.bf16.mxu0 0
  %351 = vmatpush2.bf16.msra.mxu0 0
  %352 = vmatprep.mubr.bf16.mxu0 0
  %353 = vmatmul.mubr.bf16.gmra.mxu0 %v318
  %v354 = vpop.f32.mrf.mxu0
  %v355 = vadd.f32 0.0, %v354
  %v356 = vpop.f32.mrf.mxu0
  %v357 = vpop.f32.mrf.mxu0
  %v358 = vadd.f32 0.0, %v357
  %v359 = vpop.f32.mrf.mxu0
  %360 = vdwg.mxu0
  %v361 = vpack.c.bf16 %v358, %v355
  %362 = vmatprep.subr.bf16.mxu0 0
  %363 = vmatpush1.bf16.xpose.msra.mxu0 0
  %364 = vmatprep.subr.bf16.mxu0 0
  %365 = vmatpush1.bf16.xpose.msra.mxu0 0
  %366 = vmatprep.subr.bf16.mxu0 0
  %367 = vmatpush1.bf16.xpose.msra.mxu0 0
  %368 = vmatprep.subr.bf16.mxu0 0
  %369 = vmatpush1.bf16.xpose.msra.mxu0 0
  %370 = vmatprep.subr.bf16.mxu0 0
  %371 = vmatpush1.bf16.xpose.msra.mxu0 0
  %372 = vmatprep.subr.bf16.mxu0 0
  %373 = vmatpush1.bf16.xpose.msra.mxu0 0
  %374 = vmatprep.subr.bf16.mxu0 0
  %375 = vmatpush1.bf16.xpose.msra.mxu0 0
  %376 = vmatprep.subr.bf16.mxu0 0
  %377 = vmatpush1.bf16.xpose.msra.mxu0 %v361
  %378 = vmatprep.subr.bf16.mxu0 0
  %379 = vmatpush2.bf16.xpose.msra.mxu0 0
  %380 = vmatprep.subr.bf16.mxu0 0
  %381 = vmatpush2.bf16.xpose.msra.mxu0 0
  %382 = vmatprep.subr.bf16.mxu0 0
  %383 = vmatpush2.bf16.xpose.msra.mxu0 0
  %384 = vmatprep.subr.bf16.mxu0 0
  %385 = vmatpush2.bf16.xpose.msra.mxu0 0
  %386 = vmatprep.subr.bf16.mxu0 0
  %387 = vmatpush2.bf16.xpose.msra.mxu0 0
  %388 = vmatprep.subr.bf16.mxu0 0
  %389 = vmatpush2.bf16.xpose.msra.mxu0 0
  %390 = vmatprep.subr.bf16.mxu0 0
  %391 = vmatpush2.bf16.xpose.msra.mxu0 0
  %392 = vmatprep.subr.bf16.mxu0 0
  %393 = vmatpush2.bf16.xpose.msra.mxu0 0
  %394 = vmatprep.mubr.bf16.mxu0 0
  %395 = vmatmul.mubr.bf16.gmra.mxu0 %v361
  %v396 = vpop.f32.mrf.mxu0
  %v397 = vadd.f32 0.0, %v396
  %v398 = vpop.f32.mrf.mxu0
  %v399 = vpop.f32.mrf.mxu0
  %v400 = vadd.f32 0.0, %v399
  %v401 = vpop.f32.mrf.mxu0
  %402 = vdwg.mxu0
  %v403 = vpack.c.bf16 %v400, %v397
  %v405 = vsel %vm121, %v403, 0
  %407 = vmatprep.subr.bf16.mxu0 0
  %408 = vmatpush1.bf16.msra.mxu0 0
  %409 = vmatprep.subr.bf16.mxu0 0
  %410 = vmatpush1.bf16.msra.mxu0 0
  %411 = vmatprep.subr.bf16.mxu0 0
  %412 = vmatpush1.bf16.msra.mxu0 0
  %413 = vmatprep.subr.bf16.mxu0 0
  %414 = vmatpush1.bf16.msra.mxu0 0
  %415 = vmatprep.subr.bf16.mxu0 0
  %416 = vmatpush1.bf16.msra.mxu0 0
  %417 = vmatprep.subr.bf16.mxu0 0
  %418 = vmatpush1.bf16.msra.mxu0 0
  %419 = vmatprep.subr.bf16.mxu0 0
  %420 = vmatpush1.bf16.msra.mxu0 0
  %421 = vmatprep.subr.bf16.mxu0 0
  %422 = vmatpush1.bf16.msra.mxu0 %v403
  %423 = vmatprep.subr.bf16.mxu0 0
  %424 = vmatpush2.bf16.msra.mxu0 0
  %425 = vmatprep.subr.bf16.mxu0 0
  %426 = vmatpush2.bf16.msra.mxu0 0
  %427 = vmatprep.subr.bf16.mxu0 0
  %428 = vmatpush2.bf16.msra.mxu0 0
  %429 = vmatprep.subr.bf16.mxu0 0
  %430 = vmatpush2.bf16.msra.mxu0 0
  %431 = vmatprep.subr.bf16.mxu0 0
  %432 = vmatpush2.bf16.msra.mxu0 0
  %433 = vmatprep.subr.bf16.mxu0 0
  %434 = vmatpush2.bf16.msra.mxu0 0
  %435 = vmatprep.subr.bf16.mxu0 0
  %436 = vmatpush2.bf16.msra.mxu0 0
  %437 = vmatprep.subr.bf16.mxu0 0
  %438 = vmatpush2.bf16.msra.mxu0 0
  %439 = vmatprep.mubr.bf16.mxu0 0
  %440 = vmatmul.mubr.bf16.gmra.mxu0 %v405
  %v441 = vpop.f32.mrf.mxu0
  %v442 = vadd.f32 0.0, %v441
  %v443 = vpop.f32.mrf.mxu0
  %v444 = vpop.f32.mrf.mxu0
  %v445 = vadd.f32 0.0, %v444
  %v446 = vpop.f32.mrf.mxu0
  %447 = vdwg.mxu0
  %v448 = vmul.f32 %v397, 1.25
  %v449 = vmul.f32 %v400, 1.25
  %v450 = vsub.f32 %v166, %v448
  %v451 = vsub.f32 %v167, %v449
  %v452 = vmul.f32 %v442, 0.375
  %v453 = vmul.f32 %v445, 0.375
  %v454 = vadd.f32 %v450, %v452
  %v455 = vadd.f32 %v451, %v453
  %v456 = vpack.c.bf16 %v455, %v454
  %v458 = vsel %vm121, %v456, 0
  %460 = vmatprep.subr.bf16.mxu0 0
  %461 = vmatpush1.bf16.msra.mxu0 0
  %462 = vmatprep.subr.bf16.mxu0 0
  %463 = vmatpush1.bf16.msra.mxu0 0
  %464 = vmatprep.subr.bf16.mxu0 0
  %465 = vmatpush1.bf16.msra.mxu0 0
  %466 = vmatprep.subr.bf16.mxu0 0
  %467 = vmatpush1.bf16.msra.mxu0 0
  %468 = vmatprep.subr.bf16.mxu0 0
  %469 = vmatpush1.bf16.msra.mxu0 0
  %470 = vmatprep.subr.bf16.mxu0 0
  %471 = vmatpush1.bf16.msra.mxu0 0
  %472 = vmatprep.subr.bf16.mxu0 0
  %473 = vmatpush1.bf16.msra.mxu0 0
  %474 = vmatprep.subr.bf16.mxu0 0
  %475 = vmatpush1.bf16.msra.mxu0 %v361
  %476 = vmatprep.subr.bf16.mxu0 0
  %477 = vmatpush2.bf16.msra.mxu0 0
  %478 = vmatprep.subr.bf16.mxu0 0
  %479 = vmatpush2.bf16.msra.mxu0 0
  %480 = vmatprep.subr.bf16.mxu0 0
  %481 = vmatpush2.bf16.msra.mxu0 0
  %482 = vmatprep.subr.bf16.mxu0 0
  %483 = vmatpush2.bf16.msra.mxu0 0
  %484 = vmatprep.subr.bf16.mxu0 0
  %485 = vmatpush2.bf16.msra.mxu0 0
  %486 = vmatprep.subr.bf16.mxu0 0
  %487 = vmatpush2.bf16.msra.mxu0 0
  %488 = vmatprep.subr.bf16.mxu0 0
  %489 = vmatpush2.bf16.msra.mxu0 0
  %490 = vmatprep.subr.bf16.mxu0 0
  %491 = vmatpush2.bf16.msra.mxu0 0
  %492 = vmatprep.mubr.bf16.mxu0 0
  %493 = vmatmul.mubr.bf16.gmra.mxu0 %v458
  %v494 = vpop.f32.mrf.mxu0
  %v495 = vadd.f32 0.0, %v494
  %v496 = vpop.f32.mrf.mxu0
  %v497 = vpop.f32.mrf.mxu0
  %v498 = vadd.f32 0.0, %v497
  %v499 = vpop.f32.mrf.mxu0
  %500 = vdwg.mxu0
  %v501 = vpack.c.bf16 %v498, %v495
  %502 = vmatprep.subr.bf16.mxu0 0
  %503 = vmatpush1.bf16.xpose.msra.mxu0 0
  %504 = vmatprep.subr.bf16.mxu0 0
  %505 = vmatpush1.bf16.xpose.msra.mxu0 0
  %506 = vmatprep.subr.bf16.mxu0 0
  %507 = vmatpush1.bf16.xpose.msra.mxu0 0
  %508 = vmatprep.subr.bf16.mxu0 0
  %509 = vmatpush1.bf16.xpose.msra.mxu0 0
  %510 = vmatprep.subr.bf16.mxu0 0
  %511 = vmatpush1.bf16.xpose.msra.mxu0 0
  %512 = vmatprep.subr.bf16.mxu0 0
  %513 = vmatpush1.bf16.xpose.msra.mxu0 0
  %514 = vmatprep.subr.bf16.mxu0 0
  %515 = vmatpush1.bf16.xpose.msra.mxu0 0
  %516 = vmatprep.subr.bf16.mxu0 0
  %517 = vmatpush1.bf16.xpose.msra.mxu0 %v501
  %518 = vmatprep.subr.bf16.mxu0 0
  %519 = vmatpush2.bf16.xpose.msra.mxu0 0
  %520 = vmatprep.subr.bf16.mxu0 0
  %521 = vmatpush2.bf16.xpose.msra.mxu0 0
  %522 = vmatprep.subr.bf16.mxu0 0
  %523 = vmatpush2.bf16.xpose.msra.mxu0 0
  %524 = vmatprep.subr.bf16.mxu0 0
  %525 = vmatpush2.bf16.xpose.msra.mxu0 0
  %526 = vmatprep.subr.bf16.mxu0 0
  %527 = vmatpush2.bf16.xpose.msra.mxu0 0
  %528 = vmatprep.subr.bf16.mxu0 0
  %529 = vmatpush2.bf16.xpose.msra.mxu0 0
  %530 = vmatprep.subr.bf16.mxu0 0
  %531 = vmatpush2.bf16.xpose.msra.mxu0 0
  %532 = vmatprep.subr.bf16.mxu0 0
  %533 = vmatpush2.bf16.xpose.msra.mxu0 0
  %534 = vmatprep.mubr.bf16.mxu0 0
  %535 = vmatmul.mubr.bf16.gmra.mxu0 %v501
  %v536 = vpop.f32.mrf.mxu0
  %v537 = vadd.f32 0.0, %v536
  %v538 = vpop.f32.mrf.mxu0
  %v539 = vpop.f32.mrf.mxu0
  %v540 = vadd.f32 0.0, %v539
  %v541 = vpop.f32.mrf.mxu0
  %542 = vdwg.mxu0
  %v543 = vpack.c.bf16 %v540, %v537
  %v545 = vsel %vm121, %v543, 0
  %547 = vmatprep.subr.bf16.mxu0 0
  %548 = vmatpush1.bf16.msra.mxu0 0
  %549 = vmatprep.subr.bf16.mxu0 0
  %550 = vmatpush1.bf16.msra.mxu0 0
  %551 = vmatprep.subr.bf16.mxu0 0
  %552 = vmatpush1.bf16.msra.mxu0 0
  %553 = vmatprep.subr.bf16.mxu0 0
  %554 = vmatpush1.bf16.msra.mxu0 0
  %555 = vmatprep.subr.bf16.mxu0 0
  %556 = vmatpush1.bf16.msra.mxu0 0
  %557 = vmatprep.subr.bf16.mxu0 0
  %558 = vmatpush1.bf16.msra.mxu0 0
  %559 = vmatprep.subr.bf16.mxu0 0
  %560 = vmatpush1.bf16.msra.mxu0 0
  %561 = vmatprep.subr.bf16.mxu0 0
  %562 = vmatpush1.bf16.msra.mxu0 %v543
  %563 = vmatprep.subr.bf16.mxu0 0
  %564 = vmatpush2.bf16.msra.mxu0 0
  %565 = vmatprep.subr.bf16.mxu0 0
  %566 = vmatpush2.bf16.msra.mxu0 0
  %567 = vmatprep.subr.bf16.mxu0 0
  %568 = vmatpush2.bf16.msra.mxu0 0
  %569 = vmatprep.subr.bf16.mxu0 0
  %570 = vmatpush2.bf16.msra.mxu0 0
  %571 = vmatprep.subr.bf16.mxu0 0
  %572 = vmatpush2.bf16.msra.mxu0 0
  %573 = vmatprep.subr.bf16.mxu0 0
  %574 = vmatpush2.bf16.msra.mxu0 0
  %575 = vmatprep.subr.bf16.mxu0 0
  %576 = vmatpush2.bf16.msra.mxu0 0
  %577 = vmatprep.subr.bf16.mxu0 0
  %578 = vmatpush2.bf16.msra.mxu0 0
  %579 = vmatprep.mubr.bf16.mxu0 0
  %580 = vmatmul.mubr.bf16.gmra.mxu0 %v545
  %v581 = vpop.f32.mrf.mxu0
  %v582 = vadd.f32 0.0, %v581
  %v583 = vpop.f32.mrf.mxu0
  %v584 = vpop.f32.mrf.mxu0
  %v585 = vadd.f32 0.0, %v584
  %v586 = vpop.f32.mrf.mxu0
  %587 = vdwg.mxu0
  %v588 = vmul.f32 %v537, 1.25
  %v589 = vmul.f32 %v540, 1.25
  %v590 = vsub.f32 %v166, %v588
  %v591 = vsub.f32 %v167, %v589
  %v592 = vmul.f32 %v582, 0.375
  %v593 = vmul.f32 %v585, 0.375
  %v594 = vadd.f32 %v590, %v592
  %v595 = vadd.f32 %v591, %v593
  %v596 = vpack.c.bf16 %v595, %v594
  %v598 = vsel %vm121, %v596, 0
  %600 = vmatprep.subr.bf16.mxu0 0
  %601 = vmatpush1.bf16.msra.mxu0 0
  %602 = vmatprep.subr.bf16.mxu0 0
  %603 = vmatpush1.bf16.msra.mxu0 0
  %604 = vmatprep.subr.bf16.mxu0 0
  %605 = vmatpush1.bf16.msra.mxu0 0
  %606 = vmatprep.subr.bf16.mxu0 0
  %607 = vmatpush1.bf16.msra.mxu0 0
  %608 = vmatprep.subr.bf16.mxu0 0
  %609 = vmatpush1.bf16.msra.mxu0 0
  %610 = vmatprep.subr.bf16.mxu0 0
  %611 = vmatpush1.bf16.msra.mxu0 0
  %612 = vmatprep.subr.bf16.mxu0 0
  %613 = vmatpush1.bf16.msra.mxu0 0
  %614 = vmatprep.subr.bf16.mxu0 0
  %615 = vmatpush1.bf16.msra.mxu0 %v501
  %616 = vmatprep.subr.bf16.mxu0 0
  %617 = vmatpush2.bf16.msra.mxu0 0
  %618 = vmatprep.subr.bf16.mxu0 0
  %619 = vmatpush2.bf16.msra.mxu0 0
  %620 = vmatprep.subr.bf16.mxu0 0
  %621 = vmatpush2.bf16.msra.mxu0 0
  %622 = vmatprep.subr.bf16.mxu0 0
  %623 = vmatpush2.bf16.msra.mxu0 0
  %624 = vmatprep.subr.bf16.mxu0 0
  %625 = vmatpush2.bf16.msra.mxu0 0
  %626 = vmatprep.subr.bf16.mxu0 0
  %627 = vmatpush2.bf16.msra.mxu0 0
  %628 = vmatprep.subr.bf16.mxu0 0
  %629 = vmatpush2.bf16.msra.mxu0 0
  %630 = vmatprep.subr.bf16.mxu0 0
  %631 = vmatpush2.bf16.msra.mxu0 0
  %632 = vmatprep.mubr.bf16.mxu0 0
  %633 = vmatmul.mubr.bf16.gmra.mxu0 %v598
  %v634 = vpop.f32.mrf.mxu0
  %v635 = vadd.f32 0.0, %v634
  %v636 = vpop.f32.mrf.mxu0
  %v637 = vpop.f32.mrf.mxu0
  %v638 = vadd.f32 0.0, %v637
  %v639 = vpop.f32.mrf.mxu0
  %640 = vdwg.mxu0
  %v641 = vpack.c.bf16 %v638, %v635
  %642 = vmatprep.subr.bf16.mxu0 0
  %643 = vmatpush1.bf16.xpose.msra.mxu0 0
  %644 = vmatprep.subr.bf16.mxu0 0
  %645 = vmatpush1.bf16.xpose.msra.mxu0 0
  %646 = vmatprep.subr.bf16.mxu0 0
  %647 = vmatpush1.bf16.xpose.msra.mxu0 0
  %648 = vmatprep.subr.bf16.mxu0 0
  %649 = vmatpush1.bf16.xpose.msra.mxu0 0
  %650 = vmatprep.subr.bf16.mxu0 0
  %651 = vmatpush1.bf16.xpose.msra.mxu0 0
  %652 = vmatprep.subr.bf16.mxu0 0
  %653 = vmatpush1.bf16.xpose.msra.mxu0 0
  %654 = vmatprep.subr.bf16.mxu0 0
  %655 = vmatpush1.bf16.xpose.msra.mxu0 0
  %656 = vmatprep.subr.bf16.mxu0 0
  %657 = vmatpush1.bf16.xpose.msra.mxu0 %v641
  %658 = vmatprep.subr.bf16.mxu0 0
  %659 = vmatpush2.bf16.xpose.msra.mxu0 0
  %660 = vmatprep.subr.bf16.mxu0 0
  %661 = vmatpush2.bf16.xpose.msra.mxu0 0
  %662 = vmatprep.subr.bf16.mxu0 0
  %663 = vmatpush2.bf16.xpose.msra.mxu0 0
  %664 = vmatprep.subr.bf16.mxu0 0
  %665 = vmatpush2.bf16.xpose.msra.mxu0 0
  %666 = vmatprep.subr.bf16.mxu0 0
  %667 = vmatpush2.bf16.xpose.msra.mxu0 0
  %668 = vmatprep.subr.bf16.mxu0 0
  %669 = vmatpush2.bf16.xpose.msra.mxu0 0
  %670 = vmatprep.subr.bf16.mxu0 0
  %671 = vmatpush2.bf16.xpose.msra.mxu0 0
  %672 = vmatprep.subr.bf16.mxu0 0
  %673 = vmatpush2.bf16.xpose.msra.mxu0 0
  %674 = vmatprep.mubr.bf16.mxu0 0
  %675 = vmatmul.mubr.bf16.gmra.mxu0 %v641
  %v676 = vpop.f32.mrf.mxu0
  %v677 = vadd.f32 0.0, %v676
  %v678 = vpop.f32.mrf.mxu0
  %v679 = vpop.f32.mrf.mxu0
  %v680 = vadd.f32 0.0, %v679
  %v681 = vpop.f32.mrf.mxu0
  %682 = vdwg.mxu0
  %v683 = vpack.c.bf16 %v680, %v677
  %v685 = vsel %vm121, %v683, 0
  %687 = vmatprep.subr.bf16.mxu0 0
  %688 = vmatpush1.bf16.msra.mxu0 0
  %689 = vmatprep.subr.bf16.mxu0 0
  %690 = vmatpush1.bf16.msra.mxu0 0
  %691 = vmatprep.subr.bf16.mxu0 0
  %692 = vmatpush1.bf16.msra.mxu0 0
  %693 = vmatprep.subr.bf16.mxu0 0
  %694 = vmatpush1.bf16.msra.mxu0 0
  %695 = vmatprep.subr.bf16.mxu0 0
  %696 = vmatpush1.bf16.msra.mxu0 0
  %697 = vmatprep.subr.bf16.mxu0 0
  %698 = vmatpush1.bf16.msra.mxu0 0
  %699 = vmatprep.subr.bf16.mxu0 0
  %700 = vmatpush1.bf16.msra.mxu0 0
  %701 = vmatprep.subr.bf16.mxu0 0
  %702 = vmatpush1.bf16.msra.mxu0 %v683
  %703 = vmatprep.subr.bf16.mxu0 0
  %704 = vmatpush2.bf16.msra.mxu0 0
  %705 = vmatprep.subr.bf16.mxu0 0
  %706 = vmatpush2.bf16.msra.mxu0 0
  %707 = vmatprep.subr.bf16.mxu0 0
  %708 = vmatpush2.bf16.msra.mxu0 0
  %709 = vmatprep.subr.bf16.mxu0 0
  %710 = vmatpush2.bf16.msra.mxu0 0
  %711 = vmatprep.subr.bf16.mxu0 0
  %712 = vmatpush2.bf16.msra.mxu0 0
  %713 = vmatprep.subr.bf16.mxu0 0
  %714 = vmatpush2.bf16.msra.mxu0 0
  %715 = vmatprep.subr.bf16.mxu0 0
  %716 = vmatpush2.bf16.msra.mxu0 0
  %717 = vmatprep.subr.bf16.mxu0 0
  %718 = vmatpush2.bf16.msra.mxu0 0
  %719 = vmatprep.mubr.bf16.mxu0 0
  %720 = vmatmul.mubr.bf16.gmra.mxu0 %v685
  %v721 = vpop.f32.mrf.mxu0
  %v722 = vadd.f32 0.0, %v721
  %v723 = vpop.f32.mrf.mxu0
  %v724 = vpop.f32.mrf.mxu0
  %v725 = vadd.f32 0.0, %v724
  %v726 = vpop.f32.mrf.mxu0
  %727 = vdwg.mxu0
  %v728 = vmul.f32 %v677, 1.25
  %v729 = vmul.f32 %v680, 1.25
  %v730 = vsub.f32 %v166, %v728
  %v731 = vsub.f32 %v167, %v729
  %v732 = vmul.f32 %v722, 0.375
  %v733 = vmul.f32 %v725, 0.375
  %v734 = vadd.f32 %v730, %v732
  %v735 = vadd.f32 %v731, %v733
  %v736 = vpack.c.bf16 %v735, %v734
  %v738 = vsel %vm121, %v736, 0
  %740 = vmatprep.subr.bf16.mxu0 0
  %741 = vmatpush1.bf16.msra.mxu0 0
  %742 = vmatprep.subr.bf16.mxu0 0
  %743 = vmatpush1.bf16.msra.mxu0 0
  %744 = vmatprep.subr.bf16.mxu0 0
  %745 = vmatpush1.bf16.msra.mxu0 0
  %746 = vmatprep.subr.bf16.mxu0 0
  %747 = vmatpush1.bf16.msra.mxu0 0
  %748 = vmatprep.subr.bf16.mxu0 0
  %749 = vmatpush1.bf16.msra.mxu0 0
  %750 = vmatprep.subr.bf16.mxu0 0
  %751 = vmatpush1.bf16.msra.mxu0 0
  %752 = vmatprep.subr.bf16.mxu0 0
  %753 = vmatpush1.bf16.msra.mxu0 0
  %754 = vmatprep.subr.bf16.mxu0 0
  %755 = vmatpush1.bf16.msra.mxu0 %v641
  %756 = vmatprep.subr.bf16.mxu0 0
  %757 = vmatpush2.bf16.msra.mxu0 0
  %758 = vmatprep.subr.bf16.mxu0 0
  %759 = vmatpush2.bf16.msra.mxu0 0
  %760 = vmatprep.subr.bf16.mxu0 0
  %761 = vmatpush2.bf16.msra.mxu0 0
  %762 = vmatprep.subr.bf16.mxu0 0
  %763 = vmatpush2.bf16.msra.mxu0 0
  %764 = vmatprep.subr.bf16.mxu0 0
  %765 = vmatpush2.bf16.msra.mxu0 0
  %766 = vmatprep.subr.bf16.mxu0 0
  %767 = vmatpush2.bf16.msra.mxu0 0
  %768 = vmatprep.subr.bf16.mxu0 0
  %769 = vmatpush2.bf16.msra.mxu0 0
  %770 = vmatprep.subr.bf16.mxu0 0
  %771 = vmatpush2.bf16.msra.mxu0 0
  %772 = vmatprep.mubr.bf16.mxu0 0
  %773 = vmatmul.mubr.bf16.gmra.mxu0 %v738
  %v774 = vpop.f32.mrf.mxu0
  %v775 = vadd.f32 0.0, %v774
  %v776 = vpop.f32.mrf.mxu0
  %v777 = vpop.f32.mrf.mxu0
  %v778 = vadd.f32 0.0, %v777
  %v779 = vpop.f32.mrf.mxu0
  %780 = vdwg.mxu0
  %v781 = vpack.c.bf16 %v778, %v775
  %782 = vmatprep.subr.bf16.mxu0 0
  %783 = vmatpush1.bf16.xpose.msra.mxu0 0
  %784 = vmatprep.subr.bf16.mxu0 0
  %785 = vmatpush1.bf16.xpose.msra.mxu0 0
  %786 = vmatprep.subr.bf16.mxu0 0
  %787 = vmatpush1.bf16.xpose.msra.mxu0 0
  %788 = vmatprep.subr.bf16.mxu0 0
  %789 = vmatpush1.bf16.xpose.msra.mxu0 0
  %790 = vmatprep.subr.bf16.mxu0 0
  %791 = vmatpush1.bf16.xpose.msra.mxu0 0
  %792 = vmatprep.subr.bf16.mxu0 0
  %793 = vmatpush1.bf16.xpose.msra.mxu0 0
  %794 = vmatprep.subr.bf16.mxu0 0
  %795 = vmatpush1.bf16.xpose.msra.mxu0 0
  %796 = vmatprep.subr.bf16.mxu0 0
  %797 = vmatpush1.bf16.xpose.msra.mxu0 %v781
  %798 = vmatprep.subr.bf16.mxu0 0
  %799 = vmatpush2.bf16.xpose.msra.mxu0 0
  %800 = vmatprep.subr.bf16.mxu0 0
  %801 = vmatpush2.bf16.xpose.msra.mxu0 0
  %802 = vmatprep.subr.bf16.mxu0 0
  %803 = vmatpush2.bf16.xpose.msra.mxu0 0
  %804 = vmatprep.subr.bf16.mxu0 0
  %805 = vmatpush2.bf16.xpose.msra.mxu0 0
  %806 = vmatprep.subr.bf16.mxu0 0
  %807 = vmatpush2.bf16.xpose.msra.mxu0 0
  %808 = vmatprep.subr.bf16.mxu0 0
  %809 = vmatpush2.bf16.xpose.msra.mxu0 0
  %810 = vmatprep.subr.bf16.mxu0 0
  %811 = vmatpush2.bf16.xpose.msra.mxu0 0
  %812 = vmatprep.subr.bf16.mxu0 0
  %813 = vmatpush2.bf16.xpose.msra.mxu0 0
  %814 = vmatprep.mubr.bf16.mxu0 0
  %815 = vmatmul.mubr.bf16.gmra.mxu0 %v781
  %v816 = vpop.f32.mrf.mxu0
  %v817 = vadd.f32 0.0, %v816
  %v818 = vpop.f32.mrf.mxu0
  %v819 = vpop.f32.mrf.mxu0
  %v820 = vadd.f32 0.0, %v819
  %v821 = vpop.f32.mrf.mxu0
  %822 = vdwg.mxu0
  %v823 = vpack.c.bf16 %v820, %v817
  %v825 = vsel %vm121, %v823, 0
  %827 = vmatprep.subr.bf16.mxu0 0
  %828 = vmatpush1.bf16.msra.mxu0 0
  %829 = vmatprep.subr.bf16.mxu0 0
  %830 = vmatpush1.bf16.msra.mxu0 0
  %831 = vmatprep.subr.bf16.mxu0 0
  %832 = vmatpush1.bf16.msra.mxu0 0
  %833 = vmatprep.subr.bf16.mxu0 0
  %834 = vmatpush1.bf16.msra.mxu0 0
  %835 = vmatprep.subr.bf16.mxu0 0
  %836 = vmatpush1.bf16.msra.mxu0 0
  %837 = vmatprep.subr.bf16.mxu0 0
  %838 = vmatpush1.bf16.msra.mxu0 0
  %839 = vmatprep.subr.bf16.mxu0 0
  %840 = vmatpush1.bf16.msra.mxu0 0
  %841 = vmatprep.subr.bf16.mxu0 0
  %842 = vmatpush1.bf16.msra.mxu0 %v823
  %843 = vmatprep.subr.bf16.mxu0 0
  %844 = vmatpush2.bf16.msra.mxu0 0
  %845 = vmatprep.subr.bf16.mxu0 0
  %846 = vmatpush2.bf16.msra.mxu0 0
  %847 = vmatprep.subr.bf16.mxu0 0
  %848 = vmatpush2.bf16.msra.mxu0 0
  %849 = vmatprep.subr.bf16.mxu0 0
  %850 = vmatpush2.bf16.msra.mxu0 0
  %851 = vmatprep.subr.bf16.mxu0 0
  %852 = vmatpush2.bf16.msra.mxu0 0
  %853 = vmatprep.subr.bf16.mxu0 0
  %854 = vmatpush2.bf16.msra.mxu0 0
  %855 = vmatprep.subr.bf16.mxu0 0
  %856 = vmatpush2.bf16.msra.mxu0 0
  %857 = vmatprep.subr.bf16.mxu0 0
  %858 = vmatpush2.bf16.msra.mxu0 0
  %859 = vmatprep.mubr.bf16.mxu0 0
  %860 = vmatmul.mubr.bf16.gmra.mxu0 %v825
  %v861 = vpop.f32.mrf.mxu0
  %v862 = vadd.f32 0.0, %v861
  %v863 = vpop.f32.mrf.mxu0
  %v864 = vpop.f32.mrf.mxu0
  %v865 = vadd.f32 0.0, %v864
  %v866 = vpop.f32.mrf.mxu0
  %867 = vdwg.mxu0
  %v868 = vmul.f32 %v817, 1.25
  %v869 = vmul.f32 %v820, 1.25
  %v870 = vsub.f32 %v166, %v868
  %v871 = vsub.f32 %v167, %v869
  %v872 = vmul.f32 %v862, 0.375
  %v873 = vmul.f32 %v865, 0.375
  %v874 = vadd.f32 %v870, %v872
  %v875 = vadd.f32 %v871, %v873
  %v876 = vpack.c.bf16 %v875, %v874
  %v878 = vsel %vm121, %v876, 0
  %880 = vmatprep.subr.bf16.mxu0 0
  %881 = vmatpush1.bf16.msra.mxu0 0
  %882 = vmatprep.subr.bf16.mxu0 0
  %883 = vmatpush1.bf16.msra.mxu0 0
  %884 = vmatprep.subr.bf16.mxu0 0
  %885 = vmatpush1.bf16.msra.mxu0 0
  %886 = vmatprep.subr.bf16.mxu0 0
  %887 = vmatpush1.bf16.msra.mxu0 0
  %888 = vmatprep.subr.bf16.mxu0 0
  %889 = vmatpush1.bf16.msra.mxu0 0
  %890 = vmatprep.subr.bf16.mxu0 0
  %891 = vmatpush1.bf16.msra.mxu0 0
  %892 = vmatprep.subr.bf16.mxu0 0
  %893 = vmatpush1.bf16.msra.mxu0 0
  %894 = vmatprep.subr.bf16.mxu0 0
  %895 = vmatpush1.bf16.msra.mxu0 %v781
  %896 = vmatprep.subr.bf16.mxu0 0
  %897 = vmatpush2.bf16.msra.mxu0 0
  %898 = vmatprep.subr.bf16.mxu0 0
  %899 = vmatpush2.bf16.msra.mxu0 0
  %900 = vmatprep.subr.bf16.mxu0 0
  %901 = vmatpush2.bf16.msra.mxu0 0
  %902 = vmatprep.subr.bf16.mxu0 0
  %903 = vmatpush2.bf16.msra.mxu0 0
  %904 = vmatprep.subr.bf16.mxu0 0
  %905 = vmatpush2.bf16.msra.mxu0 0
  %906 = vmatprep.subr.bf16.mxu0 0
  %907 = vmatpush2.bf16.msra.mxu0 0
  %908 = vmatprep.subr.bf16.mxu0 0
  %909 = vmatpush2.bf16.msra.mxu0 0
  %910 = vmatprep.subr.bf16.mxu0 0
  %911 = vmatpush2.bf16.msra.mxu0 0
  %912 = vmatprep.mubr.bf16.mxu0 0
  %913 = vmatmul.mubr.bf16.gmra.mxu0 %v878
  %v914 = vpop.f32.mrf.mxu0
  %v915 = vadd.f32 0.0, %v914
  %v916 = vpop.f32.mrf.mxu0
  %v917 = vpop.f32.mrf.mxu0
  %v918 = vadd.f32 0.0, %v917
  %v919 = vpop.f32.mrf.mxu0
  %920 = vdwg.mxu0
  %v921 = vpack.c.bf16 %v918, %v915
  %922 = vmatprep.subr.bf16.mxu0 0
  %923 = vmatpush1.bf16.xpose.msra.mxu0 0
  %924 = vmatprep.subr.bf16.mxu0 0
  %925 = vmatpush1.bf16.xpose.msra.mxu0 0
  %926 = vmatprep.subr.bf16.mxu0 0
  %927 = vmatpush1.bf16.xpose.msra.mxu0 0
  %928 = vmatprep.subr.bf16.mxu0 0
  %929 = vmatpush1.bf16.xpose.msra.mxu0 0
  %930 = vmatprep.subr.bf16.mxu0 0
  %931 = vmatpush1.bf16.xpose.msra.mxu0 0
  %932 = vmatprep.subr.bf16.mxu0 0
  %933 = vmatpush1.bf16.xpose.msra.mxu0 0
  %934 = vmatprep.subr.bf16.mxu0 0
  %935 = vmatpush1.bf16.xpose.msra.mxu0 0
  %936 = vmatprep.subr.bf16.mxu0 0
  %937 = vmatpush1.bf16.xpose.msra.mxu0 %v921
  %938 = vmatprep.subr.bf16.mxu0 0
  %939 = vmatpush2.bf16.xpose.msra.mxu0 0
  %940 = vmatprep.subr.bf16.mxu0 0
  %941 = vmatpush2.bf16.xpose.msra.mxu0 0
  %942 = vmatprep.subr.bf16.mxu0 0
  %943 = vmatpush2.bf16.xpose.msra.mxu0 0
  %944 = vmatprep.subr.bf16.mxu0 0
  %945 = vmatpush2.bf16.xpose.msra.mxu0 0
  %946 = vmatprep.subr.bf16.mxu0 0
  %947 = vmatpush2.bf16.xpose.msra.mxu0 0
  %948 = vmatprep.subr.bf16.mxu0 0
  %949 = vmatpush2.bf16.xpose.msra.mxu0 0
  %950 = vmatprep.subr.bf16.mxu0 0
  %951 = vmatpush2.bf16.xpose.msra.mxu0 0
  %952 = vmatprep.subr.bf16.mxu0 0
  %953 = vmatpush2.bf16.xpose.msra.mxu0 0
  %954 = vmatprep.mubr.bf16.mxu0 0
  %955 = vmatmul.mubr.bf16.gmra.mxu0 %v921
  %v956 = vpop.f32.mrf.mxu0
  %v957 = vadd.f32 0.0, %v956
  %v958 = vpop.f32.mrf.mxu0
  %v959 = vpop.f32.mrf.mxu0
  %v960 = vadd.f32 0.0, %v959
  %v961 = vpop.f32.mrf.mxu0
  %962 = vdwg.mxu0
  %v963 = vpack.c.bf16 %v960, %v957
  %v965 = vsel %vm121, %v963, 0
  %967 = vmatprep.subr.bf16.mxu0 0
  %968 = vmatpush1.bf16.msra.mxu0 0
  %969 = vmatprep.subr.bf16.mxu0 0
  %970 = vmatpush1.bf16.msra.mxu0 0
  %971 = vmatprep.subr.bf16.mxu0 0
  %972 = vmatpush1.bf16.msra.mxu0 0
  %973 = vmatprep.subr.bf16.mxu0 0
  %974 = vmatpush1.bf16.msra.mxu0 0
  %975 = vmatprep.subr.bf16.mxu0 0
  %976 = vmatpush1.bf16.msra.mxu0 0
  %977 = vmatprep.subr.bf16.mxu0 0
  %978 = vmatpush1.bf16.msra.mxu0 0
  %979 = vmatprep.subr.bf16.mxu0 0
  %980 = vmatpush1.bf16.msra.mxu0 0
  %981 = vmatprep.subr.bf16.mxu0 0
  %982 = vmatpush1.bf16.msra.mxu0 %v963
  %983 = vmatprep.subr.bf16.mxu0 0
  %984 = vmatpush2.bf16.msra.mxu0 0
  %985 = vmatprep.subr.bf16.mxu0 0
  %986 = vmatpush2.bf16.msra.mxu0 0
  %987 = vmatprep.subr.bf16.mxu0 0
  %988 = vmatpush2.bf16.msra.mxu0 0
  %989 = vmatprep.subr.bf16.mxu0 0
  %990 = vmatpush2.bf16.msra.mxu0 0
  %991 = vmatprep.subr.bf16.mxu0 0
  %992 = vmatpush2.bf16.msra.mxu0 0
  %993 = vmatprep.subr.bf16.mxu0 0
  %994 = vmatpush2.bf16.msra.mxu0 0
  %995 = vmatprep.subr.bf16.mxu0 0
  %996 = vmatpush2.bf16.msra.mxu0 0
  %997 = vmatprep.subr.bf16.mxu0 0
  %998 = vmatpush2.bf16.msra.mxu0 0
  %999 = vmatprep.mubr.bf16.mxu0 0
  %1000 = vmatmul.mubr.bf16.gmra.mxu0 %v965
  %v1001 = vpop.f32.mrf.mxu0
  %v1002 = vadd.f32 0.0, %v1001
  %v1003 = vpop.f32.mrf.mxu0
  %v1004 = vpop.f32.mrf.mxu0
  %v1005 = vadd.f32 0.0, %v1004
  %v1006 = vpop.f32.mrf.mxu0
  %1007 = vdwg.mxu0
  %v1008 = vmul.f32 %v957, 1.25
  %v1009 = vmul.f32 %v960, 1.25
  %v1010 = vsub.f32 %v166, %v1008
  %v1011 = vsub.f32 %v167, %v1009
  %v1012 = vmul.f32 %v1002, 0.375
  %v1013 = vmul.f32 %v1005, 0.375
  %v1014 = vadd.f32 %v1010, %v1012
  %v1015 = vadd.f32 %v1011, %v1013
  %v1016 = vpack.c.bf16 %v1015, %v1014
  %v1018 = vsel %vm121, %v1016, 0
  %1020 = vmatprep.subr.bf16.mxu0 0
  %1021 = vmatpush1.bf16.msra.mxu0 0
  %1022 = vmatprep.subr.bf16.mxu0 0
  %1023 = vmatpush1.bf16.msra.mxu0 0
  %1024 = vmatprep.subr.bf16.mxu0 0
  %1025 = vmatpush1.bf16.msra.mxu0 0
  %1026 = vmatprep.subr.bf16.mxu0 0
  %1027 = vmatpush1.bf16.msra.mxu0 0
  %1028 = vmatprep.subr.bf16.mxu0 0
  %1029 = vmatpush1.bf16.msra.mxu0 0
  %1030 = vmatprep.subr.bf16.mxu0 0
  %1031 = vmatpush1.bf16.msra.mxu0 0
  %1032 = vmatprep.subr.bf16.mxu0 0
  %1033 = vmatpush1.bf16.msra.mxu0 0
  %1034 = vmatprep.subr.bf16.mxu0 0
  %1035 = vmatpush1.bf16.msra.mxu0 %v921
  %1036 = vmatprep.subr.bf16.mxu0 0
  %1037 = vmatpush2.bf16.msra.mxu0 0
  %1038 = vmatprep.subr.bf16.mxu0 0
  %1039 = vmatpush2.bf16.msra.mxu0 0
  %1040 = vmatprep.subr.bf16.mxu0 0
  %1041 = vmatpush2.bf16.msra.mxu0 0
  %1042 = vmatprep.subr.bf16.mxu0 0
  %1043 = vmatpush2.bf16.msra.mxu0 0
  %1044 = vmatprep.subr.bf16.mxu0 0
  %1045 = vmatpush2.bf16.msra.mxu0 0
  %1046 = vmatprep.subr.bf16.mxu0 0
  %1047 = vmatpush2.bf16.msra.mxu0 0
  %1048 = vmatprep.subr.bf16.mxu0 0
  %1049 = vmatpush2.bf16.msra.mxu0 0
  %1050 = vmatprep.subr.bf16.mxu0 0
  %1051 = vmatpush2.bf16.msra.mxu0 0
  %1052 = vmatprep.mubr.bf16.mxu0 0
  %1053 = vmatmul.mubr.bf16.gmra.mxu0 %v1018
  %v1054 = vpop.f32.mrf.mxu0
  %v1055 = vadd.f32 0.0, %v1054
  %v1056 = vpop.f32.mrf.mxu0
  %v1057 = vpop.f32.mrf.mxu0
  %v1058 = vadd.f32 0.0, %v1057
  %v1059 = vpop.f32.mrf.mxu0
  %1060 = vdwg.mxu0
  %v1061 = vpack.c.bf16 %v1058, %v1055
  %1062 = vmatprep.subr.bf16.mxu0 0
  %1063 = vmatpush1.bf16.xpose.msra.mxu0 0
  %1064 = vmatprep.subr.bf16.mxu0 0
  %1065 = vmatpush1.bf16.xpose.msra.mxu0 0
  %1066 = vmatprep.subr.bf16.mxu0 0
  %1067 = vmatpush1.bf16.xpose.msra.mxu0 0
  %1068 = vmatprep.subr.bf16.mxu0 0
  %1069 = vmatpush1.bf16.xpose.msra.mxu0 0
  %1070 = vmatprep.subr.bf16.mxu0 0
  %1071 = vmatpush1.bf16.xpose.msra.mxu0 0
  %1072 = vmatprep.subr.bf16.mxu0 0
  %1073 = vmatpush1.bf16.xpose.msra.mxu0 0
  %1074 = vmatprep.subr.bf16.mxu0 0
  %1075 = vmatpush1.bf16.xpose.msra.mxu0 0
  %1076 = vmatprep.subr.bf16.mxu0 0
  %1077 = vmatpush1.bf16.xpose.msra.mxu0 %v1061
  %1078 = vmatprep.subr.bf16.mxu0 0
  %1079 = vmatpush2.bf16.xpose.msra.mxu0 0
  %1080 = vmatprep.subr.bf16.mxu0 0
  %1081 = vmatpush2.bf16.xpose.msra.mxu0 0
  %1082 = vmatprep.subr.bf16.mxu0 0
  %1083 = vmatpush2.bf16.xpose.msra.mxu0 0
  %1084 = vmatprep.subr.bf16.mxu0 0
  %1085 = vmatpush2.bf16.xpose.msra.mxu0 0
  %1086 = vmatprep.subr.bf16.mxu0 0
  %1087 = vmatpush2.bf16.xpose.msra.mxu0 0
  %1088 = vmatprep.subr.bf16.mxu0 0
  %1089 = vmatpush2.bf16.xpose.msra.mxu0 0
  %1090 = vmatprep.subr.bf16.mxu0 0
  %1091 = vmatpush2.bf16.xpose.msra.mxu0 0
  %1092 = vmatprep.subr.bf16.mxu0 0
  %1093 = vmatpush2.bf16.xpose.msra.mxu0 0
  %1094 = vmatprep.mubr.bf16.mxu0 0
  %1095 = vmatmul.mubr.bf16.gmra.mxu0 %v1061
  %v1096 = vpop.f32.mrf.mxu0
  %v1097 = vadd.f32 0.0, %v1096
  %v1098 = vpop.f32.mrf.mxu0
  %v1099 = vpop.f32.mrf.mxu0
  %v1100 = vadd.f32 0.0, %v1099
  %v1101 = vpop.f32.mrf.mxu0
  %1102 = vdwg.mxu0
  %v1103 = vpack.c.bf16 %v1100, %v1097
  %v1105 = vsel %vm121, %v1103, 0
  %1107 = vmatprep.subr.bf16.mxu0 0
  %1108 = vmatpush1.bf16.msra.mxu0 0
  %1109 = vmatprep.subr.bf16.mxu0 0
  %1110 = vmatpush1.bf16.msra.mxu0 0
  %1111 = vmatprep.subr.bf16.mxu0 0
  %1112 = vmatpush1.bf16.msra.mxu0 0
  %1113 = vmatprep.subr.bf16.mxu0 0
  %1114 = vmatpush1.bf16.msra.mxu0 0
  %1115 = vmatprep.subr.bf16.mxu0 0
  %1116 = vmatpush1.bf16.msra.mxu0 0
  %1117 = vmatprep.subr.bf16.mxu0 0
  %1118 = vmatpush1.bf16.msra.mxu0 0
  %1119 = vmatprep.subr.bf16.mxu0 0
  %1120 = vmatpush1.bf16.msra.mxu0 0
  %1121 = vmatprep.subr.bf16.mxu0 0
  %1122 = vmatpush1.bf16.msra.mxu0 %v1103
  %1123 = vmatprep.subr.bf16.mxu0 0
  %1124 = vmatpush2.bf16.msra.mxu0 0
  %1125 = vmatprep.subr.bf16.mxu0 0
  %1126 = vmatpush2.bf16.msra.mxu0 0
  %1127 = vmatprep.subr.bf16.mxu0 0
  %1128 = vmatpush2.bf16.msra.mxu0 0
  %1129 = vmatprep.subr.bf16.mxu0 0
  %1130 = vmatpush2.bf16.msra.mxu0 0
  %1131 = vmatprep.subr.bf16.mxu0 0
  %1132 = vmatpush2.bf16.msra.mxu0 0
  %1133 = vmatprep.subr.bf16.mxu0 0
  %1134 = vmatpush2.bf16.msra.mxu0 0
  %1135 = vmatprep.subr.bf16.mxu0 0
  %1136 = vmatpush2.bf16.msra.mxu0 0
  %1137 = vmatprep.subr.bf16.mxu0 0
  %1138 = vmatpush2.bf16.msra.mxu0 0
  %1139 = vmatprep.mubr.bf16.mxu0 0
  %1140 = vmatmul.mubr.bf16.gmra.mxu0 %v1105
  %v1141 = vpop.f32.mrf.mxu0
  %v1142 = vadd.f32 0.0, %v1141
  %v1143 = vpop.f32.mrf.mxu0
  %v1144 = vpop.f32.mrf.mxu0
  %v1145 = vadd.f32 0.0, %v1144
  %v1146 = vpop.f32.mrf.mxu0
  %1147 = vdwg.mxu0
  %v1148 = vmul.f32 %v1097, 1.25
  %v1149 = vmul.f32 %v1100, 1.25
  %v1150 = vsub.f32 %v166, %v1148
  %v1151 = vsub.f32 %v167, %v1149
  %v1152 = vmul.f32 %v1142, 0.375
  %v1153 = vmul.f32 %v1145, 0.375
  %v1154 = vadd.f32 %v1150, %v1152
  %v1155 = vadd.f32 %v1151, %v1153
  %v1156 = vpack.c.bf16 %v1155, %v1154
  %v1158 = vsel %vm121, %v1156, 0
  %1160 = vmatprep.subr.bf16.mxu0 0
  %1161 = vmatpush1.bf16.msra.mxu0 0
  %1162 = vmatprep.subr.bf16.mxu0 0
  %1163 = vmatpush1.bf16.msra.mxu0 0
  %1164 = vmatprep.subr.bf16.mxu0 0
  %1165 = vmatpush1.bf16.msra.mxu0 0
  %1166 = vmatprep.subr.bf16.mxu0 0
  %1167 = vmatpush1.bf16.msra.mxu0 0
  %1168 = vmatprep.subr.bf16.mxu0 0
  %1169 = vmatpush1.bf16.msra.mxu0 0
  %1170 = vmatprep.subr.bf16.mxu0 0
  %1171 = vmatpush1.bf16.msra.mxu0 0
  %1172 = vmatprep.subr.bf16.mxu0 0
  %1173 = vmatpush1.bf16.msra.mxu0 0
  %1174 = vmatprep.subr.bf16.mxu0 0
  %1175 = vmatpush1.bf16.msra.mxu0 %v1061
  %1176 = vmatprep.subr.bf16.mxu0 0
  %1177 = vmatpush2.bf16.msra.mxu0 0
  %1178 = vmatprep.subr.bf16.mxu0 0
  %1179 = vmatpush2.bf16.msra.mxu0 0
  %1180 = vmatprep.subr.bf16.mxu0 0
  %1181 = vmatpush2.bf16.msra.mxu0 0
  %1182 = vmatprep.subr.bf16.mxu0 0
  %1183 = vmatpush2.bf16.msra.mxu0 0
  %1184 = vmatprep.subr.bf16.mxu0 0
  %1185 = vmatpush2.bf16.msra.mxu0 0
  %1186 = vmatprep.subr.bf16.mxu0 0
  %1187 = vmatpush2.bf16.msra.mxu0 0
  %1188 = vmatprep.subr.bf16.mxu0 0
  %1189 = vmatpush2.bf16.msra.mxu0 0
  %1190 = vmatprep.subr.bf16.mxu0 0
  %1191 = vmatpush2.bf16.msra.mxu0 0
  %1192 = vmatprep.mubr.bf16.mxu0 0
  %1193 = vmatmul.mubr.bf16.gmra.mxu0 %v1158
  %v1194 = vpop.f32.mrf.mxu0
  %v1195 = vadd.f32 0.0, %v1194
  %v1196 = vpop.f32.mrf.mxu0
  %v1197 = vpop.f32.mrf.mxu0
  %v1198 = vadd.f32 0.0, %v1197
  %v1199 = vpop.f32.mrf.mxu0
  %1200 = vdwg.mxu0
  %v1201 = vpack.c.bf16 %v1198, %v1195
  %1202 = vmatprep.subr.bf16.mxu0 0
  %1203 = vmatpush1.bf16.xpose.msra.mxu0 0
  %1204 = vmatprep.subr.bf16.mxu0 0
  %1205 = vmatpush1.bf16.xpose.msra.mxu0 0
  %1206 = vmatprep.subr.bf16.mxu0 0
  %1207 = vmatpush1.bf16.xpose.msra.mxu0 0
  %1208 = vmatprep.subr.bf16.mxu0 0
  %1209 = vmatpush1.bf16.xpose.msra.mxu0 0
  %1210 = vmatprep.subr.bf16.mxu0 0
  %1211 = vmatpush1.bf16.xpose.msra.mxu0 0
  %1212 = vmatprep.subr.bf16.mxu0 0
  %1213 = vmatpush1.bf16.xpose.msra.mxu0 0
  %1214 = vmatprep.subr.bf16.mxu0 0
  %1215 = vmatpush1.bf16.xpose.msra.mxu0 0
  %1216 = vmatprep.subr.bf16.mxu0 0
  %1217 = vmatpush1.bf16.xpose.msra.mxu0 %v1201
  %1218 = vmatprep.subr.bf16.mxu0 0
  %1219 = vmatpush2.bf16.xpose.msra.mxu0 0
  %1220 = vmatprep.subr.bf16.mxu0 0
  %1221 = vmatpush2.bf16.xpose.msra.mxu0 0
  %1222 = vmatprep.subr.bf16.mxu0 0
  %1223 = vmatpush2.bf16.xpose.msra.mxu0 0
  %1224 = vmatprep.subr.bf16.mxu0 0
  %1225 = vmatpush2.bf16.xpose.msra.mxu0 0
  %1226 = vmatprep.subr.bf16.mxu0 0
  %1227 = vmatpush2.bf16.xpose.msra.mxu0 0
  %1228 = vmatprep.subr.bf16.mxu0 0
  %1229 = vmatpush2.bf16.xpose.msra.mxu0 0
  %1230 = vmatprep.subr.bf16.mxu0 0
  %1231 = vmatpush2.bf16.xpose.msra.mxu0 0
  %1232 = vmatprep.subr.bf16.mxu0 0
  %1233 = vmatpush2.bf16.xpose.msra.mxu0 0
  %1234 = vmatprep.mubr.bf16.mxu0 0
  %1235 = vmatmul.mubr.bf16.gmra.mxu0 %v1201
  %v1236 = vpop.f32.mrf.mxu0
  %v1237 = vadd.f32 0.0, %v1236
  %v1238 = vpop.f32.mrf.mxu0
  %v1239 = vpop.f32.mrf.mxu0
  %v1240 = vadd.f32 0.0, %v1239
  %v1241 = vpop.f32.mrf.mxu0
  %1242 = vdwg.mxu0
  %v1243 = vpack.c.bf16 %v1240, %v1237
  %v1245 = vsel %vm121, %v1243, 0
  %1247 = vmatprep.subr.bf16.mxu0 0
  %1248 = vmatpush1.bf16.msra.mxu0 0
  %1249 = vmatprep.subr.bf16.mxu0 0
  %1250 = vmatpush1.bf16.msra.mxu0 0
  %1251 = vmatprep.subr.bf16.mxu0 0
  %1252 = vmatpush1.bf16.msra.mxu0 0
  %1253 = vmatprep.subr.bf16.mxu0 0
  %1254 = vmatpush1.bf16.msra.mxu0 0
  %1255 = vmatprep.subr.bf16.mxu0 0
  %1256 = vmatpush1.bf16.msra.mxu0 0
  %1257 = vmatprep.subr.bf16.mxu0 0
  %1258 = vmatpush1.bf16.msra.mxu0 0
  %1259 = vmatprep.subr.bf16.mxu0 0
  %1260 = vmatpush1.bf16.msra.mxu0 0
  %1261 = vmatprep.subr.bf16.mxu0 0
  %1262 = vmatpush1.bf16.msra.mxu0 %v1243
  %1263 = vmatprep.subr.bf16.mxu0 0
  %1264 = vmatpush2.bf16.msra.mxu0 0
  %1265 = vmatprep.subr.bf16.mxu0 0
  %1266 = vmatpush2.bf16.msra.mxu0 0
  %1267 = vmatprep.subr.bf16.mxu0 0
  %1268 = vmatpush2.bf16.msra.mxu0 0
  %1269 = vmatprep.subr.bf16.mxu0 0
  %1270 = vmatpush2.bf16.msra.mxu0 0
  %1271 = vmatprep.subr.bf16.mxu0 0
  %1272 = vmatpush2.bf16.msra.mxu0 0
  %1273 = vmatprep.subr.bf16.mxu0 0
  %1274 = vmatpush2.bf16.msra.mxu0 0
  %1275 = vmatprep.subr.bf16.mxu0 0
  %1276 = vmatpush2.bf16.msra.mxu0 0
  %1277 = vmatprep.subr.bf16.mxu0 0
  %1278 = vmatpush2.bf16.msra.mxu0 0
  %1279 = vmatprep.mubr.bf16.mxu0 0
  %1280 = vmatmul.mubr.bf16.gmra.mxu0 %v1245
  %v1281 = vpop.f32.mrf.mxu0
  %v1282 = vadd.f32 0.0, %v1281
  %v1283 = vpop.f32.mrf.mxu0
  %v1284 = vpop.f32.mrf.mxu0
  %v1285 = vadd.f32 0.0, %v1284
  %v1286 = vpop.f32.mrf.mxu0
  %1287 = vdwg.mxu0
  %v1288 = vmul.f32 %v1237, 1.25
  %v1289 = vmul.f32 %v1240, 1.25
  %v1290 = vsub.f32 %v166, %v1288
  %v1291 = vsub.f32 %v167, %v1289
  %v1292 = vmul.f32 %v1282, 0.375
  %v1293 = vmul.f32 %v1285, 0.375
  %v1294 = vadd.f32 %v1290, %v1292
  %v1295 = vadd.f32 %v1291, %v1293
  %v1296 = vpack.c.bf16 %v1295, %v1294
  %v1298 = vsel %vm121, %v1296, 0
  %1300 = vmatprep.subr.bf16.mxu0 0
  %1301 = vmatpush1.bf16.msra.mxu0 0
  %1302 = vmatprep.subr.bf16.mxu0 0
  %1303 = vmatpush1.bf16.msra.mxu0 0
  %1304 = vmatprep.subr.bf16.mxu0 0
  %1305 = vmatpush1.bf16.msra.mxu0 0
  %1306 = vmatprep.subr.bf16.mxu0 0
  %1307 = vmatpush1.bf16.msra.mxu0 0
  %1308 = vmatprep.subr.bf16.mxu0 0
  %1309 = vmatpush1.bf16.msra.mxu0 0
  %1310 = vmatprep.subr.bf16.mxu0 0
  %1311 = vmatpush1.bf16.msra.mxu0 0
  %1312 = vmatprep.subr.bf16.mxu0 0
  %1313 = vmatpush1.bf16.msra.mxu0 0
  %1314 = vmatprep.subr.bf16.mxu0 0
  %1315 = vmatpush1.bf16.msra.mxu0 %v1201
  %1316 = vmatprep.subr.bf16.mxu0 0
  %1317 = vmatpush2.bf16.msra.mxu0 0
  %1318 = vmatprep.subr.bf16.mxu0 0
  %1319 = vmatpush2.bf16.msra.mxu0 0
  %1320 = vmatprep.subr.bf16.mxu0 0
  %1321 = vmatpush2.bf16.msra.mxu0 0
  %1322 = vmatprep.subr.bf16.mxu0 0
  %1323 = vmatpush2.bf16.msra.mxu0 0
  %1324 = vmatprep.subr.bf16.mxu0 0
  %1325 = vmatpush2.bf16.msra.mxu0 0
  %1326 = vmatprep.subr.bf16.mxu0 0
  %1327 = vmatpush2.bf16.msra.mxu0 0
  %1328 = vmatprep.subr.bf16.mxu0 0
  %1329 = vmatpush2.bf16.msra.mxu0 0
  %1330 = vmatprep.subr.bf16.mxu0 0
  %1331 = vmatpush2.bf16.msra.mxu0 0
  %1332 = vmatprep.mubr.bf16.mxu0 0
  %1333 = vmatmul.mubr.bf16.gmra.mxu0 %v1298
  %v1334 = vpop.f32.mrf.mxu0
  %v1335 = vadd.f32 0.0, %v1334
  %v1336 = vpop.f32.mrf.mxu0
  %v1337 = vpop.f32.mrf.mxu0
  %v1338 = vadd.f32 0.0, %v1337
  %v1339 = vpop.f32.mrf.mxu0
  %1340 = vdwg.mxu0
  %v1341 = vpack.c.bf16 %v1338, %v1335
  %1342 = vmatprep.subr.bf16.mxu0 0
  %1343 = vmatpush1.bf16.xpose.msra.mxu0 0
  %1344 = vmatprep.subr.bf16.mxu0 0
  %1345 = vmatpush1.bf16.xpose.msra.mxu0 0
  %1346 = vmatprep.subr.bf16.mxu0 0
  %1347 = vmatpush1.bf16.xpose.msra.mxu0 0
  %1348 = vmatprep.subr.bf16.mxu0 0
  %1349 = vmatpush1.bf16.xpose.msra.mxu0 0
  %1350 = vmatprep.subr.bf16.mxu0 0
  %1351 = vmatpush1.bf16.xpose.msra.mxu0 0
  %1352 = vmatprep.subr.bf16.mxu0 0
  %1353 = vmatpush1.bf16.xpose.msra.mxu0 0
  %1354 = vmatprep.subr.bf16.mxu0 0
  %1355 = vmatpush1.bf16.xpose.msra.mxu0 0
  %1356 = vmatprep.subr.bf16.mxu0 0
  %1357 = vmatpush1.bf16.xpose.msra.mxu0 %v1341
  %1358 = vmatprep.subr.bf16.mxu0 0
  %1359 = vmatpush2.bf16.xpose.msra.mxu0 0
  %1360 = vmatprep.subr.bf16.mxu0 0
  %1361 = vmatpush2.bf16.xpose.msra.mxu0 0
  %1362 = vmatprep.subr.bf16.mxu0 0
  %1363 = vmatpush2.bf16.xpose.msra.mxu0 0
  %1364 = vmatprep.subr.bf16.mxu0 0
  %1365 = vmatpush2.bf16.xpose.msra.mxu0 0
  %1366 = vmatprep.subr.bf16.mxu0 0
  %1367 = vmatpush2.bf16.xpose.msra.mxu0 0
  %1368 = vmatprep.subr.bf16.mxu0 0
  %1369 = vmatpush2.bf16.xpose.msra.mxu0 0
  %1370 = vmatprep.subr.bf16.mxu0 0
  %1371 = vmatpush2.bf16.xpose.msra.mxu0 0
  %1372 = vmatprep.subr.bf16.mxu0 0
  %1373 = vmatpush2.bf16.xpose.msra.mxu0 0
  %1374 = vmatprep.mubr.bf16.mxu0 0
  %1375 = vmatmul.mubr.bf16.gmra.mxu0 %v1341
  %v1376 = vpop.f32.mrf.mxu0
  %v1377 = vadd.f32 0.0, %v1376
  %v1378 = vpop.f32.mrf.mxu0
  %v1379 = vpop.f32.mrf.mxu0
  %v1380 = vadd.f32 0.0, %v1379
  %v1381 = vpop.f32.mrf.mxu0
  %1382 = vdwg.mxu0
  %v1383 = vpack.c.bf16 %v1380, %v1377
  %v1385 = vsel %vm121, %v1383, 0
  %1387 = vmatprep.subr.bf16.mxu0 0
  %1388 = vmatpush1.bf16.msra.mxu0 0
  %1389 = vmatprep.subr.bf16.mxu0 0
  %1390 = vmatpush1.bf16.msra.mxu0 0
  %1391 = vmatprep.subr.bf16.mxu0 0
  %1392 = vmatpush1.bf16.msra.mxu0 0
  %1393 = vmatprep.subr.bf16.mxu0 0
  %1394 = vmatpush1.bf16.msra.mxu0 0
  %1395 = vmatprep.subr.bf16.mxu0 0
  %1396 = vmatpush1.bf16.msra.mxu0 0
  %1397 = vmatprep.subr.bf16.mxu0 0
  %1398 = vmatpush1.bf16.msra.mxu0 0
  %1399 = vmatprep.subr.bf16.mxu0 0
  %1400 = vmatpush1.bf16.msra.mxu0 0
  %1401 = vmatprep.subr.bf16.mxu0 0
  %1402 = vmatpush1.bf16.msra.mxu0 %v1383
  %1403 = vmatprep.subr.bf16.mxu0 0
  %1404 = vmatpush2.bf16.msra.mxu0 0
  %1405 = vmatprep.subr.bf16.mxu0 0
  %1406 = vmatpush2.bf16.msra.mxu0 0
  %1407 = vmatprep.subr.bf16.mxu0 0
  %1408 = vmatpush2.bf16.msra.mxu0 0
  %1409 = vmatprep.subr.bf16.mxu0 0
  %1410 = vmatpush2.bf16.msra.mxu0 0
  %1411 = vmatprep.subr.bf16.mxu0 0
  %1412 = vmatpush2.bf16.msra.mxu0 0
  %1413 = vmatprep.subr.bf16.mxu0 0
  %1414 = vmatpush2.bf16.msra.mxu0 0
  %1415 = vmatprep.subr.bf16.mxu0 0
  %1416 = vmatpush2.bf16.msra.mxu0 0
  %1417 = vmatprep.subr.bf16.mxu0 0
  %1418 = vmatpush2.bf16.msra.mxu0 0
  %1419 = vmatprep.mubr.bf16.mxu0 0
  %1420 = vmatmul.mubr.bf16.gmra.mxu0 %v1385
  %v1421 = vpop.f32.mrf.mxu0
  %v1422 = vadd.f32 0.0, %v1421
  %v1423 = vpop.f32.mrf.mxu0
  %v1424 = vpop.f32.mrf.mxu0
  %v1425 = vadd.f32 0.0, %v1424
  %v1426 = vpop.f32.mrf.mxu0
  %1427 = vdwg.mxu0
  %v1428 = vmul.f32 %v1377, 1.25
  %v1429 = vmul.f32 %v1380, 1.25
  %v1430 = vsub.f32 %v166, %v1428
  %v1431 = vsub.f32 %v167, %v1429
  %v1432 = vmul.f32 %v1422, 0.375
  %v1433 = vmul.f32 %v1425, 0.375
  %v1434 = vadd.f32 %v1430, %v1432
  %v1435 = vadd.f32 %v1431, %v1433
  %v1436 = vpack.c.bf16 %v1435, %v1434
  %v1438 = vsel %vm121, %v1436, 0
  %1440 = vmatprep.subr.bf16.mxu0 0
  %1441 = vmatpush1.bf16.msra.mxu0 0
  %1442 = vmatprep.subr.bf16.mxu0 0
  %1443 = vmatpush1.bf16.msra.mxu0 0
  %1444 = vmatprep.subr.bf16.mxu0 0
  %1445 = vmatpush1.bf16.msra.mxu0 0
  %1446 = vmatprep.subr.bf16.mxu0 0
  %1447 = vmatpush1.bf16.msra.mxu0 0
  %1448 = vmatprep.subr.bf16.mxu0 0
  %1449 = vmatpush1.bf16.msra.mxu0 0
  %1450 = vmatprep.subr.bf16.mxu0 0
  %1451 = vmatpush1.bf16.msra.mxu0 0
  %1452 = vmatprep.subr.bf16.mxu0 0
  %1453 = vmatpush1.bf16.msra.mxu0 0
  %1454 = vmatprep.subr.bf16.mxu0 0
  %1455 = vmatpush1.bf16.msra.mxu0 %v1341
  %1456 = vmatprep.subr.bf16.mxu0 0
  %1457 = vmatpush2.bf16.msra.mxu0 0
  %1458 = vmatprep.subr.bf16.mxu0 0
  %1459 = vmatpush2.bf16.msra.mxu0 0
  %1460 = vmatprep.subr.bf16.mxu0 0
  %1461 = vmatpush2.bf16.msra.mxu0 0
  %1462 = vmatprep.subr.bf16.mxu0 0
  %1463 = vmatpush2.bf16.msra.mxu0 0
  %1464 = vmatprep.subr.bf16.mxu0 0
  %1465 = vmatpush2.bf16.msra.mxu0 0
  %1466 = vmatprep.subr.bf16.mxu0 0
  %1467 = vmatpush2.bf16.msra.mxu0 0
  %1468 = vmatprep.subr.bf16.mxu0 0
  %1469 = vmatpush2.bf16.msra.mxu0 0
  %1470 = vmatprep.subr.bf16.mxu0 0
  %1471 = vmatpush2.bf16.msra.mxu0 0
  %1472 = vmatprep.mubr.bf16.mxu0 0
  %1473 = vmatmul.mubr.bf16.gmra.mxu0 %v1438
  %v1474 = vpop.f32.mrf.mxu0
  %v1475 = vadd.f32 0.0, %v1474
  %v1476 = vpop.f32.mrf.mxu0
  %v1477 = vpop.f32.mrf.mxu0
  %v1478 = vadd.f32 0.0, %v1477
  %v1479 = vpop.f32.mrf.mxu0
  %1480 = vdwg.mxu0
  %v1481 = vpack.c.bf16 %v1478, %v1475
  %1482 = vmatprep.subr.bf16.mxu0 0
  %1483 = vmatpush1.bf16.xpose.msra.mxu0 0
  %1484 = vmatprep.subr.bf16.mxu0 0
  %1485 = vmatpush1.bf16.xpose.msra.mxu0 0
  %1486 = vmatprep.subr.bf16.mxu0 0
  %1487 = vmatpush1.bf16.xpose.msra.mxu0 0
  %1488 = vmatprep.subr.bf16.mxu0 0
  %1489 = vmatpush1.bf16.xpose.msra.mxu0 0
  %1490 = vmatprep.subr.bf16.mxu0 0
  %1491 = vmatpush1.bf16.xpose.msra.mxu0 0
  %1492 = vmatprep.subr.bf16.mxu0 0
  %1493 = vmatpush1.bf16.xpose.msra.mxu0 0
  %1494 = vmatprep.subr.bf16.mxu0 0
  %1495 = vmatpush1.bf16.xpose.msra.mxu0 0
  %1496 = vmatprep.subr.bf16.mxu0 0
  %1497 = vmatpush1.bf16.xpose.msra.mxu0 %v1481
  %1498 = vmatprep.subr.bf16.mxu0 0
  %1499 = vmatpush2.bf16.xpose.msra.mxu0 0
  %1500 = vmatprep.subr.bf16.mxu0 0
  %1501 = vmatpush2.bf16.xpose.msra.mxu0 0
  %1502 = vmatprep.subr.bf16.mxu0 0
  %1503 = vmatpush2.bf16.xpose.msra.mxu0 0
  %1504 = vmatprep.subr.bf16.mxu0 0
  %1505 = vmatpush2.bf16.xpose.msra.mxu0 0
  %1506 = vmatprep.subr.bf16.mxu0 0
  %1507 = vmatpush2.bf16.xpose.msra.mxu0 0
  %1508 = vmatprep.subr.bf16.mxu0 0
  %1509 = vmatpush2.bf16.xpose.msra.mxu0 0
  %1510 = vmatprep.subr.bf16.mxu0 0
  %1511 = vmatpush2.bf16.xpose.msra.mxu0 0
  %1512 = vmatprep.subr.bf16.mxu0 0
  %1513 = vmatpush2.bf16.xpose.msra.mxu0 0
  %1514 = vmatprep.mubr.bf16.mxu0 0
  %1515 = vmatmul.mubr.bf16.gmra.mxu0 %v1481
  %v1516 = vpop.f32.mrf.mxu0
  %v1517 = vadd.f32 0.0, %v1516
  %v1518 = vpop.f32.mrf.mxu0
  %v1519 = vpop.f32.mrf.mxu0
  %v1520 = vadd.f32 0.0, %v1519
  %v1521 = vpop.f32.mrf.mxu0
  %1522 = vdwg.mxu0
  %v1523 = vpack.c.bf16 %v1520, %v1517
  %v1525 = vsel %vm121, %v1523, 0
  %1527 = vmatprep.subr.bf16.mxu0 0
  %1528 = vmatpush1.bf16.msra.mxu0 0
  %1529 = vmatprep.subr.bf16.mxu0 0
  %1530 = vmatpush1.bf16.msra.mxu0 0
  %1531 = vmatprep.subr.bf16.mxu0 0
  %1532 = vmatpush1.bf16.msra.mxu0 0
  %1533 = vmatprep.subr.bf16.mxu0 0
  %1534 = vmatpush1.bf16.msra.mxu0 0
  %1535 = vmatprep.subr.bf16.mxu0 0
  %1536 = vmatpush1.bf16.msra.mxu0 0
  %1537 = vmatprep.subr.bf16.mxu0 0
  %1538 = vmatpush1.bf16.msra.mxu0 0
  %1539 = vmatprep.subr.bf16.mxu0 0
  %1540 = vmatpush1.bf16.msra.mxu0 0
  %1541 = vmatprep.subr.bf16.mxu0 0
  %1542 = vmatpush1.bf16.msra.mxu0 %v1523
  %1543 = vmatprep.subr.bf16.mxu0 0
  %1544 = vmatpush2.bf16.msra.mxu0 0
  %1545 = vmatprep.subr.bf16.mxu0 0
  %1546 = vmatpush2.bf16.msra.mxu0 0
  %1547 = vmatprep.subr.bf16.mxu0 0
  %1548 = vmatpush2.bf16.msra.mxu0 0
  %1549 = vmatprep.subr.bf16.mxu0 0
  %1550 = vmatpush2.bf16.msra.mxu0 0
  %1551 = vmatprep.subr.bf16.mxu0 0
  %1552 = vmatpush2.bf16.msra.mxu0 0
  %1553 = vmatprep.subr.bf16.mxu0 0
  %1554 = vmatpush2.bf16.msra.mxu0 0
  %1555 = vmatprep.subr.bf16.mxu0 0
  %1556 = vmatpush2.bf16.msra.mxu0 0
  %1557 = vmatprep.subr.bf16.mxu0 0
  %1558 = vmatpush2.bf16.msra.mxu0 0
  %1559 = vmatprep.mubr.bf16.mxu0 0
  %1560 = vmatmul.mubr.bf16.gmra.mxu0 %v1525
  %v1561 = vpop.f32.mrf.mxu0
  %v1562 = vadd.f32 0.0, %v1561
  %v1563 = vpop.f32.mrf.mxu0
  %v1564 = vpop.f32.mrf.mxu0
  %v1565 = vadd.f32 0.0, %v1564
  %v1566 = vpop.f32.mrf.mxu0
  %1567 = vdwg.mxu0
  %v1568 = vmul.f32 %v1517, 1.25
  %v1569 = vmul.f32 %v1520, 1.25
  %v1570 = vsub.f32 %v166, %v1568
  %v1571 = vsub.f32 %v167, %v1569
  %v1572 = vmul.f32 %v1562, 0.375
  %v1573 = vmul.f32 %v1565, 0.375
  %v1574 = vadd.f32 %v1570, %v1572
  %v1575 = vadd.f32 %v1571, %v1573
  %v1576 = vpack.c.bf16 %v1575, %v1574
  %v1578 = vsel %vm121, %v1576, 0
  %1580 = vmatprep.subr.bf16.mxu0 0
  %1581 = vmatpush1.bf16.msra.mxu0 0
  %1582 = vmatprep.subr.bf16.mxu0 0
  %1583 = vmatpush1.bf16.msra.mxu0 0
  %1584 = vmatprep.subr.bf16.mxu0 0
  %1585 = vmatpush1.bf16.msra.mxu0 0
  %1586 = vmatprep.subr.bf16.mxu0 0
  %1587 = vmatpush1.bf16.msra.mxu0 0
  %1588 = vmatprep.subr.bf16.mxu0 0
  %1589 = vmatpush1.bf16.msra.mxu0 0
  %1590 = vmatprep.subr.bf16.mxu0 0
  %1591 = vmatpush1.bf16.msra.mxu0 0
  %1592 = vmatprep.subr.bf16.mxu0 0
  %1593 = vmatpush1.bf16.msra.mxu0 0
  %1594 = vmatprep.subr.bf16.mxu0 0
  %1595 = vmatpush1.bf16.msra.mxu0 %v1481
  %1596 = vmatprep.subr.bf16.mxu0 0
  %1597 = vmatpush2.bf16.msra.mxu0 0
  %1598 = vmatprep.subr.bf16.mxu0 0
  %1599 = vmatpush2.bf16.msra.mxu0 0
  %1600 = vmatprep.subr.bf16.mxu0 0
  %1601 = vmatpush2.bf16.msra.mxu0 0
  %1602 = vmatprep.subr.bf16.mxu0 0
  %1603 = vmatpush2.bf16.msra.mxu0 0
  %1604 = vmatprep.subr.bf16.mxu0 0
  %1605 = vmatpush2.bf16.msra.mxu0 0
  %1606 = vmatprep.subr.bf16.mxu0 0
  %1607 = vmatpush2.bf16.msra.mxu0 0
  %1608 = vmatprep.subr.bf16.mxu0 0
  %1609 = vmatpush2.bf16.msra.mxu0 0
  %1610 = vmatprep.subr.bf16.mxu0 0
  %1611 = vmatpush2.bf16.msra.mxu0 0
  %1612 = vmatprep.mubr.bf16.mxu0 0
  %1613 = vmatmul.mubr.bf16.gmra.mxu0 %v1578
  %v1614 = vpop.f32.mrf.mxu0
  %v1615 = vadd.f32 0.0, %v1614
  %v1616 = vpop.f32.mrf.mxu0
  %v1617 = vpop.f32.mrf.mxu0
  %v1618 = vadd.f32 0.0, %v1617
  %v1619 = vpop.f32.mrf.mxu0
  %1620 = vdwg.mxu0
  %v1621 = vpack.c.bf16 %v1618, %v1615
  %1622 = vmatprep.subr.bf16.mxu0 0
  %1623 = vmatpush1.bf16.xpose.msra.mxu0 0
  %1624 = vmatprep.subr.bf16.mxu0 0
  %1625 = vmatpush1.bf16.xpose.msra.mxu0 0
  %1626 = vmatprep.subr.bf16.mxu0 0
  %1627 = vmatpush1.bf16.xpose.msra.mxu0 0
  %1628 = vmatprep.subr.bf16.mxu0 0
  %1629 = vmatpush1.bf16.xpose.msra.mxu0 0
  %1630 = vmatprep.subr.bf16.mxu0 0
  %1631 = vmatpush1.bf16.xpose.msra.mxu0 0
  %1632 = vmatprep.subr.bf16.mxu0 0
  %1633 = vmatpush1.bf16.xpose.msra.mxu0 0
  %1634 = vmatprep.subr.bf16.mxu0 0
  %1635 = vmatpush1.bf16.xpose.msra.mxu0 0
  %1636 = vmatprep.subr.bf16.mxu0 0
  %1637 = vmatpush1.bf16.xpose.msra.mxu0 %v1621
  %1638 = vmatprep.subr.bf16.mxu0 0
  %1639 = vmatpush2.bf16.xpose.msra.mxu0 0
  %1640 = vmatprep.subr.bf16.mxu0 0
  %1641 = vmatpush2.bf16.xpose.msra.mxu0 0
  %1642 = vmatprep.subr.bf16.mxu0 0
  %1643 = vmatpush2.bf16.xpose.msra.mxu0 0
  %1644 = vmatprep.subr.bf16.mxu0 0
  %1645 = vmatpush2.bf16.xpose.msra.mxu0 0
  %1646 = vmatprep.subr.bf16.mxu0 0
  %1647 = vmatpush2.bf16.xpose.msra.mxu0 0
  %1648 = vmatprep.subr.bf16.mxu0 0
  %1649 = vmatpush2.bf16.xpose.msra.mxu0 0
  %1650 = vmatprep.subr.bf16.mxu0 0
  %1651 = vmatpush2.bf16.xpose.msra.mxu0 0
  %1652 = vmatprep.subr.bf16.mxu0 0
  %1653 = vmatpush2.bf16.xpose.msra.mxu0 0
  %1654 = vmatprep.mubr.bf16.mxu0 0
  %1655 = vmatmul.mubr.bf16.gmra.mxu0 %v1621
  %v1656 = vpop.f32.mrf.mxu0
  %v1657 = vadd.f32 0.0, %v1656
  %v1658 = vpop.f32.mrf.mxu0
  %v1659 = vpop.f32.mrf.mxu0
  %v1660 = vadd.f32 0.0, %v1659
  %v1661 = vpop.f32.mrf.mxu0
  %1662 = vdwg.mxu0
  %v1663 = vpack.c.bf16 %v1660, %v1657
  %v1665 = vsel %vm121, %v1663, 0
  %1667 = vmatprep.subr.bf16.mxu0 0
  %1668 = vmatpush1.bf16.msra.mxu0 0
  %1669 = vmatprep.subr.bf16.mxu0 0
  %1670 = vmatpush1.bf16.msra.mxu0 0
  %1671 = vmatprep.subr.bf16.mxu0 0
  %1672 = vmatpush1.bf16.msra.mxu0 0
  %1673 = vmatprep.subr.bf16.mxu0 0
  %1674 = vmatpush1.bf16.msra.mxu0 0
  %1675 = vmatprep.subr.bf16.mxu0 0
  %1676 = vmatpush1.bf16.msra.mxu0 0
  %1677 = vmatprep.subr.bf16.mxu0 0
  %1678 = vmatpush1.bf16.msra.mxu0 0
  %1679 = vmatprep.subr.bf16.mxu0 0
  %1680 = vmatpush1.bf16.msra.mxu0 0
  %1681 = vmatprep.subr.bf16.mxu0 0
  %1682 = vmatpush1.bf16.msra.mxu0 %v1663
  %1683 = vmatprep.subr.bf16.mxu0 0
  %1684 = vmatpush2.bf16.msra.mxu0 0
  %1685 = vmatprep.subr.bf16.mxu0 0
  %1686 = vmatpush2.bf16.msra.mxu0 0
  %1687 = vmatprep.subr.bf16.mxu0 0
  %1688 = vmatpush2.bf16.msra.mxu0 0
  %1689 = vmatprep.subr.bf16.mxu0 0
  %1690 = vmatpush2.bf16.msra.mxu0 0
  %1691 = vmatprep.subr.bf16.mxu0 0
  %1692 = vmatpush2.bf16.msra.mxu0 0
  %1693 = vmatprep.subr.bf16.mxu0 0
  %1694 = vmatpush2.bf16.msra.mxu0 0
  %1695 = vmatprep.subr.bf16.mxu0 0
  %1696 = vmatpush2.bf16.msra.mxu0 0
  %1697 = vmatprep.subr.bf16.mxu0 0
  %1698 = vmatpush2.bf16.msra.mxu0 0
  %1699 = vmatprep.mubr.bf16.mxu0 0
  %1700 = vmatmul.mubr.bf16.gmra.mxu0 %v1665
  %v1701 = vpop.f32.mrf.mxu0
  %v1702 = vadd.f32 0.0, %v1701
  %v1703 = vpop.f32.mrf.mxu0
  %v1704 = vpop.f32.mrf.mxu0
  %v1705 = vadd.f32 0.0, %v1704
  %v1706 = vpop.f32.mrf.mxu0
  %1707 = vdwg.mxu0
  %v1708 = vmul.f32 %v1657, 1.25
  %v1709 = vmul.f32 %v1660, 1.25
  %v1710 = vsub.f32 %v166, %v1708
  %v1711 = vsub.f32 %v167, %v1709
  %v1712 = vmul.f32 %v1702, 0.375
  %v1713 = vmul.f32 %v1705, 0.375
  %v1714 = vadd.f32 %v1710, %v1712
  %v1715 = vadd.f32 %v1711, %v1713
  %v1716 = vpack.c.bf16 %v1715, %v1714
  %v1718 = vsel %vm121, %v1716, 0
  %1720 = vmatprep.subr.bf16.mxu0 0
  %1721 = vmatpush1.bf16.msra.mxu0 0
  %1722 = vmatprep.subr.bf16.mxu0 0
  %1723 = vmatpush1.bf16.msra.mxu0 0
  %1724 = vmatprep.subr.bf16.mxu0 0
  %1725 = vmatpush1.bf16.msra.mxu0 0
  %1726 = vmatprep.subr.bf16.mxu0 0
  %1727 = vmatpush1.bf16.msra.mxu0 0
  %1728 = vmatprep.subr.bf16.mxu0 0
  %1729 = vmatpush1.bf16.msra.mxu0 0
  %1730 = vmatprep.subr.bf16.mxu0 0
  %1731 = vmatpush1.bf16.msra.mxu0 0
  %1732 = vmatprep.subr.bf16.mxu0 0
  %1733 = vmatpush1.bf16.msra.mxu0 0
  %1734 = vmatprep.subr.bf16.mxu0 0
  %1735 = vmatpush1.bf16.msra.mxu0 %v1621
  %1736 = vmatprep.subr.bf16.mxu0 0
  %1737 = vmatpush2.bf16.msra.mxu0 0
  %1738 = vmatprep.subr.bf16.mxu0 0
  %1739 = vmatpush2.bf16.msra.mxu0 0
  %1740 = vmatprep.subr.bf16.mxu0 0
  %1741 = vmatpush2.bf16.msra.mxu0 0
  %1742 = vmatprep.subr.bf16.mxu0 0
  %1743 = vmatpush2.bf16.msra.mxu0 0
  %1744 = vmatprep.subr.bf16.mxu0 0
  %1745 = vmatpush2.bf16.msra.mxu0 0
  %1746 = vmatprep.subr.bf16.mxu0 0
  %1747 = vmatpush2.bf16.msra.mxu0 0
  %1748 = vmatprep.subr.bf16.mxu0 0
  %1749 = vmatpush2.bf16.msra.mxu0 0
  %1750 = vmatprep.subr.bf16.mxu0 0
  %1751 = vmatpush2.bf16.msra.mxu0 0
  %1752 = vmatprep.mubr.bf16.mxu0 0
  %1753 = vmatmul.mubr.bf16.gmra.mxu0 %v1718
  %v1754 = vpop.f32.mrf.mxu0
  %v1755 = vadd.f32 0.0, %v1754
  %v1756 = vpop.f32.mrf.mxu0
  %v1757 = vpop.f32.mrf.mxu0
  %v1758 = vadd.f32 0.0, %v1757
  %v1759 = vpop.f32.mrf.mxu0
  %1760 = vdwg.mxu0
  %1761 = vmatprep.subr.mxu0 0.0
  %1762 = vmatpush1.xpose.msra.mxu0 0.0
  %1763 = vmatprep.subr.mxu0 0.0
  %1764 = vmatpush1.xpose.msra.mxu0 0.0
  %1765 = vmatprep.subr.mxu0 0.0
  %1766 = vmatpush1.xpose.msra.mxu0 0.0
  %1767 = vmatprep.subr.mxu0 0.0
  %1768 = vmatpush1.xpose.msra.mxu0 0.0
  %1769 = vmatprep.subr.mxu0 0.0
  %1770 = vmatpush1.xpose.msra.mxu0 0.0
  %1771 = vmatprep.subr.mxu0 0.0
  %1772 = vmatpush1.xpose.msra.mxu0 0.0
  %1773 = vmatprep.subr.mxu0 0.0
  %1774 = vmatpush1.xpose.msra.mxu0 0.0
  %1775 = vmatprep.subr.mxu0 0.0
  %1776 = vmatpush1.xpose.msra.mxu0 0.0
  %1777 = vmatprep.subr.mxu0 0.0
  %1778 = vmatpush1.xpose.msra.mxu0 0.0
  %1779 = vmatprep.subr.mxu0 0.0
  %1780 = vmatpush1.xpose.msra.mxu0 0.0
  %1781 = vmatprep.subr.mxu0 0.0
  %1782 = vmatpush1.xpose.msra.mxu0 0.0
  %1783 = vmatprep.subr.mxu0 0.0
  %1784 = vmatpush1.xpose.msra.mxu0 0.0
  %1785 = vmatprep.subr.mxu0 0.0
  %1786 = vmatpush1.xpose.msra.mxu0 0.0
  %1787 = vmatprep.subr.mxu0 0.0
  %1788 = vmatpush1.xpose.msra.mxu0 0.0
  %1789 = vmatprep.subr.mxu0 0.0
  %v1790 = vand.u32 %v1758, 4294901760
  %1791 = vmatpush1.xpose.msra.mxu0 %v1790
  %1792 = vmatprep.subr.mxu0 0.0
  %v1793 = vand.u32 %v1755, 4294901760
  %1794 = vmatpush1.xpose.msra.mxu0 %v1793
  %1795 = vmatprep.subr.mxu0 0.0
  %1796 = vmatpush2.xpose.msra.mxu0 0.0
  %1797 = vmatprep.subr.mxu0 0.0
  %1798 = vmatpush2.xpose.msra.mxu0 0.0
  %1799 = vmatprep.subr.mxu0 0.0
  %1800 = vmatpush2.xpose.msra.mxu0 0.0
  %1801 = vmatprep.subr.mxu0 0.0
  %1802 = vmatpush2.xpose.msra.mxu0 0.0
  %1803 = vmatprep.subr.mxu0 0.0
  %1804 = vmatpush2.xpose.msra.mxu0 0.0
  %1805 = vmatprep.subr.mxu0 0.0
  %1806 = vmatpush2.xpose.msra.mxu0 0.0
  %1807 = vmatprep.subr.mxu0 0.0
  %1808 = vmatpush2.xpose.msra.mxu0 0.0
  %1809 = vmatprep.subr.mxu0 0.0
  %1810 = vmatpush2.xpose.msra.mxu0 0.0
  %1811 = vmatprep.subr.mxu0 0.0
  %1812 = vmatpush2.xpose.msra.mxu0 0.0
  %1813 = vmatprep.subr.mxu0 0.0
  %1814 = vmatpush2.xpose.msra.mxu0 0.0
  %1815 = vmatprep.subr.mxu0 0.0
  %1816 = vmatpush2.xpose.msra.mxu0 0.0
  %1817 = vmatprep.subr.mxu0 0.0
  %1818 = vmatpush2.xpose.msra.mxu0 0.0
  %1819 = vmatprep.subr.mxu0 0.0
  %1820 = vmatpush2.xpose.msra.mxu0 0.0
  %1821 = vmatprep.subr.mxu0 0.0
  %1822 = vmatpush2.xpose.msra.mxu0 0.0
  %1823 = vmatprep.subr.mxu0 0.0
  %1824 = vmatpush2.xpose.msra.mxu0 0.0
  %1825 = vmatprep.subr.mxu0 0.0
  %1826 = vmatpush2.xpose.msra.mxu0 0.0
  %1827 = vmatprep.mubr.f32.mxu0 0.0
  %v1828 = vand.u32 %v1755, 4294901760
  %v1829 = vsub.f32 %v1755, %v1828
  %v1830 = vand.u32 %v1829, 4294901760
  %v1831 = vsub.f32 %v1829, %v1830
  %v1832 = vand.u32 %v1831, 4294901760
  %1833 = vmatmul.mubr.f32.gmra.mxu0 %v1832
  %v1834 = vpop.f32.mrf.mxu0
  %v1835 = vadd.f32 0.0, %v1834
  %v1836 = vpop.f32.mrf.mxu0
  %1837 = vmatprep.mubr.f32.mxu0 0.0
  %v1838 = vand.u32 %v1758, 4294901760
  %v1839 = vsub.f32 %v1758, %v1838
  %v1840 = vand.u32 %v1839, 4294901760
  %v1841 = vsub.f32 %v1839, %v1840
  %v1842 = vand.u32 %v1841, 4294901760
  %1843 = vmatmul.mubr.f32.gmra.mxu0 %v1842
  %v1844 = vpop.f32.mrf.mxu0
  %v1845 = vadd.f32 0.0, %v1844
  %v1846 = vpop.f32.mrf.mxu0
  %1847 = vdwg.mxu0
  %1848 = vmatprep.subr.mxu0 0.0
  %1849 = vmatpush1.xpose.msra.mxu0 0.0
  %1850 = vmatprep.subr.mxu0 0.0
  %1851 = vmatpush1.xpose.msra.mxu0 0.0
  %1852 = vmatprep.subr.mxu0 0.0
  %1853 = vmatpush1.xpose.msra.mxu0 0.0
  %1854 = vmatprep.subr.mxu0 0.0
  %1855 = vmatpush1.xpose.msra.mxu0 0.0
  %1856 = vmatprep.subr.mxu0 0.0
  %1857 = vmatpush1.xpose.msra.mxu0 0.0
  %1858 = vmatprep.subr.mxu0 0.0
  %1859 = vmatpush1.xpose.msra.mxu0 0.0
  %1860 = vmatprep.subr.mxu0 0.0
  %1861 = vmatpush1.xpose.msra.mxu0 0.0
  %1862 = vmatprep.subr.mxu0 0.0
  %1863 = vmatpush1.xpose.msra.mxu0 0.0
  %1864 = vmatprep.subr.mxu0 0.0
  %1865 = vmatpush1.xpose.msra.mxu0 0.0
  %1866 = vmatprep.subr.mxu0 0.0
  %1867 = vmatpush1.xpose.msra.mxu0 0.0
  %1868 = vmatprep.subr.mxu0 0.0
  %1869 = vmatpush1.xpose.msra.mxu0 0.0
  %1870 = vmatprep.subr.mxu0 0.0
  %1871 = vmatpush1.xpose.msra.mxu0 0.0
  %1872 = vmatprep.subr.mxu0 0.0
  %1873 = vmatpush1.xpose.msra.mxu0 0.0
  %1874 = vmatprep.subr.mxu0 0.0
  %1875 = vmatpush1.xpose.msra.mxu0 0.0
  %1876 = vmatprep.subr.mxu0 0.0
  %v1877 = vand.u32 %v1758, 4294901760
  %v1878 = vsub.f32 %v1758, %v1877
  %v1879 = vand.u32 %v1878, 4294901760
  %v1880 = vsub.f32 %v1878, %v1879
  %v1881 = vand.u32 %v1880, 4294901760
  %1882 = vmatpush1.xpose.msra.mxu0 %v1881
  %1883 = vmatprep.subr.mxu0 0.0
  %v1884 = vand.u32 %v1755, 4294901760
  %v1885 = vsub.f32 %v1755, %v1884
  %v1886 = vand.u32 %v1885, 4294901760
  %v1887 = vsub.f32 %v1885, %v1886
  %v1888 = vand.u32 %v1887, 4294901760
  %1889 = vmatpush1.xpose.msra.mxu0 %v1888
  %1890 = vmatprep.subr.mxu0 0.0
  %1891 = vmatpush2.xpose.msra.mxu0 0.0
  %1892 = vmatprep.subr.mxu0 0.0
  %1893 = vmatpush2.xpose.msra.mxu0 0.0
  %1894 = vmatprep.subr.mxu0 0.0
  %1895 = vmatpush2.xpose.msra.mxu0 0.0
  %1896 = vmatprep.subr.mxu0 0.0
  %1897 = vmatpush2.xpose.msra.mxu0 0.0
  %1898 = vmatprep.subr.mxu0 0.0
  %1899 = vmatpush2.xpose.msra.mxu0 0.0
  %1900 = vmatprep.subr.mxu0 0.0
  %1901 = vmatpush2.xpose.msra.mxu0 0.0
  %1902 = vmatprep.subr.mxu0 0.0
  %1903 = vmatpush2.xpose.msra.mxu0 0.0
  %1904 = vmatprep.subr.mxu0 0.0
  %1905 = vmatpush2.xpose.msra.mxu0 0.0
  %1906 = vmatprep.subr.mxu0 0.0
  %1907 = vmatpush2.xpose.msra.mxu0 0.0
  %1908 = vmatprep.subr.mxu0 0.0
  %1909 = vmatpush2.xpose.msra.mxu0 0.0
  %1910 = vmatprep.subr.mxu0 0.0
  %1911 = vmatpush2.xpose.msra.mxu0 0.0
  %1912 = vmatprep.subr.mxu0 0.0
  %1913 = vmatpush2.xpose.msra.mxu0 0.0
  %1914 = vmatprep.subr.mxu0 0.0
  %1915 = vmatpush2.xpose.msra.mxu0 0.0
  %1916 = vmatprep.subr.mxu0 0.0
  %1917 = vmatpush2.xpose.msra.mxu0 0.0
  %1918 = vmatprep.subr.mxu0 0.0
  %1919 = vmatpush2.xpose.msra.mxu0 0.0
  %1920 = vmatprep.subr.mxu0 0.0
  %1921 = vmatpush2.xpose.msra.mxu0 0.0
  %1922 = vmatprep.mubr.f32.mxu0 0.0
  %v1923 = vand.u32 %v1755, 4294901760
  %1924 = vmatmul.mubr.f32.gmra.mxu0 %v1923
  %v1925 = vpop.f32.mrf.mxu0
  %v1926 = vadd.f32 %v1835, %v1925
  %v1927 = vpop.f32.mrf.mxu0
  %1928 = vmatprep.mubr.f32.mxu0 0.0
  %v1929 = vand.u32 %v1758, 4294901760
  %1930 = vmatmul.mubr.f32.gmra.mxu0 %v1929
  %v1931 = vpop.f32.mrf.mxu0
  %v1932 = vadd.f32 %v1845, %v1931
  %v1933 = vpop.f32.mrf.mxu0
  %1934 = vdwg.mxu0
  %1935 = vmatprep.subr.mxu0 0.0
  %1936 = vmatpush1.xpose.msra.mxu0 0.0
  %1937 = vmatprep.subr.mxu0 0.0
  %1938 = vmatpush1.xpose.msra.mxu0 0.0
  %1939 = vmatprep.subr.mxu0 0.0
  %1940 = vmatpush1.xpose.msra.mxu0 0.0
  %1941 = vmatprep.subr.mxu0 0.0
  %1942 = vmatpush1.xpose.msra.mxu0 0.0
  %1943 = vmatprep.subr.mxu0 0.0
  %1944 = vmatpush1.xpose.msra.mxu0 0.0
  %1945 = vmatprep.subr.mxu0 0.0
  %1946 = vmatpush1.xpose.msra.mxu0 0.0
  %1947 = vmatprep.subr.mxu0 0.0
  %1948 = vmatpush1.xpose.msra.mxu0 0.0
  %1949 = vmatprep.subr.mxu0 0.0
  %1950 = vmatpush1.xpose.msra.mxu0 0.0
  %1951 = vmatprep.subr.mxu0 0.0
  %1952 = vmatpush1.xpose.msra.mxu0 0.0
  %1953 = vmatprep.subr.mxu0 0.0
  %1954 = vmatpush1.xpose.msra.mxu0 0.0
  %1955 = vmatprep.subr.mxu0 0.0
  %1956 = vmatpush1.xpose.msra.mxu0 0.0
  %1957 = vmatprep.subr.mxu0 0.0
  %1958 = vmatpush1.xpose.msra.mxu0 0.0
  %1959 = vmatprep.subr.mxu0 0.0
  %1960 = vmatpush1.xpose.msra.mxu0 0.0
  %1961 = vmatprep.subr.mxu0 0.0
  %1962 = vmatpush1.xpose.msra.mxu0 0.0
  %1963 = vmatprep.subr.mxu0 0.0
  %v1964 = vand.u32 %v1758, 4294901760
  %v1965 = vsub.f32 %v1758, %v1964
  %1966 = vmatpush1.xpose.msra.mxu0 %v1965
  %1967 = vmatprep.subr.mxu0 0.0
  %v1968 = vand.u32 %v1755, 4294901760
  %v1969 = vsub.f32 %v1755, %v1968
  %1970 = vmatpush1.xpose.msra.mxu0 %v1969
  %1971 = vmatprep.subr.mxu0 0.0
  %1972 = vmatpush2.xpose.msra.mxu0 0.0
  %1973 = vmatprep.subr.mxu0 0.0
  %1974 = vmatpush2.xpose.msra.mxu0 0.0
  %1975 = vmatprep.subr.mxu0 0.0
  %1976 = vmatpush2.xpose.msra.mxu0 0.0
  %1977 = vmatprep.subr.mxu0 0.0
  %1978 = vmatpush2.xpose.msra.mxu0 0.0
  %1979 = vmatprep.subr.mxu0 0.0
  %1980 = vmatpush2.xpose.msra.mxu0 0.0
  %1981 = vmatprep.subr.mxu0 0.0
  %1982 = vmatpush2.xpose.msra.mxu0 0.0
  %1983 = vmatprep.subr.mxu0 0.0
  %1984 = vmatpush2.xpose.msra.mxu0 0.0
  %1985 = vmatprep.subr.mxu0 0.0
  %1986 = vmatpush2.xpose.msra.mxu0 0.0
  %1987 = vmatprep.subr.mxu0 0.0
  %1988 = vmatpush2.xpose.msra.mxu0 0.0
  %1989 = vmatprep.subr.mxu0 0.0
  %1990 = vmatpush2.xpose.msra.mxu0 0.0
  %1991 = vmatprep.subr.mxu0 0.0
  %1992 = vmatpush2.xpose.msra.mxu0 0.0
  %1993 = vmatprep.subr.mxu0 0.0
  %1994 = vmatpush2.xpose.msra.mxu0 0.0
  %1995 = vmatprep.subr.mxu0 0.0
  %1996 = vmatpush2.xpose.msra.mxu0 0.0
  %1997 = vmatprep.subr.mxu0 0.0
  %1998 = vmatpush2.xpose.msra.mxu0 0.0
  %1999 = vmatprep.subr.mxu0 0.0
  %2000 = vmatpush2.xpose.msra.mxu0 0.0
  %2001 = vmatprep.subr.mxu0 0.0
  %2002 = vmatpush2.xpose.msra.mxu0 0.0
  %2003 = vmatprep.mubr.f32.mxu0 0.0
  %v2004 = vand.u32 %v1755, 4294901760
  %v2005 = vsub.f32 %v1755, %v2004
  %2006 = vmatmul.mubr.f32.gmra.mxu0 %v2005
  %v2007 = vpop.f32.mrf.mxu0
  %v2008 = vadd.f32 %v1926, %v2007
  %v2009 = vpop.f32.mrf.mxu0
  %2010 = vmatprep.mubr.f32.mxu0 0.0
  %v2011 = vand.u32 %v1758, 4294901760
  %v2012 = vsub.f32 %v1758, %v2011
  %2013 = vmatmul.mubr.f32.gmra.mxu0 %v2012
  %v2014 = vpop.f32.mrf.mxu0
  %v2015 = vadd.f32 %v1932, %v2014
  %v2016 = vpop.f32.mrf.mxu0
  %2017 = vdwg.mxu0
  %2018 = vmatprep.subr.mxu0 0.0
  %2019 = vmatpush1.xpose.msra.mxu0 0.0
  %2020 = vmatprep.subr.mxu0 0.0
  %2021 = vmatpush1.xpose.msra.mxu0 0.0
  %2022 = vmatprep.subr.mxu0 0.0
  %2023 = vmatpush1.xpose.msra.mxu0 0.0
  %2024 = vmatprep.subr.mxu0 0.0
  %2025 = vmatpush1.xpose.msra.mxu0 0.0
  %2026 = vmatprep.subr.mxu0 0.0
  %2027 = vmatpush1.xpose.msra.mxu0 0.0
  %2028 = vmatprep.subr.mxu0 0.0
  %2029 = vmatpush1.xpose.msra.mxu0 0.0
  %2030 = vmatprep.subr.mxu0 0.0
  %2031 = vmatpush1.xpose.msra.mxu0 0.0
  %2032 = vmatprep.subr.mxu0 0.0
  %2033 = vmatpush1.xpose.msra.mxu0 0.0
  %2034 = vmatprep.subr.mxu0 0.0
  %2035 = vmatpush1.xpose.msra.mxu0 0.0
  %2036 = vmatprep.subr.mxu0 0.0
  %2037 = vmatpush1.xpose.msra.mxu0 0.0
  %2038 = vmatprep.subr.mxu0 0.0
  %2039 = vmatpush1.xpose.msra.mxu0 0.0
  %2040 = vmatprep.subr.mxu0 0.0
  %2041 = vmatpush1.xpose.msra.mxu0 0.0
  %2042 = vmatprep.subr.mxu0 0.0
  %2043 = vmatpush1.xpose.msra.mxu0 0.0
  %2044 = vmatprep.subr.mxu0 0.0
  %2045 = vmatpush1.xpose.msra.mxu0 0.0
  %2046 = vmatprep.subr.mxu0 0.0
  %v2047 = vand.u32 %v1758, 4294901760
  %2048 = vmatpush1.xpose.msra.mxu0 %v2047
  %2049 = vmatprep.subr.mxu0 0.0
  %v2050 = vand.u32 %v1755, 4294901760
  %2051 = vmatpush1.xpose.msra.mxu0 %v2050
  %2052 = vmatprep.subr.mxu0 0.0
  %2053 = vmatpush2.xpose.msra.mxu0 0.0
  %2054 = vmatprep.subr.mxu0 0.0
  %2055 = vmatpush2.xpose.msra.mxu0 0.0
  %2056 = vmatprep.subr.mxu0 0.0
  %2057 = vmatpush2.xpose.msra.mxu0 0.0
  %2058 = vmatprep.subr.mxu0 0.0
  %2059 = vmatpush2.xpose.msra.mxu0 0.0
  %2060 = vmatprep.subr.mxu0 0.0
  %2061 = vmatpush2.xpose.msra.mxu0 0.0
  %2062 = vmatprep.subr.mxu0 0.0
  %2063 = vmatpush2.xpose.msra.mxu0 0.0
  %2064 = vmatprep.subr.mxu0 0.0
  %2065 = vmatpush2.xpose.msra.mxu0 0.0
  %2066 = vmatprep.subr.mxu0 0.0
  %2067 = vmatpush2.xpose.msra.mxu0 0.0
  %2068 = vmatprep.subr.mxu0 0.0
  %2069 = vmatpush2.xpose.msra.mxu0 0.0
  %2070 = vmatprep.subr.mxu0 0.0
  %2071 = vmatpush2.xpose.msra.mxu0 0.0
  %2072 = vmatprep.subr.mxu0 0.0
  %2073 = vmatpush2.xpose.msra.mxu0 0.0
  %2074 = vmatprep.subr.mxu0 0.0
  %2075 = vmatpush2.xpose.msra.mxu0 0.0
  %2076 = vmatprep.subr.mxu0 0.0
  %2077 = vmatpush2.xpose.msra.mxu0 0.0
  %2078 = vmatprep.subr.mxu0 0.0
  %2079 = vmatpush2.xpose.msra.mxu0 0.0
  %2080 = vmatprep.subr.mxu0 0.0
  %2081 = vmatpush2.xpose.msra.mxu0 0.0
  %2082 = vmatprep.subr.mxu0 0.0
  %2083 = vmatpush2.xpose.msra.mxu0 0.0
  %2084 = vmatprep.mubr.f32.mxu0 0.0
  %v2085 = vand.u32 %v1755, 4294901760
  %v2086 = vsub.f32 %v1755, %v2085
  %v2087 = vand.u32 %v2086, 4294901760
  %2088 = vmatmul.mubr.f32.gmra.mxu0 %v2087
  %v2089 = vpop.f32.mrf.mxu0
  %v2090 = vadd.f32 %v2008, %v2089
  %v2091 = vpop.f32.mrf.mxu0
  %2092 = vmatprep.mubr.f32.mxu0 0.0
  %v2093 = vand.u32 %v1758, 4294901760
  %v2094 = vsub.f32 %v1758, %v2093
  %v2095 = vand.u32 %v2094, 4294901760
  %2096 = vmatmul.mubr.f32.gmra.mxu0 %v2095
  %v2097 = vpop.f32.mrf.mxu0
  %v2098 = vadd.f32 %v2015, %v2097
  %v2099 = vpop.f32.mrf.mxu0
  %2100 = vdwg.mxu0
  %2101 = vmatprep.subr.mxu0 0.0
  %2102 = vmatpush1.xpose.msra.mxu0 0.0
  %2103 = vmatprep.subr.mxu0 0.0
  %2104 = vmatpush1.xpose.msra.mxu0 0.0
  %2105 = vmatprep.subr.mxu0 0.0
  %2106 = vmatpush1.xpose.msra.mxu0 0.0
  %2107 = vmatprep.subr.mxu0 0.0
  %2108 = vmatpush1.xpose.msra.mxu0 0.0
  %2109 = vmatprep.subr.mxu0 0.0
  %2110 = vmatpush1.xpose.msra.mxu0 0.0
  %2111 = vmatprep.subr.mxu0 0.0
  %2112 = vmatpush1.xpose.msra.mxu0 0.0
  %2113 = vmatprep.subr.mxu0 0.0
  %2114 = vmatpush1.xpose.msra.mxu0 0.0
  %2115 = vmatprep.subr.mxu0 0.0
  %2116 = vmatpush1.xpose.msra.mxu0 0.0
  %2117 = vmatprep.subr.mxu0 0.0
  %2118 = vmatpush1.xpose.msra.mxu0 0.0
  %2119 = vmatprep.subr.mxu0 0.0
  %2120 = vmatpush1.xpose.msra.mxu0 0.0
  %2121 = vmatprep.subr.mxu0 0.0
  %2122 = vmatpush1.xpose.msra.mxu0 0.0
  %2123 = vmatprep.subr.mxu0 0.0
  %2124 = vmatpush1.xpose.msra.mxu0 0.0
  %2125 = vmatprep.subr.mxu0 0.0
  %2126 = vmatpush1.xpose.msra.mxu0 0.0
  %2127 = vmatprep.subr.mxu0 0.0
  %2128 = vmatpush1.xpose.msra.mxu0 0.0
  %2129 = vmatprep.subr.mxu0 0.0
  %v2130 = vand.u32 %v1758, 4294901760
  %v2131 = vsub.f32 %v1758, %v2130
  %v2132 = vand.u32 %v2131, 4294901760
  %2133 = vmatpush1.xpose.msra.mxu0 %v2132
  %2134 = vmatprep.subr.mxu0 0.0
  %v2135 = vand.u32 %v1755, 4294901760
  %v2136 = vsub.f32 %v1755, %v2135
  %v2137 = vand.u32 %v2136, 4294901760
  %2138 = vmatpush1.xpose.msra.mxu0 %v2137
  %2139 = vmatprep.subr.mxu0 0.0
  %2140 = vmatpush2.xpose.msra.mxu0 0.0
  %2141 = vmatprep.subr.mxu0 0.0
  %2142 = vmatpush2.xpose.msra.mxu0 0.0
  %2143 = vmatprep.subr.mxu0 0.0
  %2144 = vmatpush2.xpose.msra.mxu0 0.0
  %2145 = vmatprep.subr.mxu0 0.0
  %2146 = vmatpush2.xpose.msra.mxu0 0.0
  %2147 = vmatprep.subr.mxu0 0.0
  %2148 = vmatpush2.xpose.msra.mxu0 0.0
  %2149 = vmatprep.subr.mxu0 0.0
  %2150 = vmatpush2.xpose.msra.mxu0 0.0
  %2151 = vmatprep.subr.mxu0 0.0
  %2152 = vmatpush2.xpose.msra.mxu0 0.0
  %2153 = vmatprep.subr.mxu0 0.0
  %2154 = vmatpush2.xpose.msra.mxu0 0.0
  %2155 = vmatprep.subr.mxu0 0.0
  %2156 = vmatpush2.xpose.msra.mxu0 0.0
  %2157 = vmatprep.subr.mxu0 0.0
  %2158 = vmatpush2.xpose.msra.mxu0 0.0
  %2159 = vmatprep.subr.mxu0 0.0
  %2160 = vmatpush2.xpose.msra.mxu0 0.0
  %2161 = vmatprep.subr.mxu0 0.0
  %2162 = vmatpush2.xpose.msra.mxu0 0.0
  %2163 = vmatprep.subr.mxu0 0.0
  %2164 = vmatpush2.xpose.msra.mxu0 0.0
  %2165 = vmatprep.subr.mxu0 0.0
  %2166 = vmatpush2.xpose.msra.mxu0 0.0
  %2167 = vmatprep.subr.mxu0 0.0
  %2168 = vmatpush2.xpose.msra.mxu0 0.0
  %2169 = vmatprep.subr.mxu0 0.0
  %2170 = vmatpush2.xpose.msra.mxu0 0.0
  %2171 = vmatprep.mubr.f32.mxu0 0.0
  %v2172 = vand.u32 %v1755, 4294901760
  %2173 = vmatmul.mubr.f32.gmra.mxu0 %v2172
  %v2174 = vpop.f32.mrf.mxu0
  %v2175 = vadd.f32 %v2090, %v2174
  %v2176 = vpop.f32.mrf.mxu0
  %2177 = vmatprep.mubr.f32.mxu0 0.0
  %v2178 = vand.u32 %v1758, 4294901760
  %2179 = vmatmul.mubr.f32.gmra.mxu0 %v2178
  %v2180 = vpop.f32.mrf.mxu0
  %v2181 = vadd.f32 %v2098, %v2180
  %v2182 = vpop.f32.mrf.mxu0
  %2183 = vdwg.mxu0
  %2184 = vmatprep.subr.mxu0 0.0
  %2185 = vmatpush1.xpose.msra.mxu0 0.0
  %2186 = vmatprep.subr.mxu0 0.0
  %2187 = vmatpush1.xpose.msra.mxu0 0.0
  %2188 = vmatprep.subr.mxu0 0.0
  %2189 = vmatpush1.xpose.msra.mxu0 0.0
  %2190 = vmatprep.subr.mxu0 0.0
  %2191 = vmatpush1.xpose.msra.mxu0 0.0
  %2192 = vmatprep.subr.mxu0 0.0
  %2193 = vmatpush1.xpose.msra.mxu0 0.0
  %2194 = vmatprep.subr.mxu0 0.0
  %2195 = vmatpush1.xpose.msra.mxu0 0.0
  %2196 = vmatprep.subr.mxu0 0.0
  %2197 = vmatpush1.xpose.msra.mxu0 0.0
  %2198 = vmatprep.subr.mxu0 0.0
  %2199 = vmatpush1.xpose.msra.mxu0 0.0
  %2200 = vmatprep.subr.mxu0 0.0
  %2201 = vmatpush1.xpose.msra.mxu0 0.0
  %2202 = vmatprep.subr.mxu0 0.0
  %2203 = vmatpush1.xpose.msra.mxu0 0.0
  %2204 = vmatprep.subr.mxu0 0.0
  %2205 = vmatpush1.xpose.msra.mxu0 0.0
  %2206 = vmatprep.subr.mxu0 0.0
  %2207 = vmatpush1.xpose.msra.mxu0 0.0
  %2208 = vmatprep.subr.mxu0 0.0
  %2209 = vmatpush1.xpose.msra.mxu0 0.0
  %2210 = vmatprep.subr.mxu0 0.0
  %2211 = vmatpush1.xpose.msra.mxu0 0.0
  %2212 = vmatprep.subr.mxu0 0.0
  %v2213 = vand.u32 %v1758, 4294901760
  %2214 = vmatpush1.xpose.msra.mxu0 %v2213
  %2215 = vmatprep.subr.mxu0 0.0
  %v2216 = vand.u32 %v1755, 4294901760
  %2217 = vmatpush1.xpose.msra.mxu0 %v2216
  %2218 = vmatprep.subr.mxu0 0.0
  %2219 = vmatpush2.xpose.msra.mxu0 0.0
  %2220 = vmatprep.subr.mxu0 0.0
  %2221 = vmatpush2.xpose.msra.mxu0 0.0
  %2222 = vmatprep.subr.mxu0 0.0
  %2223 = vmatpush2.xpose.msra.mxu0 0.0
  %2224 = vmatprep.subr.mxu0 0.0
  %2225 = vmatpush2.xpose.msra.mxu0 0.0
  %2226 = vmatprep.subr.mxu0 0.0
  %2227 = vmatpush2.xpose.msra.mxu0 0.0
  %2228 = vmatprep.subr.mxu0 0.0
  %2229 = vmatpush2.xpose.msra.mxu0 0.0
  %2230 = vmatprep.subr.mxu0 0.0
  %2231 = vmatpush2.xpose.msra.mxu0 0.0
  %2232 = vmatprep.subr.mxu0 0.0
  %2233 = vmatpush2.xpose.msra.mxu0 0.0
  %2234 = vmatprep.subr.mxu0 0.0
  %2235 = vmatpush2.xpose.msra.mxu0 0.0
  %2236 = vmatprep.subr.mxu0 0.0
  %2237 = vmatpush2.xpose.msra.mxu0 0.0
  %2238 = vmatprep.subr.mxu0 0.0
  %2239 = vmatpush2.xpose.msra.mxu0 0.0
  %2240 = vmatprep.subr.mxu0 0.0
  %2241 = vmatpush2.xpose.msra.mxu0 0.0
  %2242 = vmatprep.subr.mxu0 0.0
  %2243 = vmatpush2.xpose.msra.mxu0 0.0
  %2244 = vmatprep.subr.mxu0 0.0
  %2245 = vmatpush2.xpose.msra.mxu0 0.0
  %2246 = vmatprep.subr.mxu0 0.0
  %2247 = vmatpush2.xpose.msra.mxu0 0.0
  %2248 = vmatprep.subr.mxu0 0.0
  %2249 = vmatpush2.xpose.msra.mxu0 0.0
  %2250 = vmatprep.mubr.f32.mxu0 0.0
  %v2251 = vand.u32 %v1755, 4294901760
  %2252 = vmatmul.mubr.f32.gmra.mxu0 %v2251
  %v2253 = vpop.f32.mrf.mxu0
  %v2254 = vadd.f32 %v2175, %v2253
  %v2255 = vpop.f32.mrf.mxu0
  %2256 = vmatprep.mubr.f32.mxu0 0.0
  %v2257 = vand.u32 %v1758, 4294901760
  %2258 = vmatmul.mubr.f32.gmra.mxu0 %v2257
  %v2259 = vpop.f32.mrf.mxu0
  %v2260 = vadd.f32 %v2181, %v2259
  %v2261 = vpop.f32.mrf.mxu0
  %2262 = vdwg.mxu0
  %v2263 = vmul.f32 %v76, 1.5
  %v2264 = vmul.f32 %v77, 1.5
  %v2265 = vmul.f32 %v2254, 0.5
  %v2266 = vmul.f32 %v2260, 0.5
  %v2267 = vsub.f32 %v2263, %v2265
  %v2268 = vsub.f32 %v2264, %v2266
  %v2270 = vsel %vm121, %v2267, 0
  %v2273 = vsel %vm121, %v2268, 0
  %2275 = vmatprep.subr.mxu0 0.0
  %2276 = vmatpush1.msra.mxu0 0.0
  %2277 = vmatprep.subr.mxu0 0.0
  %2278 = vmatpush1.msra.mxu0 0.0
  %2279 = vmatprep.subr.mxu0 0.0
  %2280 = vmatpush1.msra.mxu0 0.0
  %2281 = vmatprep.subr.mxu0 0.0
  %2282 = vmatpush1.msra.mxu0 0.0
  %2283 = vmatprep.subr.mxu0 0.0
  %2284 = vmatpush1.msra.mxu0 0.0
  %2285 = vmatprep.subr.mxu0 0.0
  %2286 = vmatpush1.msra.mxu0 0.0
  %2287 = vmatprep.subr.mxu0 0.0
  %2288 = vmatpush1.msra.mxu0 0.0
  %2289 = vmatprep.subr.mxu0 0.0
  %2290 = vmatpush1.msra.mxu0 0.0
  %2291 = vmatprep.subr.mxu0 0.0
  %2292 = vmatpush1.msra.mxu0 0.0
  %2293 = vmatprep.subr.mxu0 0.0
  %2294 = vmatpush1.msra.mxu0 0.0
  %2295 = vmatprep.subr.mxu0 0.0
  %2296 = vmatpush1.msra.mxu0 0.0
  %2297 = vmatprep.subr.mxu0 0.0
  %2298 = vmatpush1.msra.mxu0 0.0
  %2299 = vmatprep.subr.mxu0 0.0
  %2300 = vmatpush1.msra.mxu0 0.0
  %2301 = vmatprep.subr.mxu0 0.0
  %2302 = vmatpush1.msra.mxu0 0.0
  %2303 = vmatprep.subr.mxu0 0.0
  %v2304 = vand.u32 %v1758, 4294901760
  %2305 = vmatpush1.msra.mxu0 %v2304
  %2306 = vmatprep.subr.mxu0 0.0
  %v2307 = vand.u32 %v1755, 4294901760
  %2308 = vmatpush1.msra.mxu0 %v2307
  %2309 = vmatprep.subr.mxu0 0.0
  %2310 = vmatpush2.msra.mxu0 0.0
  %2311 = vmatprep.subr.mxu0 0.0
  %2312 = vmatpush2.msra.mxu0 0.0
  %2313 = vmatprep.subr.mxu0 0.0
  %2314 = vmatpush2.msra.mxu0 0.0
  %2315 = vmatprep.subr.mxu0 0.0
  %2316 = vmatpush2.msra.mxu0 0.0
  %2317 = vmatprep.subr.mxu0 0.0
  %2318 = vmatpush2.msra.mxu0 0.0
  %2319 = vmatprep.subr.mxu0 0.0
  %2320 = vmatpush2.msra.mxu0 0.0
  %2321 = vmatprep.subr.mxu0 0.0
  %2322 = vmatpush2.msra.mxu0 0.0
  %2323 = vmatprep.subr.mxu0 0.0
  %2324 = vmatpush2.msra.mxu0 0.0
  %2325 = vmatprep.subr.mxu0 0.0
  %2326 = vmatpush2.msra.mxu0 0.0
  %2327 = vmatprep.subr.mxu0 0.0
  %2328 = vmatpush2.msra.mxu0 0.0
  %2329 = vmatprep.subr.mxu0 0.0
  %2330 = vmatpush2.msra.mxu0 0.0
  %2331 = vmatprep.subr.mxu0 0.0
  %2332 = vmatpush2.msra.mxu0 0.0
  %2333 = vmatprep.subr.mxu0 0.0
  %2334 = vmatpush2.msra.mxu0 0.0
  %2335 = vmatprep.subr.mxu0 0.0
  %2336 = vmatpush2.msra.mxu0 0.0
  %2337 = vmatprep.subr.mxu0 0.0
  %2338 = vmatpush2.msra.mxu0 0.0
  %2339 = vmatprep.subr.mxu0 0.0
  %2340 = vmatpush2.msra.mxu0 0.0
  %2341 = vmatprep.mubr.f32.mxu0 0.0
  %v2342 = vand.u32 %v2270, 4294901760
  %v2343 = vsub.f32 %v2270, %v2342
  %v2344 = vand.u32 %v2343, 4294901760
  %v2345 = vsub.f32 %v2343, %v2344
  %v2346 = vand.u32 %v2345, 4294901760
  %2347 = vmatmul.mubr.f32.gmra.mxu0 %v2346
  %v2348 = vpop.f32.mrf.mxu0
  %v2349 = vadd.f32 0.0, %v2348
  %v2350 = vpop.f32.mrf.mxu0
  %2351 = vmatprep.mubr.f32.mxu0 0.0
  %v2352 = vand.u32 %v2273, 4294901760
  %v2353 = vsub.f32 %v2273, %v2352
  %v2354 = vand.u32 %v2353, 4294901760
  %v2355 = vsub.f32 %v2353, %v2354
  %v2356 = vand.u32 %v2355, 4294901760
  %2357 = vmatmul.mubr.f32.gmra.mxu0 %v2356
  %v2358 = vpop.f32.mrf.mxu0
  %v2359 = vadd.f32 0.0, %v2358
  %v2360 = vpop.f32.mrf.mxu0
  %2361 = vdwg.mxu0
  %2362 = vmatprep.subr.mxu0 0.0
  %2363 = vmatpush1.msra.mxu0 0.0
  %2364 = vmatprep.subr.mxu0 0.0
  %2365 = vmatpush1.msra.mxu0 0.0
  %2366 = vmatprep.subr.mxu0 0.0
  %2367 = vmatpush1.msra.mxu0 0.0
  %2368 = vmatprep.subr.mxu0 0.0
  %2369 = vmatpush1.msra.mxu0 0.0
  %2370 = vmatprep.subr.mxu0 0.0
  %2371 = vmatpush1.msra.mxu0 0.0
  %2372 = vmatprep.subr.mxu0 0.0
  %2373 = vmatpush1.msra.mxu0 0.0
  %2374 = vmatprep.subr.mxu0 0.0
  %2375 = vmatpush1.msra.mxu0 0.0
  %2376 = vmatprep.subr.mxu0 0.0
  %2377 = vmatpush1.msra.mxu0 0.0
  %2378 = vmatprep.subr.mxu0 0.0
  %2379 = vmatpush1.msra.mxu0 0.0
  %2380 = vmatprep.subr.mxu0 0.0
  %2381 = vmatpush1.msra.mxu0 0.0
  %2382 = vmatprep.subr.mxu0 0.0
  %2383 = vmatpush1.msra.mxu0 0.0
  %2384 = vmatprep.subr.mxu0 0.0
  %2385 = vmatpush1.msra.mxu0 0.0
  %2386 = vmatprep.subr.mxu0 0.0
  %2387 = vmatpush1.msra.mxu0 0.0
  %2388 = vmatprep.subr.mxu0 0.0
  %2389 = vmatpush1.msra.mxu0 0.0
  %2390 = vmatprep.subr.mxu0 0.0
  %v2391 = vand.u32 %v1758, 4294901760
  %v2392 = vsub.f32 %v1758, %v2391
  %v2393 = vand.u32 %v2392, 4294901760
  %v2394 = vsub.f32 %v2392, %v2393
  %v2395 = vand.u32 %v2394, 4294901760
  %2396 = vmatpush1.msra.mxu0 %v2395
  %2397 = vmatprep.subr.mxu0 0.0
  %v2398 = vand.u32 %v1755, 4294901760
  %v2399 = vsub.f32 %v1755, %v2398
  %v2400 = vand.u32 %v2399, 4294901760
  %v2401 = vsub.f32 %v2399, %v2400
  %v2402 = vand.u32 %v2401, 4294901760
  %2403 = vmatpush1.msra.mxu0 %v2402
  %2404 = vmatprep.subr.mxu0 0.0
  %2405 = vmatpush2.msra.mxu0 0.0
  %2406 = vmatprep.subr.mxu0 0.0
  %2407 = vmatpush2.msra.mxu0 0.0
  %2408 = vmatprep.subr.mxu0 0.0
  %2409 = vmatpush2.msra.mxu0 0.0
  %2410 = vmatprep.subr.mxu0 0.0
  %2411 = vmatpush2.msra.mxu0 0.0
  %2412 = vmatprep.subr.mxu0 0.0
  %2413 = vmatpush2.msra.mxu0 0.0
  %2414 = vmatprep.subr.mxu0 0.0
  %2415 = vmatpush2.msra.mxu0 0.0
  %2416 = vmatprep.subr.mxu0 0.0
  %2417 = vmatpush2.msra.mxu0 0.0
  %2418 = vmatprep.subr.mxu0 0.0
  %2419 = vmatpush2.msra.mxu0 0.0
  %2420 = vmatprep.subr.mxu0 0.0
  %2421 = vmatpush2.msra.mxu0 0.0
  %2422 = vmatprep.subr.mxu0 0.0
  %2423 = vmatpush2.msra.mxu0 0.0
  %2424 = vmatprep.subr.mxu0 0.0
  %2425 = vmatpush2.msra.mxu0 0.0
  %2426 = vmatprep.subr.mxu0 0.0
  %2427 = vmatpush2.msra.mxu0 0.0
  %2428 = vmatprep.subr.mxu0 0.0
  %2429 = vmatpush2.msra.mxu0 0.0
  %2430 = vmatprep.subr.mxu0 0.0
  %2431 = vmatpush2.msra.mxu0 0.0
  %2432 = vmatprep.subr.mxu0 0.0
  %2433 = vmatpush2.msra.mxu0 0.0
  %2434 = vmatprep.subr.mxu0 0.0
  %2435 = vmatpush2.msra.mxu0 0.0
  %2436 = vmatprep.mubr.f32.mxu0 0.0
  %v2437 = vand.u32 %v2270, 4294901760
  %2438 = vmatmul.mubr.f32.gmra.mxu0 %v2437
  %v2439 = vpop.f32.mrf.mxu0
  %v2440 = vadd.f32 %v2349, %v2439
  %v2441 = vpop.f32.mrf.mxu0
  %2442 = vmatprep.mubr.f32.mxu0 0.0
  %v2443 = vand.u32 %v2273, 4294901760
  %2444 = vmatmul.mubr.f32.gmra.mxu0 %v2443
  %v2445 = vpop.f32.mrf.mxu0
  %v2446 = vadd.f32 %v2359, %v2445
  %v2447 = vpop.f32.mrf.mxu0
  %2448 = vdwg.mxu0
  %2449 = vmatprep.subr.mxu0 0.0
  %2450 = vmatpush1.msra.mxu0 0.0
  %2451 = vmatprep.subr.mxu0 0.0
  %2452 = vmatpush1.msra.mxu0 0.0
  %2453 = vmatprep.subr.mxu0 0.0
  %2454 = vmatpush1.msra.mxu0 0.0
  %2455 = vmatprep.subr.mxu0 0.0
  %2456 = vmatpush1.msra.mxu0 0.0
  %2457 = vmatprep.subr.mxu0 0.0
  %2458 = vmatpush1.msra.mxu0 0.0
  %2459 = vmatprep.subr.mxu0 0.0
  %2460 = vmatpush1.msra.mxu0 0.0
  %2461 = vmatprep.subr.mxu0 0.0
  %2462 = vmatpush1.msra.mxu0 0.0
  %2463 = vmatprep.subr.mxu0 0.0
  %2464 = vmatpush1.msra.mxu0 0.0
  %2465 = vmatprep.subr.mxu0 0.0
  %2466 = vmatpush1.msra.mxu0 0.0
  %2467 = vmatprep.subr.mxu0 0.0
  %2468 = vmatpush1.msra.mxu0 0.0
  %2469 = vmatprep.subr.mxu0 0.0
  %2470 = vmatpush1.msra.mxu0 0.0
  %2471 = vmatprep.subr.mxu0 0.0
  %2472 = vmatpush1.msra.mxu0 0.0
  %2473 = vmatprep.subr.mxu0 0.0
  %2474 = vmatpush1.msra.mxu0 0.0
  %2475 = vmatprep.subr.mxu0 0.0
  %2476 = vmatpush1.msra.mxu0 0.0
  %2477 = vmatprep.subr.mxu0 0.0
  %v2478 = vand.u32 %v1758, 4294901760
  %v2479 = vsub.f32 %v1758, %v2478
  %2480 = vmatpush1.msra.mxu0 %v2479
  %2481 = vmatprep.subr.mxu0 0.0
  %v2482 = vand.u32 %v1755, 4294901760
  %v2483 = vsub.f32 %v1755, %v2482
  %2484 = vmatpush1.msra.mxu0 %v2483
  %2485 = vmatprep.subr.mxu0 0.0
  %2486 = vmatpush2.msra.mxu0 0.0
  %2487 = vmatprep.subr.mxu0 0.0
  %2488 = vmatpush2.msra.mxu0 0.0
  %2489 = vmatprep.subr.mxu0 0.0
  %2490 = vmatpush2.msra.mxu0 0.0
  %2491 = vmatprep.subr.mxu0 0.0
  %2492 = vmatpush2.msra.mxu0 0.0
  %2493 = vmatprep.subr.mxu0 0.0
  %2494 = vmatpush2.msra.mxu0 0.0
  %2495 = vmatprep.subr.mxu0 0.0
  %2496 = vmatpush2.msra.mxu0 0.0
  %2497 = vmatprep.subr.mxu0 0.0
  %2498 = vmatpush2.msra.mxu0 0.0
  %2499 = vmatprep.subr.mxu0 0.0
  %2500 = vmatpush2.msra.mxu0 0.0
  %2501 = vmatprep.subr.mxu0 0.0
  %2502 = vmatpush2.msra.mxu0 0.0
  %2503 = vmatprep.subr.mxu0 0.0
  %2504 = vmatpush2.msra.mxu0 0.0
  %2505 = vmatprep.subr.mxu0 0.0
  %2506 = vmatpush2.msra.mxu0 0.0
  %2507 = vmatprep.subr.mxu0 0.0
  %2508 = vmatpush2.msra.mxu0 0.0
  %2509 = vmatprep.subr.mxu0 0.0
  %2510 = vmatpush2.msra.mxu0 0.0
  %2511 = vmatprep.subr.mxu0 0.0
  %2512 = vmatpush2.msra.mxu0 0.0
  %2513 = vmatprep.subr.mxu0 0.0
  %2514 = vmatpush2.msra.mxu0 0.0
  %2515 = vmatprep.subr.mxu0 0.0
  %2516 = vmatpush2.msra.mxu0 0.0
  %2517 = vmatprep.mubr.f32.mxu0 0.0
  %v2518 = vand.u32 %v2270, 4294901760
  %v2519 = vsub.f32 %v2270, %v2518
  %2520 = vmatmul.mubr.f32.gmra.mxu0 %v2519
  %v2521 = vpop.f32.mrf.mxu0
  %v2522 = vadd.f32 %v2440, %v2521
  %v2523 = vpop.f32.mrf.mxu0
  %2524 = vmatprep.mubr.f32.mxu0 0.0
  %v2525 = vand.u32 %v2273, 4294901760
  %v2526 = vsub.f32 %v2273, %v2525
  %2527 = vmatmul.mubr.f32.gmra.mxu0 %v2526
  %v2528 = vpop.f32.mrf.mxu0
  %v2529 = vadd.f32 %v2446, %v2528
  %v2530 = vpop.f32.mrf.mxu0
  %2531 = vdwg.mxu0
  %2532 = vmatprep.subr.mxu0 0.0
  %2533 = vmatpush1.msra.mxu0 0.0
  %2534 = vmatprep.subr.mxu0 0.0
  %2535 = vmatpush1.msra.mxu0 0.0
  %2536 = vmatprep.subr.mxu0 0.0
  %2537 = vmatpush1.msra.mxu0 0.0
  %2538 = vmatprep.subr.mxu0 0.0
  %2539 = vmatpush1.msra.mxu0 0.0
  %2540 = vmatprep.subr.mxu0 0.0
  %2541 = vmatpush1.msra.mxu0 0.0
  %2542 = vmatprep.subr.mxu0 0.0
  %2543 = vmatpush1.msra.mxu0 0.0
  %2544 = vmatprep.subr.mxu0 0.0
  %2545 = vmatpush1.msra.mxu0 0.0
  %2546 = vmatprep.subr.mxu0 0.0
  %2547 = vmatpush1.msra.mxu0 0.0
  %2548 = vmatprep.subr.mxu0 0.0
  %2549 = vmatpush1.msra.mxu0 0.0
  %2550 = vmatprep.subr.mxu0 0.0
  %2551 = vmatpush1.msra.mxu0 0.0
  %2552 = vmatprep.subr.mxu0 0.0
  %2553 = vmatpush1.msra.mxu0 0.0
  %2554 = vmatprep.subr.mxu0 0.0
  %2555 = vmatpush1.msra.mxu0 0.0
  %2556 = vmatprep.subr.mxu0 0.0
  %2557 = vmatpush1.msra.mxu0 0.0
  %2558 = vmatprep.subr.mxu0 0.0
  %2559 = vmatpush1.msra.mxu0 0.0
  %2560 = vmatprep.subr.mxu0 0.0
  %v2561 = vand.u32 %v1758, 4294901760
  %2562 = vmatpush1.msra.mxu0 %v2561
  %2563 = vmatprep.subr.mxu0 0.0
  %v2564 = vand.u32 %v1755, 4294901760
  %2565 = vmatpush1.msra.mxu0 %v2564
  %2566 = vmatprep.subr.mxu0 0.0
  %2567 = vmatpush2.msra.mxu0 0.0
  %2568 = vmatprep.subr.mxu0 0.0
  %2569 = vmatpush2.msra.mxu0 0.0
  %2570 = vmatprep.subr.mxu0 0.0
  %2571 = vmatpush2.msra.mxu0 0.0
  %2572 = vmatprep.subr.mxu0 0.0
  %2573 = vmatpush2.msra.mxu0 0.0
  %2574 = vmatprep.subr.mxu0 0.0
  %2575 = vmatpush2.msra.mxu0 0.0
  %2576 = vmatprep.subr.mxu0 0.0
  %2577 = vmatpush2.msra.mxu0 0.0
  %2578 = vmatprep.subr.mxu0 0.0
  %2579 = vmatpush2.msra.mxu0 0.0
  %2580 = vmatprep.subr.mxu0 0.0
  %2581 = vmatpush2.msra.mxu0 0.0
  %2582 = vmatprep.subr.mxu0 0.0
  %2583 = vmatpush2.msra.mxu0 0.0
  %2584 = vmatprep.subr.mxu0 0.0
  %2585 = vmatpush2.msra.mxu0 0.0
  %2586 = vmatprep.subr.mxu0 0.0
  %2587 = vmatpush2.msra.mxu0 0.0
  %2588 = vmatprep.subr.mxu0 0.0
  %2589 = vmatpush2.msra.mxu0 0.0
  %2590 = vmatprep.subr.mxu0 0.0
  %2591 = vmatpush2.msra.mxu0 0.0
  %2592 = vmatprep.subr.mxu0 0.0
  %2593 = vmatpush2.msra.mxu0 0.0
  %2594 = vmatprep.subr.mxu0 0.0
  %2595 = vmatpush2.msra.mxu0 0.0
  %2596 = vmatprep.subr.mxu0 0.0
  %2597 = vmatpush2.msra.mxu0 0.0
  %2598 = vmatprep.mubr.f32.mxu0 0.0
  %v2599 = vand.u32 %v2270, 4294901760
  %v2600 = vsub.f32 %v2270, %v2599
  %v2601 = vand.u32 %v2600, 4294901760
  %2602 = vmatmul.mubr.f32.gmra.mxu0 %v2601
  %v2603 = vpop.f32.mrf.mxu0
  %v2604 = vadd.f32 %v2522, %v2603
  %v2605 = vpop.f32.mrf.mxu0
  %2606 = vmatprep.mubr.f32.mxu0 0.0
  %v2607 = vand.u32 %v2273, 4294901760
  %v2608 = vsub.f32 %v2273, %v2607
  %v2609 = vand.u32 %v2608, 4294901760
  %2610 = vmatmul.mubr.f32.gmra.mxu0 %v2609
  %v2611 = vpop.f32.mrf.mxu0
  %v2612 = vadd.f32 %v2529, %v2611
  %v2613 = vpop.f32.mrf.mxu0
  %2614 = vdwg.mxu0
  %2615 = vmatprep.subr.mxu0 0.0
  %2616 = vmatpush1.msra.mxu0 0.0
  %2617 = vmatprep.subr.mxu0 0.0
  %2618 = vmatpush1.msra.mxu0 0.0
  %2619 = vmatprep.subr.mxu0 0.0
  %2620 = vmatpush1.msra.mxu0 0.0
  %2621 = vmatprep.subr.mxu0 0.0
  %2622 = vmatpush1.msra.mxu0 0.0
  %2623 = vmatprep.subr.mxu0 0.0
  %2624 = vmatpush1.msra.mxu0 0.0
  %2625 = vmatprep.subr.mxu0 0.0
  %2626 = vmatpush1.msra.mxu0 0.0
  %2627 = vmatprep.subr.mxu0 0.0
  %2628 = vmatpush1.msra.mxu0 0.0
  %2629 = vmatprep.subr.mxu0 0.0
  %2630 = vmatpush1.msra.mxu0 0.0
  %2631 = vmatprep.subr.mxu0 0.0
  %2632 = vmatpush1.msra.mxu0 0.0
  %2633 = vmatprep.subr.mxu0 0.0
  %2634 = vmatpush1.msra.mxu0 0.0
  %2635 = vmatprep.subr.mxu0 0.0
  %2636 = vmatpush1.msra.mxu0 0.0
  %2637 = vmatprep.subr.mxu0 0.0
  %2638 = vmatpush1.msra.mxu0 0.0
  %2639 = vmatprep.subr.mxu0 0.0
  %2640 = vmatpush1.msra.mxu0 0.0
  %2641 = vmatprep.subr.mxu0 0.0
  %2642 = vmatpush1.msra.mxu0 0.0
  %2643 = vmatprep.subr.mxu0 0.0
  %v2644 = vand.u32 %v1758, 4294901760
  %v2645 = vsub.f32 %v1758, %v2644
  %v2646 = vand.u32 %v2645, 4294901760
  %2647 = vmatpush1.msra.mxu0 %v2646
  %2648 = vmatprep.subr.mxu0 0.0
  %v2649 = vand.u32 %v1755, 4294901760
  %v2650 = vsub.f32 %v1755, %v2649
  %v2651 = vand.u32 %v2650, 4294901760
  %2652 = vmatpush1.msra.mxu0 %v2651
  %2653 = vmatprep.subr.mxu0 0.0
  %2654 = vmatpush2.msra.mxu0 0.0
  %2655 = vmatprep.subr.mxu0 0.0
  %2656 = vmatpush2.msra.mxu0 0.0
  %2657 = vmatprep.subr.mxu0 0.0
  %2658 = vmatpush2.msra.mxu0 0.0
  %2659 = vmatprep.subr.mxu0 0.0
  %2660 = vmatpush2.msra.mxu0 0.0
  %2661 = vmatprep.subr.mxu0 0.0
  %2662 = vmatpush2.msra.mxu0 0.0
  %2663 = vmatprep.subr.mxu0 0.0
  %2664 = vmatpush2.msra.mxu0 0.0
  %2665 = vmatprep.subr.mxu0 0.0
  %2666 = vmatpush2.msra.mxu0 0.0
  %2667 = vmatprep.subr.mxu0 0.0
  %2668 = vmatpush2.msra.mxu0 0.0
  %2669 = vmatprep.subr.mxu0 0.0
  %2670 = vmatpush2.msra.mxu0 0.0
  %2671 = vmatprep.subr.mxu0 0.0
  %2672 = vmatpush2.msra.mxu0 0.0
  %2673 = vmatprep.subr.mxu0 0.0
  %2674 = vmatpush2.msra.mxu0 0.0
  %2675 = vmatprep.subr.mxu0 0.0
  %2676 = vmatpush2.msra.mxu0 0.0
  %2677 = vmatprep.subr.mxu0 0.0
  %2678 = vmatpush2.msra.mxu0 0.0
  %2679 = vmatprep.subr.mxu0 0.0
  %2680 = vmatpush2.msra.mxu0 0.0
  %2681 = vmatprep.subr.mxu0 0.0
  %2682 = vmatpush2.msra.mxu0 0.0
  %2683 = vmatprep.subr.mxu0 0.0
  %2684 = vmatpush2.msra.mxu0 0.0
  %2685 = vmatprep.mubr.f32.mxu0 0.0
  %v2686 = vand.u32 %v2270, 4294901760
  %2687 = vmatmul.mubr.f32.gmra.mxu0 %v2686
  %v2688 = vpop.f32.mrf.mxu0
  %v2689 = vadd.f32 %v2604, %v2688
  %v2690 = vpop.f32.mrf.mxu0
  %2691 = vmatprep.mubr.f32.mxu0 0.0
  %v2692 = vand.u32 %v2273, 4294901760
  %2693 = vmatmul.mubr.f32.gmra.mxu0 %v2692
  %v2694 = vpop.f32.mrf.mxu0
  %v2695 = vadd.f32 %v2612, %v2694
  %v2696 = vpop.f32.mrf.mxu0
  %2697 = vdwg.mxu0
  %2698 = vmatprep.subr.mxu0 0.0
  %2699 = vmatpush1.msra.mxu0 0.0
  %2700 = vmatprep.subr.mxu0 0.0
  %2701 = vmatpush1.msra.mxu0 0.0
  %2702 = vmatprep.subr.mxu0 0.0
  %2703 = vmatpush1.msra.mxu0 0.0
  %2704 = vmatprep.subr.mxu0 0.0
  %2705 = vmatpush1.msra.mxu0 0.0
  %2706 = vmatprep.subr.mxu0 0.0
  %2707 = vmatpush1.msra.mxu0 0.0
  %2708 = vmatprep.subr.mxu0 0.0
  %2709 = vmatpush1.msra.mxu0 0.0
  %2710 = vmatprep.subr.mxu0 0.0
  %2711 = vmatpush1.msra.mxu0 0.0
  %2712 = vmatprep.subr.mxu0 0.0
  %2713 = vmatpush1.msra.mxu0 0.0
  %2714 = vmatprep.subr.mxu0 0.0
  %2715 = vmatpush1.msra.mxu0 0.0
  %2716 = vmatprep.subr.mxu0 0.0
  %2717 = vmatpush1.msra.mxu0 0.0
  %2718 = vmatprep.subr.mxu0 0.0
  %2719 = vmatpush1.msra.mxu0 0.0
  %2720 = vmatprep.subr.mxu0 0.0
  %2721 = vmatpush1.msra.mxu0 0.0
  %2722 = vmatprep.subr.mxu0 0.0
  %2723 = vmatpush1.msra.mxu0 0.0
  %2724 = vmatprep.subr.mxu0 0.0
  %2725 = vmatpush1.msra.mxu0 0.0
  %2726 = vmatprep.subr.mxu0 0.0
  %v2727 = vand.u32 %v1758, 4294901760
  %2728 = vmatpush1.msra.mxu0 %v2727
  %2729 = vmatprep.subr.mxu0 0.0
  %v2730 = vand.u32 %v1755, 4294901760
  %2731 = vmatpush1.msra.mxu0 %v2730
  %2732 = vmatprep.subr.mxu0 0.0
  %2733 = vmatpush2.msra.mxu0 0.0
  %2734 = vmatprep.subr.mxu0 0.0
  %2735 = vmatpush2.msra.mxu0 0.0
  %2736 = vmatprep.subr.mxu0 0.0
  %2737 = vmatpush2.msra.mxu0 0.0
  %2738 = vmatprep.subr.mxu0 0.0
  %2739 = vmatpush2.msra.mxu0 0.0
  %2740 = vmatprep.subr.mxu0 0.0
  %2741 = vmatpush2.msra.mxu0 0.0
  %2742 = vmatprep.subr.mxu0 0.0
  %2743 = vmatpush2.msra.mxu0 0.0
  %2744 = vmatprep.subr.mxu0 0.0
  %2745 = vmatpush2.msra.mxu0 0.0
  %2746 = vmatprep.subr.mxu0 0.0
  %2747 = vmatpush2.msra.mxu0 0.0
  %2748 = vmatprep.subr.mxu0 0.0
  %2749 = vmatpush2.msra.mxu0 0.0
  %2750 = vmatprep.subr.mxu0 0.0
  %2751 = vmatpush2.msra.mxu0 0.0
  %2752 = vmatprep.subr.mxu0 0.0
  %2753 = vmatpush2.msra.mxu0 0.0
  %2754 = vmatprep.subr.mxu0 0.0
  %2755 = vmatpush2.msra.mxu0 0.0
  %2756 = vmatprep.subr.mxu0 0.0
  %2757 = vmatpush2.msra.mxu0 0.0
  %2758 = vmatprep.subr.mxu0 0.0
  %2759 = vmatpush2.msra.mxu0 0.0
  %2760 = vmatprep.subr.mxu0 0.0
  %2761 = vmatpush2.msra.mxu0 0.0
  %2762 = vmatprep.subr.mxu0 0.0
  %2763 = vmatpush2.msra.mxu0 0.0
  %2764 = vmatprep.mubr.f32.mxu0 0.0
  %v2765 = vand.u32 %v2270, 4294901760
  %2766 = vmatmul.mubr.f32.gmra.mxu0 %v2765
  %v2767 = vpop.f32.mrf.mxu0
  %v2768 = vadd.f32 %v2689, %v2767
  %v2769 = vpop.f32.mrf.mxu0
  %2770 = vmatprep.mubr.f32.mxu0 0.0
  %v2771 = vand.u32 %v2273, 4294901760
  %2772 = vmatmul.mubr.f32.gmra.mxu0 %v2771
  %v2773 = vpop.f32.mrf.mxu0
  %v2774 = vadd.f32 %v2695, %v2773
  %v2775 = vpop.f32.mrf.mxu0
  %2776 = vdwg.mxu0
  %2777 = vmatprep.subr.mxu0 0.0
  %2778 = vmatpush1.xpose.msra.mxu0 0.0
  %2779 = vmatprep.subr.mxu0 0.0
  %2780 = vmatpush1.xpose.msra.mxu0 0.0
  %2781 = vmatprep.subr.mxu0 0.0
  %2782 = vmatpush1.xpose.msra.mxu0 0.0
  %2783 = vmatprep.subr.mxu0 0.0
  %2784 = vmatpush1.xpose.msra.mxu0 0.0
  %2785 = vmatprep.subr.mxu0 0.0
  %2786 = vmatpush1.xpose.msra.mxu0 0.0
  %2787 = vmatprep.subr.mxu0 0.0
  %2788 = vmatpush1.xpose.msra.mxu0 0.0
  %2789 = vmatprep.subr.mxu0 0.0
  %2790 = vmatpush1.xpose.msra.mxu0 0.0
  %2791 = vmatprep.subr.mxu0 0.0
  %2792 = vmatpush1.xpose.msra.mxu0 0.0
  %2793 = vmatprep.subr.mxu0 0.0
  %2794 = vmatpush1.xpose.msra.mxu0 0.0
  %2795 = vmatprep.subr.mxu0 0.0
  %2796 = vmatpush1.xpose.msra.mxu0 0.0
  %2797 = vmatprep.subr.mxu0 0.0
  %2798 = vmatpush1.xpose.msra.mxu0 0.0
  %2799 = vmatprep.subr.mxu0 0.0
  %2800 = vmatpush1.xpose.msra.mxu0 0.0
  %2801 = vmatprep.subr.mxu0 0.0
  %2802 = vmatpush1.xpose.msra.mxu0 0.0
  %2803 = vmatprep.subr.mxu0 0.0
  %2804 = vmatpush1.xpose.msra.mxu0 0.0
  %2805 = vmatprep.subr.mxu0 0.0
  %v2806 = vand.u32 %v2774, 4294901760
  %2807 = vmatpush1.xpose.msra.mxu0 %v2806
  %2808 = vmatprep.subr.mxu0 0.0
  %v2809 = vand.u32 %v2768, 4294901760
  %2810 = vmatpush1.xpose.msra.mxu0 %v2809
  %2811 = vmatprep.subr.mxu0 0.0
  %2812 = vmatpush2.xpose.msra.mxu0 0.0
  %2813 = vmatprep.subr.mxu0 0.0
  %2814 = vmatpush2.xpose.msra.mxu0 0.0
  %2815 = vmatprep.subr.mxu0 0.0
  %2816 = vmatpush2.xpose.msra.mxu0 0.0
  %2817 = vmatprep.subr.mxu0 0.0
  %2818 = vmatpush2.xpose.msra.mxu0 0.0
  %2819 = vmatprep.subr.mxu0 0.0
  %2820 = vmatpush2.xpose.msra.mxu0 0.0
  %2821 = vmatprep.subr.mxu0 0.0
  %2822 = vmatpush2.xpose.msra.mxu0 0.0
  %2823 = vmatprep.subr.mxu0 0.0
  %2824 = vmatpush2.xpose.msra.mxu0 0.0
  %2825 = vmatprep.subr.mxu0 0.0
  %2826 = vmatpush2.xpose.msra.mxu0 0.0
  %2827 = vmatprep.subr.mxu0 0.0
  %2828 = vmatpush2.xpose.msra.mxu0 0.0
  %2829 = vmatprep.subr.mxu0 0.0
  %2830 = vmatpush2.xpose.msra.mxu0 0.0
  %2831 = vmatprep.subr.mxu0 0.0
  %2832 = vmatpush2.xpose.msra.mxu0 0.0
  %2833 = vmatprep.subr.mxu0 0.0
  %2834 = vmatpush2.xpose.msra.mxu0 0.0
  %2835 = vmatprep.subr.mxu0 0.0
  %2836 = vmatpush2.xpose.msra.mxu0 0.0
  %2837 = vmatprep.subr.mxu0 0.0
  %2838 = vmatpush2.xpose.msra.mxu0 0.0
  %2839 = vmatprep.subr.mxu0 0.0
  %2840 = vmatpush2.xpose.msra.mxu0 0.0
  %2841 = vmatprep.subr.mxu0 0.0
  %2842 = vmatpush2.xpose.msra.mxu0 0.0
  %2843 = vmatprep.mubr.f32.mxu0 0.0
  %v2844 = vand.u32 %v2768, 4294901760
  %v2845 = vsub.f32 %v2768, %v2844
  %v2846 = vand.u32 %v2845, 4294901760
  %v2847 = vsub.f32 %v2845, %v2846
  %v2848 = vand.u32 %v2847, 4294901760
  %2849 = vmatmul.mubr.f32.gmra.mxu0 %v2848
  %v2850 = vpop.f32.mrf.mxu0
  %v2851 = vadd.f32 0.0, %v2850
  %v2852 = vpop.f32.mrf.mxu0
  %2853 = vmatprep.mubr.f32.mxu0 0.0
  %v2854 = vand.u32 %v2774, 4294901760
  %v2855 = vsub.f32 %v2774, %v2854
  %v2856 = vand.u32 %v2855, 4294901760
  %v2857 = vsub.f32 %v2855, %v2856
  %v2858 = vand.u32 %v2857, 4294901760
  %2859 = vmatmul.mubr.f32.gmra.mxu0 %v2858
  %v2860 = vpop.f32.mrf.mxu0
  %v2861 = vadd.f32 0.0, %v2860
  %v2862 = vpop.f32.mrf.mxu0
  %2863 = vdwg.mxu0
  %2864 = vmatprep.subr.mxu0 0.0
  %2865 = vmatpush1.xpose.msra.mxu0 0.0
  %2866 = vmatprep.subr.mxu0 0.0
  %2867 = vmatpush1.xpose.msra.mxu0 0.0
  %2868 = vmatprep.subr.mxu0 0.0
  %2869 = vmatpush1.xpose.msra.mxu0 0.0
  %2870 = vmatprep.subr.mxu0 0.0
  %2871 = vmatpush1.xpose.msra.mxu0 0.0
  %2872 = vmatprep.subr.mxu0 0.0
  %2873 = vmatpush1.xpose.msra.mxu0 0.0
  %2874 = vmatprep.subr.mxu0 0.0
  %2875 = vmatpush1.xpose.msra.mxu0 0.0
  %2876 = vmatprep.subr.mxu0 0.0
  %2877 = vmatpush1.xpose.msra.mxu0 0.0
  %2878 = vmatprep.subr.mxu0 0.0
  %2879 = vmatpush1.xpose.msra.mxu0 0.0
  %2880 = vmatprep.subr.mxu0 0.0
  %2881 = vmatpush1.xpose.msra.mxu0 0.0
  %2882 = vmatprep.subr.mxu0 0.0
  %2883 = vmatpush1.xpose.msra.mxu0 0.0
  %2884 = vmatprep.subr.mxu0 0.0
  %2885 = vmatpush1.xpose.msra.mxu0 0.0
  %2886 = vmatprep.subr.mxu0 0.0
  %2887 = vmatpush1.xpose.msra.mxu0 0.0
  %2888 = vmatprep.subr.mxu0 0.0
  %2889 = vmatpush1.xpose.msra.mxu0 0.0
  %2890 = vmatprep.subr.mxu0 0.0
  %2891 = vmatpush1.xpose.msra.mxu0 0.0
  %2892 = vmatprep.subr.mxu0 0.0
  %v2893 = vand.u32 %v2774, 4294901760
  %v2894 = vsub.f32 %v2774, %v2893
  %v2895 = vand.u32 %v2894, 4294901760
  %v2896 = vsub.f32 %v2894, %v2895
  %v2897 = vand.u32 %v2896, 4294901760
  %2898 = vmatpush1.xpose.msra.mxu0 %v2897
  %2899 = vmatprep.subr.mxu0 0.0
  %v2900 = vand.u32 %v2768, 4294901760
  %v2901 = vsub.f32 %v2768, %v2900
  %v2902 = vand.u32 %v2901, 4294901760
  %v2903 = vsub.f32 %v2901, %v2902
  %v2904 = vand.u32 %v2903, 4294901760
  %2905 = vmatpush1.xpose.msra.mxu0 %v2904
  %2906 = vmatprep.subr.mxu0 0.0
  %2907 = vmatpush2.xpose.msra.mxu0 0.0
  %2908 = vmatprep.subr.mxu0 0.0
  %2909 = vmatpush2.xpose.msra.mxu0 0.0
  %2910 = vmatprep.subr.mxu0 0.0
  %2911 = vmatpush2.xpose.msra.mxu0 0.0
  %2912 = vmatprep.subr.mxu0 0.0
  %2913 = vmatpush2.xpose.msra.mxu0 0.0
  %2914 = vmatprep.subr.mxu0 0.0
  %2915 = vmatpush2.xpose.msra.mxu0 0.0
  %2916 = vmatprep.subr.mxu0 0.0
  %2917 = vmatpush2.xpose.msra.mxu0 0.0
  %2918 = vmatprep.subr.mxu0 0.0
  %2919 = vmatpush2.xpose.msra.mxu0 0.0
  %2920 = vmatprep.subr.mxu0 0.0
  %2921 = vmatpush2.xpose.msra.mxu0 0.0
  %2922 = vmatprep.subr.mxu0 0.0
  %2923 = vmatpush2.xpose.msra.mxu0 0.0
  %2924 = vmatprep.subr.mxu0 0.0
  %2925 = vmatpush2.xpose.msra.mxu0 0.0
  %2926 = vmatprep.subr.mxu0 0.0
  %2927 = vmatpush2.xpose.msra.mxu0 0.0
  %2928 = vmatprep.subr.mxu0 0.0
  %2929 = vmatpush2.xpose.msra.mxu0 0.0
  %2930 = vmatprep.subr.mxu0 0.0
  %2931 = vmatpush2.xpose.msra.mxu0 0.0
  %2932 = vmatprep.subr.mxu0 0.0
  %2933 = vmatpush2.xpose.msra.mxu0 0.0
  %2934 = vmatprep.subr.mxu0 0.0
  %2935 = vmatpush2.xpose.msra.mxu0 0.0
  %2936 = vmatprep.subr.mxu0 0.0
  %2937 = vmatpush2.xpose.msra.mxu0 0.0
  %2938 = vmatprep.mubr.f32.mxu0 0.0
  %v2939 = vand.u32 %v2768, 4294901760
  %2940 = vmatmul.mubr.f32.gmra.mxu0 %v2939
  %v2941 = vpop.f32.mrf.mxu0
  %v2942 = vadd.f32 %v2851, %v2941
  %v2943 = vpop.f32.mrf.mxu0
  %2944 = vmatprep.mubr.f32.mxu0 0.0
  %v2945 = vand.u32 %v2774, 4294901760
  %2946 = vmatmul.mubr.f32.gmra.mxu0 %v2945
  %v2947 = vpop.f32.mrf.mxu0
  %v2948 = vadd.f32 %v2861, %v2947
  %v2949 = vpop.f32.mrf.mxu0
  %2950 = vdwg.mxu0
  %2951 = vmatprep.subr.mxu0 0.0
  %2952 = vmatpush1.xpose.msra.mxu0 0.0
  %2953 = vmatprep.subr.mxu0 0.0
  %2954 = vmatpush1.xpose.msra.mxu0 0.0
  %2955 = vmatprep.subr.mxu0 0.0
  %2956 = vmatpush1.xpose.msra.mxu0 0.0
  %2957 = vmatprep.subr.mxu0 0.0
  %2958 = vmatpush1.xpose.msra.mxu0 0.0
  %2959 = vmatprep.subr.mxu0 0.0
  %2960 = vmatpush1.xpose.msra.mxu0 0.0
  %2961 = vmatprep.subr.mxu0 0.0
  %2962 = vmatpush1.xpose.msra.mxu0 0.0
  %2963 = vmatprep.subr.mxu0 0.0
  %2964 = vmatpush1.xpose.msra.mxu0 0.0
  %2965 = vmatprep.subr.mxu0 0.0
  %2966 = vmatpush1.xpose.msra.mxu0 0.0
  %2967 = vmatprep.subr.mxu0 0.0
  %2968 = vmatpush1.xpose.msra.mxu0 0.0
  %2969 = vmatprep.subr.mxu0 0.0
  %2970 = vmatpush1.xpose.msra.mxu0 0.0
  %2971 = vmatprep.subr.mxu0 0.0
  %2972 = vmatpush1.xpose.msra.mxu0 0.0
  %2973 = vmatprep.subr.mxu0 0.0
  %2974 = vmatpush1.xpose.msra.mxu0 0.0
  %2975 = vmatprep.subr.mxu0 0.0
  %2976 = vmatpush1.xpose.msra.mxu0 0.0
  %2977 = vmatprep.subr.mxu0 0.0
  %2978 = vmatpush1.xpose.msra.mxu0 0.0
  %2979 = vmatprep.subr.mxu0 0.0
  %v2980 = vand.u32 %v2774, 4294901760
  %v2981 = vsub.f32 %v2774, %v2980
  %2982 = vmatpush1.xpose.msra.mxu0 %v2981
  %2983 = vmatprep.subr.mxu0 0.0
  %v2984 = vand.u32 %v2768, 4294901760
  %v2985 = vsub.f32 %v2768, %v2984
  %2986 = vmatpush1.xpose.msra.mxu0 %v2985
  %2987 = vmatprep.subr.mxu0 0.0
  %2988 = vmatpush2.xpose.msra.mxu0 0.0
  %2989 = vmatprep.subr.mxu0 0.0
  %2990 = vmatpush2.xpose.msra.mxu0 0.0
  %2991 = vmatprep.subr.mxu0 0.0
  %2992 = vmatpush2.xpose.msra.mxu0 0.0
  %2993 = vmatprep.subr.mxu0 0.0
  %2994 = vmatpush2.xpose.msra.mxu0 0.0
  %2995 = vmatprep.subr.mxu0 0.0
  %2996 = vmatpush2.xpose.msra.mxu0 0.0
  %2997 = vmatprep.subr.mxu0 0.0
  %2998 = vmatpush2.xpose.msra.mxu0 0.0
  %2999 = vmatprep.subr.mxu0 0.0
  %3000 = vmatpush2.xpose.msra.mxu0 0.0
  %3001 = vmatprep.subr.mxu0 0.0
  %3002 = vmatpush2.xpose.msra.mxu0 0.0
  %3003 = vmatprep.subr.mxu0 0.0
  %3004 = vmatpush2.xpose.msra.mxu0 0.0
  %3005 = vmatprep.subr.mxu0 0.0
  %3006 = vmatpush2.xpose.msra.mxu0 0.0
  %3007 = vmatprep.subr.mxu0 0.0
  %3008 = vmatpush2.xpose.msra.mxu0 0.0
  %3009 = vmatprep.subr.mxu0 0.0
  %3010 = vmatpush2.xpose.msra.mxu0 0.0
  %3011 = vmatprep.subr.mxu0 0.0
  %3012 = vmatpush2.xpose.msra.mxu0 0.0
  %3013 = vmatprep.subr.mxu0 0.0
  %3014 = vmatpush2.xpose.msra.mxu0 0.0
  %3015 = vmatprep.subr.mxu0 0.0
  %3016 = vmatpush2.xpose.msra.mxu0 0.0
  %3017 = vmatprep.subr.mxu0 0.0
  %3018 = vmatpush2.xpose.msra.mxu0 0.0
  %3019 = vmatprep.mubr.f32.mxu0 0.0
  %v3020 = vand.u32 %v2768, 4294901760
  %v3021 = vsub.f32 %v2768, %v3020
  %3022 = vmatmul.mubr.f32.gmra.mxu0 %v3021
  %v3023 = vpop.f32.mrf.mxu0
  %v3024 = vadd.f32 %v2942, %v3023
  %v3025 = vpop.f32.mrf.mxu0
  %3026 = vmatprep.mubr.f32.mxu0 0.0
  %v3027 = vand.u32 %v2774, 4294901760
  %v3028 = vsub.f32 %v2774, %v3027
  %3029 = vmatmul.mubr.f32.gmra.mxu0 %v3028
  %v3030 = vpop.f32.mrf.mxu0
  %v3031 = vadd.f32 %v2948, %v3030
  %v3032 = vpop.f32.mrf.mxu0
  %3033 = vdwg.mxu0
  %3034 = vmatprep.subr.mxu0 0.0
  %3035 = vmatpush1.xpose.msra.mxu0 0.0
  %3036 = vmatprep.subr.mxu0 0.0
  %3037 = vmatpush1.xpose.msra.mxu0 0.0
  %3038 = vmatprep.subr.mxu0 0.0
  %3039 = vmatpush1.xpose.msra.mxu0 0.0
  %3040 = vmatprep.subr.mxu0 0.0
  %3041 = vmatpush1.xpose.msra.mxu0 0.0
  %3042 = vmatprep.subr.mxu0 0.0
  %3043 = vmatpush1.xpose.msra.mxu0 0.0
  %3044 = vmatprep.subr.mxu0 0.0
  %3045 = vmatpush1.xpose.msra.mxu0 0.0
  %3046 = vmatprep.subr.mxu0 0.0
  %3047 = vmatpush1.xpose.msra.mxu0 0.0
  %3048 = vmatprep.subr.mxu0 0.0
  %3049 = vmatpush1.xpose.msra.mxu0 0.0
  %3050 = vmatprep.subr.mxu0 0.0
  %3051 = vmatpush1.xpose.msra.mxu0 0.0
  %3052 = vmatprep.subr.mxu0 0.0
  %3053 = vmatpush1.xpose.msra.mxu0 0.0
  %3054 = vmatprep.subr.mxu0 0.0
  %3055 = vmatpush1.xpose.msra.mxu0 0.0
  %3056 = vmatprep.subr.mxu0 0.0
  %3057 = vmatpush1.xpose.msra.mxu0 0.0
  %3058 = vmatprep.subr.mxu0 0.0
  %3059 = vmatpush1.xpose.msra.mxu0 0.0
  %3060 = vmatprep.subr.mxu0 0.0
  %3061 = vmatpush1.xpose.msra.mxu0 0.0
  %3062 = vmatprep.subr.mxu0 0.0
  %v3063 = vand.u32 %v2774, 4294901760
  %3064 = vmatpush1.xpose.msra.mxu0 %v3063
  %3065 = vmatprep.subr.mxu0 0.0
  %v3066 = vand.u32 %v2768, 4294901760
  %3067 = vmatpush1.xpose.msra.mxu0 %v3066
  %3068 = vmatprep.subr.mxu0 0.0
  %3069 = vmatpush2.xpose.msra.mxu0 0.0
  %3070 = vmatprep.subr.mxu0 0.0
  %3071 = vmatpush2.xpose.msra.mxu0 0.0
  %3072 = vmatprep.subr.mxu0 0.0
  %3073 = vmatpush2.xpose.msra.mxu0 0.0
  %3074 = vmatprep.subr.mxu0 0.0
  %3075 = vmatpush2.xpose.msra.mxu0 0.0
  %3076 = vmatprep.subr.mxu0 0.0
  %3077 = vmatpush2.xpose.msra.mxu0 0.0
  %3078 = vmatprep.subr.mxu0 0.0
  %3079 = vmatpush2.xpose.msra.mxu0 0.0
  %3080 = vmatprep.subr.mxu0 0.0
  %3081 = vmatpush2.xpose.msra.mxu0 0.0
  %3082 = vmatprep.subr.mxu0 0.0
  %3083 = vmatpush2.xpose.msra.mxu0 0.0
  %3084 = vmatprep.subr.mxu0 0.0
  %3085 = vmatpush2.xpose.msra.mxu0 0.0
  %3086 = vmatprep.subr.mxu0 0.0
  %3087 = vmatpush2.xpose.msra.mxu0 0.0
  %3088 = vmatprep.subr.mxu0 0.0
  %3089 = vmatpush2.xpose.msra.mxu0 0.0
  %3090 = vmatprep.subr.mxu0 0.0
  %3091 = vmatpush2.xpose.msra.mxu0 0.0
  %3092 = vmatprep.subr.mxu0 0.0
  %3093 = vmatpush2.xpose.msra.mxu0 0.0
  %3094 = vmatprep.subr.mxu0 0.0
  %3095 = vmatpush2.xpose.msra.mxu0 0.0
  %3096 = vmatprep.subr.mxu0 0.0
  %3097 = vmatpush2.xpose.msra.mxu0 0.0
  %3098 = vmatprep.subr.mxu0 0.0
  %3099 = vmatpush2.xpose.msra.mxu0 0.0
  %3100 = vmatprep.mubr.f32.mxu0 0.0
  %v3101 = vand.u32 %v2768, 4294901760
  %v3102 = vsub.f32 %v2768, %v3101
  %v3103 = vand.u32 %v3102, 4294901760
  %3104 = vmatmul.mubr.f32.gmra.mxu0 %v3103
  %v3105 = vpop.f32.mrf.mxu0
  %v3106 = vadd.f32 %v3024, %v3105
  %v3107 = vpop.f32.mrf.mxu0
  %3108 = vmatprep.mubr.f32.mxu0 0.0
  %v3109 = vand.u32 %v2774, 4294901760
  %v3110 = vsub.f32 %v2774, %v3109
  %v3111 = vand.u32 %v3110, 4294901760
  %3112 = vmatmul.mubr.f32.gmra.mxu0 %v3111
  %v3113 = vpop.f32.mrf.mxu0
  %v3114 = vadd.f32 %v3031, %v3113
  %v3115 = vpop.f32.mrf.mxu0
  %3116 = vdwg.mxu0
  %3117 = vmatprep.subr.mxu0 0.0
  %3118 = vmatpush1.xpose.msra.mxu0 0.0
  %3119 = vmatprep.subr.mxu0 0.0
  %3120 = vmatpush1.xpose.msra.mxu0 0.0
  %3121 = vmatprep.subr.mxu0 0.0
  %3122 = vmatpush1.xpose.msra.mxu0 0.0
  %3123 = vmatprep.subr.mxu0 0.0
  %3124 = vmatpush1.xpose.msra.mxu0 0.0
  %3125 = vmatprep.subr.mxu0 0.0
  %3126 = vmatpush1.xpose.msra.mxu0 0.0
  %3127 = vmatprep.subr.mxu0 0.0
  %3128 = vmatpush1.xpose.msra.mxu0 0.0
  %3129 = vmatprep.subr.mxu0 0.0
  %3130 = vmatpush1.xpose.msra.mxu0 0.0
  %3131 = vmatprep.subr.mxu0 0.0
  %3132 = vmatpush1.xpose.msra.mxu0 0.0
  %3133 = vmatprep.subr.mxu0 0.0
  %3134 = vmatpush1.xpose.msra.mxu0 0.0
  %3135 = vmatprep.subr.mxu0 0.0
  %3136 = vmatpush1.xpose.msra.mxu0 0.0
  %3137 = vmatprep.subr.mxu0 0.0
  %3138 = vmatpush1.xpose.msra.mxu0 0.0
  %3139 = vmatprep.subr.mxu0 0.0
  %3140 = vmatpush1.xpose.msra.mxu0 0.0
  %3141 = vmatprep.subr.mxu0 0.0
  %3142 = vmatpush1.xpose.msra.mxu0 0.0
  %3143 = vmatprep.subr.mxu0 0.0
  %3144 = vmatpush1.xpose.msra.mxu0 0.0
  %3145 = vmatprep.subr.mxu0 0.0
  %v3146 = vand.u32 %v2774, 4294901760
  %v3147 = vsub.f32 %v2774, %v3146
  %v3148 = vand.u32 %v3147, 4294901760
  %3149 = vmatpush1.xpose.msra.mxu0 %v3148
  %3150 = vmatprep.subr.mxu0 0.0
  %v3151 = vand.u32 %v2768, 4294901760
  %v3152 = vsub.f32 %v2768, %v3151
  %v3153 = vand.u32 %v3152, 4294901760
  %3154 = vmatpush1.xpose.msra.mxu0 %v3153
  %3155 = vmatprep.subr.mxu0 0.0
  %3156 = vmatpush2.xpose.msra.mxu0 0.0
  %3157 = vmatprep.subr.mxu0 0.0
  %3158 = vmatpush2.xpose.msra.mxu0 0.0
  %3159 = vmatprep.subr.mxu0 0.0
  %3160 = vmatpush2.xpose.msra.mxu0 0.0
  %3161 = vmatprep.subr.mxu0 0.0
  %3162 = vmatpush2.xpose.msra.mxu0 0.0
  %3163 = vmatprep.subr.mxu0 0.0
  %3164 = vmatpush2.xpose.msra.mxu0 0.0
  %3165 = vmatprep.subr.mxu0 0.0
  %3166 = vmatpush2.xpose.msra.mxu0 0.0
  %3167 = vmatprep.subr.mxu0 0.0
  %3168 = vmatpush2.xpose.msra.mxu0 0.0
  %3169 = vmatprep.subr.mxu0 0.0
  %3170 = vmatpush2.xpose.msra.mxu0 0.0
  %3171 = vmatprep.subr.mxu0 0.0
  %3172 = vmatpush2.xpose.msra.mxu0 0.0
  %3173 = vmatprep.subr.mxu0 0.0
  %3174 = vmatpush2.xpose.msra.mxu0 0.0
  %3175 = vmatprep.subr.mxu0 0.0
  %3176 = vmatpush2.xpose.msra.mxu0 0.0
  %3177 = vmatprep.subr.mxu0 0.0
  %3178 = vmatpush2.xpose.msra.mxu0 0.0
  %3179 = vmatprep.subr.mxu0 0.0
  %3180 = vmatpush2.xpose.msra.mxu0 0.0
  %3181 = vmatprep.subr.mxu0 0.0
  %3182 = vmatpush2.xpose.msra.mxu0 0.0
  %3183 = vmatprep.subr.mxu0 0.0
  %3184 = vmatpush2.xpose.msra.mxu0 0.0
  %3185 = vmatprep.subr.mxu0 0.0
  %3186 = vmatpush2.xpose.msra.mxu0 0.0
  %3187 = vmatprep.mubr.f32.mxu0 0.0
  %v3188 = vand.u32 %v2768, 4294901760
  %3189 = vmatmul.mubr.f32.gmra.mxu0 %v3188
  %v3190 = vpop.f32.mrf.mxu0
  %v3191 = vadd.f32 %v3106, %v3190
  %v3192 = vpop.f32.mrf.mxu0
  %3193 = vmatprep.mubr.f32.mxu0 0.0
  %v3194 = vand.u32 %v2774, 4294901760
  %3195 = vmatmul.mubr.f32.gmra.mxu0 %v3194
  %v3196 = vpop.f32.mrf.mxu0
  %v3197 = vadd.f32 %v3114, %v3196
  %v3198 = vpop.f32.mrf.mxu0
  %3199 = vdwg.mxu0
  %3200 = vmatprep.subr.mxu0 0.0
  %3201 = vmatpush1.xpose.msra.mxu0 0.0
  %3202 = vmatprep.subr.mxu0 0.0
  %3203 = vmatpush1.xpose.msra.mxu0 0.0
  %3204 = vmatprep.subr.mxu0 0.0
  %3205 = vmatpush1.xpose.msra.mxu0 0.0
  %3206 = vmatprep.subr.mxu0 0.0
  %3207 = vmatpush1.xpose.msra.mxu0 0.0
  %3208 = vmatprep.subr.mxu0 0.0
  %3209 = vmatpush1.xpose.msra.mxu0 0.0
  %3210 = vmatprep.subr.mxu0 0.0
  %3211 = vmatpush1.xpose.msra.mxu0 0.0
  %3212 = vmatprep.subr.mxu0 0.0
  %3213 = vmatpush1.xpose.msra.mxu0 0.0
  %3214 = vmatprep.subr.mxu0 0.0
  %3215 = vmatpush1.xpose.msra.mxu0 0.0
  %3216 = vmatprep.subr.mxu0 0.0
  %3217 = vmatpush1.xpose.msra.mxu0 0.0
  %3218 = vmatprep.subr.mxu0 0.0
  %3219 = vmatpush1.xpose.msra.mxu0 0.0
  %3220 = vmatprep.subr.mxu0 0.0
  %3221 = vmatpush1.xpose.msra.mxu0 0.0
  %3222 = vmatprep.subr.mxu0 0.0
  %3223 = vmatpush1.xpose.msra.mxu0 0.0
  %3224 = vmatprep.subr.mxu0 0.0
  %3225 = vmatpush1.xpose.msra.mxu0 0.0
  %3226 = vmatprep.subr.mxu0 0.0
  %3227 = vmatpush1.xpose.msra.mxu0 0.0
  %3228 = vmatprep.subr.mxu0 0.0
  %v3229 = vand.u32 %v2774, 4294901760
  %3230 = vmatpush1.xpose.msra.mxu0 %v3229
  %3231 = vmatprep.subr.mxu0 0.0
  %v3232 = vand.u32 %v2768, 4294901760
  %3233 = vmatpush1.xpose.msra.mxu0 %v3232
  %3234 = vmatprep.subr.mxu0 0.0
  %3235 = vmatpush2.xpose.msra.mxu0 0.0
  %3236 = vmatprep.subr.mxu0 0.0
  %3237 = vmatpush2.xpose.msra.mxu0 0.0
  %3238 = vmatprep.subr.mxu0 0.0
  %3239 = vmatpush2.xpose.msra.mxu0 0.0
  %3240 = vmatprep.subr.mxu0 0.0
  %3241 = vmatpush2.xpose.msra.mxu0 0.0
  %3242 = vmatprep.subr.mxu0 0.0
  %3243 = vmatpush2.xpose.msra.mxu0 0.0
  %3244 = vmatprep.subr.mxu0 0.0
  %3245 = vmatpush2.xpose.msra.mxu0 0.0
  %3246 = vmatprep.subr.mxu0 0.0
  %3247 = vmatpush2.xpose.msra.mxu0 0.0
  %3248 = vmatprep.subr.mxu0 0.0
  %3249 = vmatpush2.xpose.msra.mxu0 0.0
  %3250 = vmatprep.subr.mxu0 0.0
  %3251 = vmatpush2.xpose.msra.mxu0 0.0
  %3252 = vmatprep.subr.mxu0 0.0
  %3253 = vmatpush2.xpose.msra.mxu0 0.0
  %3254 = vmatprep.subr.mxu0 0.0
  %3255 = vmatpush2.xpose.msra.mxu0 0.0
  %3256 = vmatprep.subr.mxu0 0.0
  %3257 = vmatpush2.xpose.msra.mxu0 0.0
  %3258 = vmatprep.subr.mxu0 0.0
  %3259 = vmatpush2.xpose.msra.mxu0 0.0
  %3260 = vmatprep.subr.mxu0 0.0
  %3261 = vmatpush2.xpose.msra.mxu0 0.0
  %3262 = vmatprep.subr.mxu0 0.0
  %3263 = vmatpush2.xpose.msra.mxu0 0.0
  %3264 = vmatprep.subr.mxu0 0.0
  %3265 = vmatpush2.xpose.msra.mxu0 0.0
  %3266 = vmatprep.mubr.f32.mxu0 0.0
  %v3267 = vand.u32 %v2768, 4294901760
  %3268 = vmatmul.mubr.f32.gmra.mxu0 %v3267
  %v3269 = vpop.f32.mrf.mxu0
  %v3270 = vadd.f32 %v3191, %v3269
  %v3271 = vpop.f32.mrf.mxu0
  %3272 = vmatprep.mubr.f32.mxu0 0.0
  %v3273 = vand.u32 %v2774, 4294901760
  %3274 = vmatmul.mubr.f32.gmra.mxu0 %v3273
  %v3275 = vpop.f32.mrf.mxu0
  %v3276 = vadd.f32 %v3197, %v3275
  %v3277 = vpop.f32.mrf.mxu0
  %3278 = vdwg.mxu0
  %v3279 = vmul.f32 %v3270, 0.5
  %v3280 = vmul.f32 %v3276, 0.5
  %v3281 = vsub.f32 %v2263, %v3279
  %v3282 = vsub.f32 %v2264, %v3280
  %v3284 = vsel %vm121, %v3281, 0
  %v3287 = vsel %vm121, %v3282, 0
  %3289 = vmatprep.subr.mxu0 0.0
  %3290 = vmatpush1.msra.mxu0 0.0
  %3291 = vmatprep.subr.mxu0 0.0
  %3292 = vmatpush1.msra.mxu0 0.0
  %3293 = vmatprep.subr.mxu0 0.0
  %3294 = vmatpush1.msra.mxu0 0.0
  %3295 = vmatprep.subr.mxu0 0.0
  %3296 = vmatpush1.msra.mxu0 0.0
  %3297 = vmatprep.subr.mxu0 0.0
  %3298 = vmatpush1.msra.mxu0 0.0
  %3299 = vmatprep.subr.mxu0 0.0
  %3300 = vmatpush1.msra.mxu0 0.0
  %3301 = vmatprep.subr.mxu0 0.0
  %3302 = vmatpush1.msra.mxu0 0.0
  %3303 = vmatprep.subr.mxu0 0.0
  %3304 = vmatpush1.msra.mxu0 0.0
  %3305 = vmatprep.subr.mxu0 0.0
  %3306 = vmatpush1.msra.mxu0 0.0
  %3307 = vmatprep.subr.mxu0 0.0
  %3308 = vmatpush1.msra.mxu0 0.0
  %3309 = vmatprep.subr.mxu0 0.0
  %3310 = vmatpush1.msra.mxu0 0.0
  %3311 = vmatprep.subr.mxu0 0.0
  %3312 = vmatpush1.msra.mxu0 0.0
  %3313 = vmatprep.subr.mxu0 0.0
  %3314 = vmatpush1.msra.mxu0 0.0
  %3315 = vmatprep.subr.mxu0 0.0
  %3316 = vmatpush1.msra.mxu0 0.0
  %3317 = vmatprep.subr.mxu0 0.0
  %v3318 = vand.u32 %v2774, 4294901760
  %3319 = vmatpush1.msra.mxu0 %v3318
  %3320 = vmatprep.subr.mxu0 0.0
  %v3321 = vand.u32 %v2768, 4294901760
  %3322 = vmatpush1.msra.mxu0 %v3321
  %3323 = vmatprep.subr.mxu0 0.0
  %3324 = vmatpush2.msra.mxu0 0.0
  %3325 = vmatprep.subr.mxu0 0.0
  %3326 = vmatpush2.msra.mxu0 0.0
  %3327 = vmatprep.subr.mxu0 0.0
  %3328 = vmatpush2.msra.mxu0 0.0
  %3329 = vmatprep.subr.mxu0 0.0
  %3330 = vmatpush2.msra.mxu0 0.0
  %3331 = vmatprep.subr.mxu0 0.0
  %3332 = vmatpush2.msra.mxu0 0.0
  %3333 = vmatprep.subr.mxu0 0.0
  %3334 = vmatpush2.msra.mxu0 0.0
  %3335 = vmatprep.subr.mxu0 0.0
  %3336 = vmatpush2.msra.mxu0 0.0
  %3337 = vmatprep.subr.mxu0 0.0
  %3338 = vmatpush2.msra.mxu0 0.0
  %3339 = vmatprep.subr.mxu0 0.0
  %3340 = vmatpush2.msra.mxu0 0.0
  %3341 = vmatprep.subr.mxu0 0.0
  %3342 = vmatpush2.msra.mxu0 0.0
  %3343 = vmatprep.subr.mxu0 0.0
  %3344 = vmatpush2.msra.mxu0 0.0
  %3345 = vmatprep.subr.mxu0 0.0
  %3346 = vmatpush2.msra.mxu0 0.0
  %3347 = vmatprep.subr.mxu0 0.0
  %3348 = vmatpush2.msra.mxu0 0.0
  %3349 = vmatprep.subr.mxu0 0.0
  %3350 = vmatpush2.msra.mxu0 0.0
  %3351 = vmatprep.subr.mxu0 0.0
  %3352 = vmatpush2.msra.mxu0 0.0
  %3353 = vmatprep.subr.mxu0 0.0
  %3354 = vmatpush2.msra.mxu0 0.0
  %3355 = vmatprep.mubr.f32.mxu0 0.0
  %v3356 = vand.u32 %v3284, 4294901760
  %v3357 = vsub.f32 %v3284, %v3356
  %v3358 = vand.u32 %v3357, 4294901760
  %v3359 = vsub.f32 %v3357, %v3358
  %v3360 = vand.u32 %v3359, 4294901760
  %3361 = vmatmul.mubr.f32.gmra.mxu0 %v3360
  %v3362 = vpop.f32.mrf.mxu0
  %v3363 = vadd.f32 0.0, %v3362
  %v3364 = vpop.f32.mrf.mxu0
  %3365 = vmatprep.mubr.f32.mxu0 0.0
  %v3366 = vand.u32 %v3287, 4294901760
  %v3367 = vsub.f32 %v3287, %v3366
  %v3368 = vand.u32 %v3367, 4294901760
  %v3369 = vsub.f32 %v3367, %v3368
  %v3370 = vand.u32 %v3369, 4294901760
  %3371 = vmatmul.mubr.f32.gmra.mxu0 %v3370
  %v3372 = vpop.f32.mrf.mxu0
  %v3373 = vadd.f32 0.0, %v3372
  %v3374 = vpop.f32.mrf.mxu0
  %3375 = vdwg.mxu0
  %3376 = vmatprep.subr.mxu0 0.0
  %3377 = vmatpush1.msra.mxu0 0.0
  %3378 = vmatprep.subr.mxu0 0.0
  %3379 = vmatpush1.msra.mxu0 0.0
  %3380 = vmatprep.subr.mxu0 0.0
  %3381 = vmatpush1.msra.mxu0 0.0
  %3382 = vmatprep.subr.mxu0 0.0
  %3383 = vmatpush1.msra.mxu0 0.0
  %3384 = vmatprep.subr.mxu0 0.0
  %3385 = vmatpush1.msra.mxu0 0.0
  %3386 = vmatprep.subr.mxu0 0.0
  %3387 = vmatpush1.msra.mxu0 0.0
  %3388 = vmatprep.subr.mxu0 0.0
  %3389 = vmatpush1.msra.mxu0 0.0
  %3390 = vmatprep.subr.mxu0 0.0
  %3391 = vmatpush1.msra.mxu0 0.0
  %3392 = vmatprep.subr.mxu0 0.0
  %3393 = vmatpush1.msra.mxu0 0.0
  %3394 = vmatprep.subr.mxu0 0.0
  %3395 = vmatpush1.msra.mxu0 0.0
  %3396 = vmatprep.subr.mxu0 0.0
  %3397 = vmatpush1.msra.mxu0 0.0
  %3398 = vmatprep.subr.mxu0 0.0
  %3399 = vmatpush1.msra.mxu0 0.0
  %3400 = vmatprep.subr.mxu0 0.0
  %3401 = vmatpush1.msra.mxu0 0.0
  %3402 = vmatprep.subr.mxu0 0.0
  %3403 = vmatpush1.msra.mxu0 0.0
  %3404 = vmatprep.subr.mxu0 0.0
  %v3405 = vand.u32 %v2774, 4294901760
  %v3406 = vsub.f32 %v2774, %v3405
  %v3407 = vand.u32 %v3406, 4294901760
  %v3408 = vsub.f32 %v3406, %v3407
  %v3409 = vand.u32 %v3408, 4294901760
  %3410 = vmatpush1.msra.mxu0 %v3409
  %3411 = vmatprep.subr.mxu0 0.0
  %v3412 = vand.u32 %v2768, 4294901760
  %v3413 = vsub.f32 %v2768, %v3412
  %v3414 = vand.u32 %v3413, 4294901760
  %v3415 = vsub.f32 %v3413, %v3414
  %v3416 = vand.u32 %v3415, 4294901760
  %3417 = vmatpush1.msra.mxu0 %v3416
  %3418 = vmatprep.subr.mxu0 0.0
  %3419 = vmatpush2.msra.mxu0 0.0
  %3420 = vmatprep.subr.mxu0 0.0
  %3421 = vmatpush2.msra.mxu0 0.0
  %3422 = vmatprep.subr.mxu0 0.0
  %3423 = vmatpush2.msra.mxu0 0.0
  %3424 = vmatprep.subr.mxu0 0.0
  %3425 = vmatpush2.msra.mxu0 0.0
  %3426 = vmatprep.subr.mxu0 0.0
  %3427 = vmatpush2.msra.mxu0 0.0
  %3428 = vmatprep.subr.mxu0 0.0
  %3429 = vmatpush2.msra.mxu0 0.0
  %3430 = vmatprep.subr.mxu0 0.0
  %3431 = vmatpush2.msra.mxu0 0.0
  %3432 = vmatprep.subr.mxu0 0.0
  %3433 = vmatpush2.msra.mxu0 0.0
  %3434 = vmatprep.subr.mxu0 0.0
  %3435 = vmatpush2.msra.mxu0 0.0
  %3436 = vmatprep.subr.mxu0 0.0
  %3437 = vmatpush2.msra.mxu0 0.0
  %3438 = vmatprep.subr.mxu0 0.0
  %3439 = vmatpush2.msra.mxu0 0.0
  %3440 = vmatprep.subr.mxu0 0.0
  %3441 = vmatpush2.msra.mxu0 0.0
  %3442 = vmatprep.subr.mxu0 0.0
  %3443 = vmatpush2.msra.mxu0 0.0
  %3444 = vmatprep.subr.mxu0 0.0
  %3445 = vmatpush2.msra.mxu0 0.0
  %3446 = vmatprep.subr.mxu0 0.0
  %3447 = vmatpush2.msra.mxu0 0.0
  %3448 = vmatprep.subr.mxu0 0.0
  %3449 = vmatpush2.msra.mxu0 0.0
  %3450 = vmatprep.mubr.f32.mxu0 0.0
  %v3451 = vand.u32 %v3284, 4294901760
  %3452 = vmatmul.mubr.f32.gmra.mxu0 %v3451
  %v3453 = vpop.f32.mrf.mxu0
  %v3454 = vadd.f32 %v3363, %v3453
  %v3455 = vpop.f32.mrf.mxu0
  %3456 = vmatprep.mubr.f32.mxu0 0.0
  %v3457 = vand.u32 %v3287, 4294901760
  %3458 = vmatmul.mubr.f32.gmra.mxu0 %v3457
  %v3459 = vpop.f32.mrf.mxu0
  %v3460 = vadd.f32 %v3373, %v3459
  %v3461 = vpop.f32.mrf.mxu0
  %3462 = vdwg.mxu0
  %3463 = vmatprep.subr.mxu0 0.0
  %3464 = vmatpush1.msra.mxu0 0.0
  %3465 = vmatprep.subr.mxu0 0.0
  %3466 = vmatpush1.msra.mxu0 0.0
  %3467 = vmatprep.subr.mxu0 0.0
  %3468 = vmatpush1.msra.mxu0 0.0
  %3469 = vmatprep.subr.mxu0 0.0
  %3470 = vmatpush1.msra.mxu0 0.0
  %3471 = vmatprep.subr.mxu0 0.0
  %3472 = vmatpush1.msra.mxu0 0.0
  %3473 = vmatprep.subr.mxu0 0.0
  %3474 = vmatpush1.msra.mxu0 0.0
  %3475 = vmatprep.subr.mxu0 0.0
  %3476 = vmatpush1.msra.mxu0 0.0
  %3477 = vmatprep.subr.mxu0 0.0
  %3478 = vmatpush1.msra.mxu0 0.0
  %3479 = vmatprep.subr.mxu0 0.0
  %3480 = vmatpush1.msra.mxu0 0.0
  %3481 = vmatprep.subr.mxu0 0.0
  %3482 = vmatpush1.msra.mxu0 0.0
  %3483 = vmatprep.subr.mxu0 0.0
  %3484 = vmatpush1.msra.mxu0 0.0
  %3485 = vmatprep.subr.mxu0 0.0
  %3486 = vmatpush1.msra.mxu0 0.0
  %3487 = vmatprep.subr.mxu0 0.0
  %3488 = vmatpush1.msra.mxu0 0.0
  %3489 = vmatprep.subr.mxu0 0.0
  %3490 = vmatpush1.msra.mxu0 0.0
  %3491 = vmatprep.subr.mxu0 0.0
  %v3492 = vand.u32 %v2774, 4294901760
  %v3493 = vsub.f32 %v2774, %v3492
  %3494 = vmatpush1.msra.mxu0 %v3493
  %3495 = vmatprep.subr.mxu0 0.0
  %v3496 = vand.u32 %v2768, 4294901760
  %v3497 = vsub.f32 %v2768, %v3496
  %3498 = vmatpush1.msra.mxu0 %v3497
  %3499 = vmatprep.subr.mxu0 0.0
  %3500 = vmatpush2.msra.mxu0 0.0
  %3501 = vmatprep.subr.mxu0 0.0
  %3502 = vmatpush2.msra.mxu0 0.0
  %3503 = vmatprep.subr.mxu0 0.0
  %3504 = vmatpush2.msra.mxu0 0.0
  %3505 = vmatprep.subr.mxu0 0.0
  %3506 = vmatpush2.msra.mxu0 0.0
  %3507 = vmatprep.subr.mxu0 0.0
  %3508 = vmatpush2.msra.mxu0 0.0
  %3509 = vmatprep.subr.mxu0 0.0
  %3510 = vmatpush2.msra.mxu0 0.0
  %3511 = vmatprep.subr.mxu0 0.0
  %3512 = vmatpush2.msra.mxu0 0.0
  %3513 = vmatprep.subr.mxu0 0.0
  %3514 = vmatpush2.msra.mxu0 0.0
  %3515 = vmatprep.subr.mxu0 0.0
  %3516 = vmatpush2.msra.mxu0 0.0
  %3517 = vmatprep.subr.mxu0 0.0
  %3518 = vmatpush2.msra.mxu0 0.0
  %3519 = vmatprep.subr.mxu0 0.0
  %3520 = vmatpush2.msra.mxu0 0.0
  %3521 = vmatprep.subr.mxu0 0.0
  %3522 = vmatpush2.msra.mxu0 0.0
  %3523 = vmatprep.subr.mxu0 0.0
  %3524 = vmatpush2.msra.mxu0 0.0
  %3525 = vmatprep.subr.mxu0 0.0
  %3526 = vmatpush2.msra.mxu0 0.0
  %3527 = vmatprep.subr.mxu0 0.0
  %3528 = vmatpush2.msra.mxu0 0.0
  %3529 = vmatprep.subr.mxu0 0.0
  %3530 = vmatpush2.msra.mxu0 0.0
  %3531 = vmatprep.mubr.f32.mxu0 0.0
  %v3532 = vand.u32 %v3284, 4294901760
  %v3533 = vsub.f32 %v3284, %v3532
  %3534 = vmatmul.mubr.f32.gmra.mxu0 %v3533
  %v3535 = vpop.f32.mrf.mxu0
  %v3536 = vadd.f32 %v3454, %v3535
  %v3537 = vpop.f32.mrf.mxu0
  %3538 = vmatprep.mubr.f32.mxu0 0.0
  %v3539 = vand.u32 %v3287, 4294901760
  %v3540 = vsub.f32 %v3287, %v3539
  %3541 = vmatmul.mubr.f32.gmra.mxu0 %v3540
  %v3542 = vpop.f32.mrf.mxu0
  %v3543 = vadd.f32 %v3460, %v3542
  %v3544 = vpop.f32.mrf.mxu0
  %3545 = vdwg.mxu0
  %3546 = vmatprep.subr.mxu0 0.0
  %3547 = vmatpush1.msra.mxu0 0.0
  %3548 = vmatprep.subr.mxu0 0.0
  %3549 = vmatpush1.msra.mxu0 0.0
  %3550 = vmatprep.subr.mxu0 0.0
  %3551 = vmatpush1.msra.mxu0 0.0
  %3552 = vmatprep.subr.mxu0 0.0
  %3553 = vmatpush1.msra.mxu0 0.0
  %3554 = vmatprep.subr.mxu0 0.0
  %3555 = vmatpush1.msra.mxu0 0.0
  %3556 = vmatprep.subr.mxu0 0.0
  %3557 = vmatpush1.msra.mxu0 0.0
  %3558 = vmatprep.subr.mxu0 0.0
  %3559 = vmatpush1.msra.mxu0 0.0
  %3560 = vmatprep.subr.mxu0 0.0
  %3561 = vmatpush1.msra.mxu0 0.0
  %3562 = vmatprep.subr.mxu0 0.0
  %3563 = vmatpush1.msra.mxu0 0.0
  %3564 = vmatprep.subr.mxu0 0.0
  %3565 = vmatpush1.msra.mxu0 0.0
  %3566 = vmatprep.subr.mxu0 0.0
  %3567 = vmatpush1.msra.mxu0 0.0
  %3568 = vmatprep.subr.mxu0 0.0
  %3569 = vmatpush1.msra.mxu0 0.0
  %3570 = vmatprep.subr.mxu0 0.0
  %3571 = vmatpush1.msra.mxu0 0.0
  %3572 = vmatprep.subr.mxu0 0.0
  %3573 = vmatpush1.msra.mxu0 0.0
  %3574 = vmatprep.subr.mxu0 0.0
  %v3575 = vand.u32 %v2774, 4294901760
  %3576 = vmatpush1.msra.mxu0 %v3575
  %3577 = vmatprep.subr.mxu0 0.0
  %v3578 = vand.u32 %v2768, 4294901760
  %3579 = vmatpush1.msra.mxu0 %v3578
  %3580 = vmatprep.subr.mxu0 0.0
  %3581 = vmatpush2.msra.mxu0 0.0
  %3582 = vmatprep.subr.mxu0 0.0
  %3583 = vmatpush2.msra.mxu0 0.0
  %3584 = vmatprep.subr.mxu0 0.0
  %3585 = vmatpush2.msra.mxu0 0.0
  %3586 = vmatprep.subr.mxu0 0.0
  %3587 = vmatpush2.msra.mxu0 0.0
  %3588 = vmatprep.subr.mxu0 0.0
  %3589 = vmatpush2.msra.mxu0 0.0
  %3590 = vmatprep.subr.mxu0 0.0
  %3591 = vmatpush2.msra.mxu0 0.0
  %3592 = vmatprep.subr.mxu0 0.0
  %3593 = vmatpush2.msra.mxu0 0.0
  %3594 = vmatprep.subr.mxu0 0.0
  %3595 = vmatpush2.msra.mxu0 0.0
  %3596 = vmatprep.subr.mxu0 0.0
  %3597 = vmatpush2.msra.mxu0 0.0
  %3598 = vmatprep.subr.mxu0 0.0
  %3599 = vmatpush2.msra.mxu0 0.0
  %3600 = vmatprep.subr.mxu0 0.0
  %3601 = vmatpush2.msra.mxu0 0.0
  %3602 = vmatprep.subr.mxu0 0.0
  %3603 = vmatpush2.msra.mxu0 0.0
  %3604 = vmatprep.subr.mxu0 0.0
  %3605 = vmatpush2.msra.mxu0 0.0
  %3606 = vmatprep.subr.mxu0 0.0
  %3607 = vmatpush2.msra.mxu0 0.0
  %3608 = vmatprep.subr.mxu0 0.0
  %3609 = vmatpush2.msra.mxu0 0.0
  %3610 = vmatprep.subr.mxu0 0.0
  %3611 = vmatpush2.msra.mxu0 0.0
  %3612 = vmatprep.mubr.f32.mxu0 0.0
  %v3613 = vand.u32 %v3284, 4294901760
  %v3614 = vsub.f32 %v3284, %v3613
  %v3615 = vand.u32 %v3614, 4294901760
  %3616 = vmatmul.mubr.f32.gmra.mxu0 %v3615
  %v3617 = vpop.f32.mrf.mxu0
  %v3618 = vadd.f32 %v3536, %v3617
  %v3619 = vpop.f32.mrf.mxu0
  %3620 = vmatprep.mubr.f32.mxu0 0.0
  %v3621 = vand.u32 %v3287, 4294901760
  %v3622 = vsub.f32 %v3287, %v3621
  %v3623 = vand.u32 %v3622, 4294901760
  %3624 = vmatmul.mubr.f32.gmra.mxu0 %v3623
  %v3625 = vpop.f32.mrf.mxu0
  %v3626 = vadd.f32 %v3543, %v3625
  %v3627 = vpop.f32.mrf.mxu0
  %3628 = vdwg.mxu0
  %3629 = vmatprep.subr.mxu0 0.0
  %3630 = vmatpush1.msra.mxu0 0.0
  %3631 = vmatprep.subr.mxu0 0.0
  %3632 = vmatpush1.msra.mxu0 0.0
  %3633 = vmatprep.subr.mxu0 0.0
  %3634 = vmatpush1.msra.mxu0 0.0
  %3635 = vmatprep.subr.mxu0 0.0
  %3636 = vmatpush1.msra.mxu0 0.0
  %3637 = vmatprep.subr.mxu0 0.0
  %3638 = vmatpush1.msra.mxu0 0.0
  %3639 = vmatprep.subr.mxu0 0.0
  %3640 = vmatpush1.msra.mxu0 0.0
  %3641 = vmatprep.subr.mxu0 0.0
  %3642 = vmatpush1.msra.mxu0 0.0
  %3643 = vmatprep.subr.mxu0 0.0
  %3644 = vmatpush1.msra.mxu0 0.0
  %3645 = vmatprep.subr.mxu0 0.0
  %3646 = vmatpush1.msra.mxu0 0.0
  %3647 = vmatprep.subr.mxu0 0.0
  %3648 = vmatpush1.msra.mxu0 0.0
  %3649 = vmatprep.subr.mxu0 0.0
  %3650 = vmatpush1.msra.mxu0 0.0
  %3651 = vmatprep.subr.mxu0 0.0
  %3652 = vmatpush1.msra.mxu0 0.0
  %3653 = vmatprep.subr.mxu0 0.0
  %3654 = vmatpush1.msra.mxu0 0.0
  %3655 = vmatprep.subr.mxu0 0.0
  %3656 = vmatpush1.msra.mxu0 0.0
  %3657 = vmatprep.subr.mxu0 0.0
  %v3658 = vand.u32 %v2774, 4294901760
  %v3659 = vsub.f32 %v2774, %v3658
  %v3660 = vand.u32 %v3659, 4294901760
  %3661 = vmatpush1.msra.mxu0 %v3660
  %3662 = vmatprep.subr.mxu0 0.0
  %v3663 = vand.u32 %v2768, 4294901760
  %v3664 = vsub.f32 %v2768, %v3663
  %v3665 = vand.u32 %v3664, 4294901760
  %3666 = vmatpush1.msra.mxu0 %v3665
  %3667 = vmatprep.subr.mxu0 0.0
  %3668 = vmatpush2.msra.mxu0 0.0
  %3669 = vmatprep.subr.mxu0 0.0
  %3670 = vmatpush2.msra.mxu0 0.0
  %3671 = vmatprep.subr.mxu0 0.0
  %3672 = vmatpush2.msra.mxu0 0.0
  %3673 = vmatprep.subr.mxu0 0.0
  %3674 = vmatpush2.msra.mxu0 0.0
  %3675 = vmatprep.subr.mxu0 0.0
  %3676 = vmatpush2.msra.mxu0 0.0
  %3677 = vmatprep.subr.mxu0 0.0
  %3678 = vmatpush2.msra.mxu0 0.0
  %3679 = vmatprep.subr.mxu0 0.0
  %3680 = vmatpush2.msra.mxu0 0.0
  %3681 = vmatprep.subr.mxu0 0.0
  %3682 = vmatpush2.msra.mxu0 0.0
  %3683 = vmatprep.subr.mxu0 0.0
  %3684 = vmatpush2.msra.mxu0 0.0
  %3685 = vmatprep.subr.mxu0 0.0
  %3686 = vmatpush2.msra.mxu0 0.0
  %3687 = vmatprep.subr.mxu0 0.0
  %3688 = vmatpush2.msra.mxu0 0.0
  %3689 = vmatprep.subr.mxu0 0.0
  %3690 = vmatpush2.msra.mxu0 0.0
  %3691 = vmatprep.subr.mxu0 0.0
  %3692 = vmatpush2.msra.mxu0 0.0
  %3693 = vmatprep.subr.mxu0 0.0
  %3694 = vmatpush2.msra.mxu0 0.0
  %3695 = vmatprep.subr.mxu0 0.0
  %3696 = vmatpush2.msra.mxu0 0.0
  %3697 = vmatprep.subr.mxu0 0.0
  %3698 = vmatpush2.msra.mxu0 0.0
  %3699 = vmatprep.mubr.f32.mxu0 0.0
  %v3700 = vand.u32 %v3284, 4294901760
  %3701 = vmatmul.mubr.f32.gmra.mxu0 %v3700
  %v3702 = vpop.f32.mrf.mxu0
  %v3703 = vadd.f32 %v3618, %v3702
  %v3704 = vpop.f32.mrf.mxu0
  %3705 = vmatprep.mubr.f32.mxu0 0.0
  %v3706 = vand.u32 %v3287, 4294901760
  %3707 = vmatmul.mubr.f32.gmra.mxu0 %v3706
  %v3708 = vpop.f32.mrf.mxu0
  %v3709 = vadd.f32 %v3626, %v3708
  %v3710 = vpop.f32.mrf.mxu0
  %3711 = vdwg.mxu0
  %3712 = vmatprep.subr.mxu0 0.0
  %3713 = vmatpush1.msra.mxu0 0.0
  %3714 = vmatprep.subr.mxu0 0.0
  %3715 = vmatpush1.msra.mxu0 0.0
  %3716 = vmatprep.subr.mxu0 0.0
  %3717 = vmatpush1.msra.mxu0 0.0
  %3718 = vmatprep.subr.mxu0 0.0
  %3719 = vmatpush1.msra.mxu0 0.0
  %3720 = vmatprep.subr.mxu0 0.0
  %3721 = vmatpush1.msra.mxu0 0.0
  %3722 = vmatprep.subr.mxu0 0.0
  %3723 = vmatpush1.msra.mxu0 0.0
  %3724 = vmatprep.subr.mxu0 0.0
  %3725 = vmatpush1.msra.mxu0 0.0
  %3726 = vmatprep.subr.mxu0 0.0
  %3727 = vmatpush1.msra.mxu0 0.0
  %3728 = vmatprep.subr.mxu0 0.0
  %3729 = vmatpush1.msra.mxu0 0.0
  %3730 = vmatprep.subr.mxu0 0.0
  %3731 = vmatpush1.msra.mxu0 0.0
  %3732 = vmatprep.subr.mxu0 0.0
  %3733 = vmatpush1.msra.mxu0 0.0
  %3734 = vmatprep.subr.mxu0 0.0
  %3735 = vmatpush1.msra.mxu0 0.0
  %3736 = vmatprep.subr.mxu0 0.0
  %3737 = vmatpush1.msra.mxu0 0.0
  %3738 = vmatprep.subr.mxu0 0.0
  %3739 = vmatpush1.msra.mxu0 0.0
  %3740 = vmatprep.subr.mxu0 0.0
  %v3741 = vand.u32 %v2774, 4294901760
  %3742 = vmatpush1.msra.mxu0 %v3741
  %3743 = vmatprep.subr.mxu0 0.0
  %v3744 = vand.u32 %v2768, 4294901760
  %3745 = vmatpush1.msra.mxu0 %v3744
  %3746 = vmatprep.subr.mxu0 0.0
  %3747 = vmatpush2.msra.mxu0 0.0
  %3748 = vmatprep.subr.mxu0 0.0
  %3749 = vmatpush2.msra.mxu0 0.0
  %3750 = vmatprep.subr.mxu0 0.0
  %3751 = vmatpush2.msra.mxu0 0.0
  %3752 = vmatprep.subr.mxu0 0.0
  %3753 = vmatpush2.msra.mxu0 0.0
  %3754 = vmatprep.subr.mxu0 0.0
  %3755 = vmatpush2.msra.mxu0 0.0
  %3756 = vmatprep.subr.mxu0 0.0
  %3757 = vmatpush2.msra.mxu0 0.0
  %3758 = vmatprep.subr.mxu0 0.0
  %3759 = vmatpush2.msra.mxu0 0.0
  %3760 = vmatprep.subr.mxu0 0.0
  %3761 = vmatpush2.msra.mxu0 0.0
  %3762 = vmatprep.subr.mxu0 0.0
  %3763 = vmatpush2.msra.mxu0 0.0
  %3764 = vmatprep.subr.mxu0 0.0
  %3765 = vmatpush2.msra.mxu0 0.0
  %3766 = vmatprep.subr.mxu0 0.0
  %3767 = vmatpush2.msra.mxu0 0.0
  %3768 = vmatprep.subr.mxu0 0.0
  %3769 = vmatpush2.msra.mxu0 0.0
  %3770 = vmatprep.subr.mxu0 0.0
  %3771 = vmatpush2.msra.mxu0 0.0
  %3772 = vmatprep.subr.mxu0 0.0
  %3773 = vmatpush2.msra.mxu0 0.0
  %3774 = vmatprep.subr.mxu0 0.0
  %3775 = vmatpush2.msra.mxu0 0.0
  %3776 = vmatprep.subr.mxu0 0.0
  %3777 = vmatpush2.msra.mxu0 0.0
  %3778 = vmatprep.mubr.f32.mxu0 0.0
  %v3779 = vand.u32 %v3284, 4294901760
  %3780 = vmatmul.mubr.f32.gmra.mxu0 %v3779
  %v3781 = vpop.f32.mrf.mxu0
  %v3782 = vadd.f32 %v3703, %v3781
  %v3783 = vpop.f32.mrf.mxu0
  %3784 = vmatprep.mubr.f32.mxu0 0.0
  %v3785 = vand.u32 %v3287, 4294901760
  %3786 = vmatmul.mubr.f32.gmra.mxu0 %v3785
  %v3787 = vpop.f32.mrf.mxu0
  %v3788 = vadd.f32 %v3709, %v3787
  %v3789 = vpop.f32.mrf.mxu0
  %3790 = vdwg.mxu0
  %3791 = vst [vmem:[#allocation2] sm:$0xff] %v3782
  %3792 = vst [vmem:[#allocation2 + $0x8] sm:$0xff] %v3788
  // Predicated region
  $region6: #{tpu_custom_call.1} parent=0 // pred_check
    _
  $region7: #{tpu_custom_call.1} parent=0 // pred_check_branch
    %3794 = sbr.rel target = $region9
  $region8: #{tpu_custom_call.1} parent=0 // pred_region
    %3795 = sst [smem:[#allocation6]] [#allocation9]
    %3796 = sst [smem:[#allocation7]] [#allocation8]
  $region9: #{tpu_custom_call.1} parent=0 // pred_fallthru
    _
  %3798 = shalt.err (0)
  %s3800 = sshll.u32 [#allocation2], 4
  %s3801 = int_to_ptr.vmem [resolvable:$true] %s3800
  %3803 = dma.vmem_to_hbm [thread:$0]  %s3801, 256, %s1, [#allocation3]
  %s3804 = sshll.u32 %s18, 4
  %3805 = dma.done [#allocation3], %s3804
  %3806 = vsyncmov [#allocation3]
  %s3807 = vpop.sfrf %3806
  %p3808 = scmp.eq.s32.totalorder %s3807, 0
  %p3809 = pneg %p3808
  %3811 = shalt.err (%p3809)

</llo_original>
